<compile_context>
chip_gen: v6e
topology: v6e:2x2x1
jax: 0.10.0
libtpu: 0.0.40
codegen_flags: <defaults>
</compile_context>

<pallas_src>
import math

import jax
import jax.numpy as jnp
from jax.experimental import pallas as pl
from jax.experimental.pallas import tpu as pltpu

_BN_EPS = 1e-5
_LANE = 128

# (name, use_bn, activation, use_dropout) -- mirrors the PyTorch Sequentials.
_LAYER_CFG = (
    ("enc1", True,  "elu",     True),
    ("enc2", True,  "elu",     True),
    ("enc3", True,  "elu",     False),
    ("dec1", True,  "sigmoid", True),
    ("dec2", True,  "sigmoid", True),
    ("dec3", True,  "sigmoid", False),
    ("dnn1", True,  "sigmoid", False),
    ("dnn2", False, "sigmoid", False),
    ("cls",  False, None,      False),
)
_LAYER_META = {n: (bn, act, do) for (n, bn, act, do) in _LAYER_CFG}
_LAYER_NAMES = tuple(n for (n, _, _, _) in _LAYER_CFG)
_ENC = ("enc1", "enc2", "enc3")
_DEC = ("dec1", "dec2", "dec3")
_DNN = ("dnn1", "dnn2")
_DROPOUT_LAYERS = tuple(n for (n, _, _, do) in _LAYER_CFG if do)
_HEAD_LAYERS = ("enc3", "dec3", "dnn2", "cls")   # layers whose outputs are returned


def _round_up(x, m):
    return (x + m - 1) // m * m


# ----------------------------------------------------------------------------
# Hardware-generation helpers (generation-specific VMEM limit / batch tile).
# All guarded so they can never break compilation on an unknown platform.
# ----------------------------------------------------------------------------
def _vmem_capacity_bytes():
    try:
        info = pltpu.get_tpu_info()
    except Exception:
        return None
    for attr in ("vmem_capacity_bytes", "vmem_size_bytes", "vmem_bytes"):
        v = getattr(info, attr, None)
        if v is None:
            continue
        try:
            v = int(v)
        except (TypeError, ValueError):
            continue
        if v > 0:
            return v
    return None


def _vmem_limit_bytes():
    cap = _vmem_capacity_bytes()
    if cap is None:
        return 48 * 1024 * 1024                       # safe on every generation
    # ~100 MiB on v5e/v6e (128 MiB physical), 48 MiB on v7x (64 MiB physical).
    return min(100 * 1024 * 1024, cap - 16 * 1024 * 1024)


def _preferred_batch_tile():
    try:
        kind = jax.devices()[0].device_kind.lower()
    except Exception:
        return 128
    if "v5 lite" in kind or "v5e" in kind or "v5lite" in kind:
        return 128                                    # 128 rows saturate v5e MXU
    return 256


# ----------------------------------------------------------------------------
# Kernel bodies
# ----------------------------------------------------------------------------
def _apply_activation(y, act):
    if act == "elu":
        # alpha = 1.  exp(min(y,0))-1 equals expm1 on the negative branch and is
        # overflow-safe for large positive y (which the where() discards).
        return jnp.where(y > 0.0, y, jnp.exp(jnp.minimum(y, 0.0)) - 1.0)
    if act == "sigmoid":
        # EUP reciprocal instead of a VALU divide (perf review).
        return pl.reciprocal(1.0 + jnp.exp(-y), approx=True)
    return y


def _train_layout():
    layout = ["x"]
    for (name, use_bn, _, _) in _LAYER_CFG:
        layout += [(name, "W"), (name, "b")]
        if use_bn:
            layout += [(name, "gamma"), (name, "beta")]
    for name in _DROPOUT_LAYERS:
        layout.append(("mask", name))
    return tuple(layout)


def _eval_layout():
    layout = ["x"]
    for name in _LAYER_NAMES:
        layout += [(name, "W"), (name, "b")]
    return tuple(layout)


def _make_train_kernel(layout):
    n_in = len(layout)

    def kernel(*refs):
        env = dict(zip(layout, refs[:n_in]))
        out_en, out_de, out_dnn, out_p = refs[n_in:]

        def layer(x, name):
            use_bn, act, use_do = _LAYER_META[name]
            w = env[(name, "W")][...]                                 # bf16, resident
            y = jnp.dot(x.astype(w.dtype), w,
                        preferred_element_type=jnp.float32)           # MXU, f32 acc
            y = y + env[(name, "b")][...]
            if use_bn:                                                # full-batch stats
                mean = jnp.mean(y, axis=0, keepdims=True)
                var = jnp.mean(jnp.square(y - mean), axis=0, keepdims=True)
                y = (y - mean) * jax.lax.rsqrt(var + _BN_EPS)
                y = y * env[(name, "gamma")][...] + env[(name, "beta")][...]
            y = _apply_activation(y, act)
            if use_do:                                                # p=0.5 dropout
                y = y * (env[("mask", name)][...].astype(jnp.float32) * 2.0)
            return y

        h = env["x"][...]
        for n in _ENC:
            h = layer(h, n)
        en = h
        h = en
        for n in _DEC:
            h = layer(h, n)
        de = h
        h = en
        for n in _DNN:
            h = layer(h, n)
        dnn = h
        p = layer(dnn, "cls")

        out_en[...] = en.astype(out_en.dtype)
        out_de[...] = de.astype(out_de.dtype)
        out_dnn[...] = dnn.astype(out_dnn.dtype)
        out_p[...] = p.astype(out_p.dtype)

    return kernel


def _make_eval_kernel(layout):
    n_in = len(layout)

    def kernel(*refs):
        env = dict(zip(layout, refs[:n_in]))
        out_en, out_de, out_dnn, out_p = refs[n_in:]

        def layer(x, name):
            _, act, _ = _LAYER_META[name]
            w = env[(name, "W")][...]                                 # BN pre-folded
            y = jnp.dot(x.astype(w.dtype), w,
                        preferred_element_type=jnp.float32) + env[(name, "b")][...]
            return _apply_activation(y, act)

        h = env["x"][...]
        for n in _ENC:
            h = layer(h, n)
        en = h
        h = en
        for n in _DEC:
            h = layer(h, n)
        de = h
        h = en
        for n in _DNN:
            h = layer(h, n)
        dnn = h
        p = layer(dnn, "cls")

        out_en[...] = en.astype(out_en.dtype)
        out_de[...] = de.astype(out_de.dtype)
        out_dnn[...] = dnn.astype(out_dnn.dtype)
        out_p[...] = p.astype(out_p.dtype)

    return kernel


# ----------------------------------------------------------------------------
# Host-side parameter preparation (lane padding, eval-mode BN folding)
# ----------------------------------------------------------------------------
def _pad2d(a, shape):
    return jnp.zeros(shape, a.dtype).at[: a.shape[0], : a.shape[1]].set(a)


def _prepare_train_params(params):
    """Zero-pad every feature dim to a multiple of 128 (lane-dense layouts)."""
    out = {}
    for name in _LAYER_NAMES:
        p = params[name]
        fi, fo = p["W"].shape
        fip, fop = _round_up(fi, _LANE), _round_up(fo, _LANE)
        q = {"W": _pad2d(p["W"], (fip, fop)),
             "b": _pad2d(p["b"], (1, fop))}
        if _LAYER_META[name][0]:
            # gamma padded with 0 so padded columns stay exactly 0 through BN.
            q["gamma"] = _pad2d(p["gamma"], (1, fop))
            q["beta"] = _pad2d(p["beta"], (1, fop))
        out[name] = q
    return out


def _prepare_eval_params(params):
    """Fold BatchNorm running stats + affine into W/b, then lane-pad."""
    out = {}
    for name in _LAYER_NAMES:
        p = params[name]
        w = p["W"].astype(jnp.float32)
        b = p["b"]
        if _LAYER_META[name][0]:
            scale = p["gamma"] * jax.lax.rsqrt(p["var"] + _BN_EPS)
            w = w * scale
            b = (b - p["mean"]) * scale + p["beta"]
        fi, fo = w.shape
        fip, fop = _round_up(fi, _LANE), _round_up(fo, _LANE)
        out[name] = {"W": _pad2d(w.astype(jnp.bfloat16), (fip, fop)),
                     "b": _pad2d(b, (1, fop))}
    return out


def make_dropout_masks(key, params, batch):
    """int8 keep-masks (0/1), p = 0.5, stacked over (source, target) branches."""
    masks = {}
    for name in _DROPOUT_LAYERS:
        key, sub = jax.random.split(key)
        fo_pad = _round_up(params[name]["W"].shape[1], _LANE)
        keep = jax.random.bernoulli(sub, 0.5, (2, batch, fo_pad))
        masks[name] = keep.astype(jnp.int8)
    return masks


def _out_dims_padded(params):
    return tuple(_round_up(params[n]["W"].shape[1], _LANE) for n in _HEAD_LAYERS)


def _out_dims_true(params):
    return tuple(params[n]["W"].shape[1] for n in _HEAD_LAYERS)


# ----------------------------------------------------------------------------
# Forward wrappers
# ----------------------------------------------------------------------------
def _forward_train(params, source, target, dropout_key, dropout_masks):
    batch, in_dim = source.shape
    pp = _prepare_train_params(params)
    in_pad = pp["enc1"]["W"].shape[0]

    x = jnp.zeros((2, batch, in_pad), jnp.float32)
    x = x.at[0, :, :in_dim].set(source)
    x = x.at[1, :, :in_dim].set(target)

    if dropout_masks is None:
        if dropout_key is None:
            dropout_key = jax.random.PRNGKey(0)
        dropout_masks = make_dropout_masks(dropout_key, params, batch)

    layout = _train_layout()

    def fetch(item):
        if item == "x":
            return x
        if item[0] == "mask":
            return dropout_masks[item[1]]
        return pp[item[0]][item[1]]

    inputs = [fetch(item) for item in layout]

    def in_spec(item):
        arr = fetch(item)
        if item == "x" or item[0] == "mask":
            # Branch-streamed: one (batch, dim) slab per grid step.
            return pl.BlockSpec((None,) + arr.shape[1:], lambda b: (b, 0, 0))
        # Weights / bias / BN affine: constant index_map -> DMAed once, resident.
        return pl.BlockSpec(arr.shape, lambda b: (0, 0))

    in_specs = [in_spec(item) for item in layout]

    pad_dims = _out_dims_padded(params)
    out_shape = tuple(jax.ShapeDtypeStruct((2, batch, d), jnp.float32) for d in pad_dims)
    out_specs = tuple(pl.BlockSpec((None, batch, d), lambda b: (b, 0, 0)) for d in pad_dims)

    outs = pl.pallas_call(
        _make_train_kernel(layout),
        grid=(2,),                                       # (source, target) branches
        in_specs=in_specs,
        out_specs=out_specs,
        out_shape=out_shape,
        compiler_params=pltpu.CompilerParams(
            dimension_semantics=("parallel",),           # v7x: one branch per TC
            vmem_limit_bytes=_vmem_limit_bytes(),
        ),
    )(*inputs)

    true_dims = _out_dims_true(params)
    s_outs = tuple(o[0, :, :d] for o, d in zip(outs, true_dims))
    t_outs = tuple(o[1, :, :d] for o, d in zip(outs, true_dims))
    return s_outs + t_outs


def _forward_eval(params, source):
    batch, in_dim = source.shape
    pp = _prepare_eval_params(params)
    in_pad = pp["enc1"]["W"].shape[0]

    tile_m = min(_preferred_batch_tile(), _round_up(batch, 8))
    batch_pad = _round_up(batch, tile_m)
    x = jnp.zeros((batch_pad, in_pad), jnp.float32).at[:batch, :in_dim].set(source)

    layout = _eval_layout()
    inputs = [x if item == "x" else pp[item[0]][item[1]] for item in layout]

    def in_spec(item):
        if item == "x":
            return pl.BlockSpec((tile_m, in_pad), lambda i: (i, 0))
        arr = pp[item[0]][item[1]]
        return pl.BlockSpec(arr.shape, lambda i: (0, 0))  # resident weights

    in_specs = [in_spec(item) for item in layout]

    pad_dims = _out_dims_padded(params)
    out_shape = tuple(jax.ShapeDtypeStruct((batch_pad, d), jnp.float32) for d in pad_dims)
    out_specs = tuple(pl.BlockSpec((tile_m, d), lambda i: (i, 0)) for d in pad_dims)

    outs = pl.pallas_call(
        _make_eval_kernel(layout),
        grid=(batch_pad // tile_m,),                     # batch-tiled, pipelined
        in_specs=in_specs,
        out_specs=out_specs,
        out_shape=out_shape,
        compiler_params=pltpu.CompilerParams(
            dimension_semantics=("parallel",),
            vmem_limit_bytes=_vmem_limit_bytes(),
        ),
    )(*inputs)

    true_dims = _out_dims_true(params)
    return tuple(o[:batch, :d] for o, d in zip(outs, true_dims))


def my_net_forward(params, source, target, *, training=True,
                   dropout_key=None, dropout_masks=None):
    """Returns (s_en, s_de, s_dnn, s_p, t_en, t_de, t_dnn, t_p)."""
    if training:
        return _forward_train(params, source, target, dropout_key, dropout_masks)
    s_en, s_de, s_dnn, s_p = _forward_eval(params, source)
    return (s_en, s_de, s_dnn, s_p, 0, 0, 0, 0)


# ----------------------------------------------------------------------------
# Parameter construction (mirrors the PyTorch __init__ shapes)
# ----------------------------------------------------------------------------
def _init_layer(key, fan_in, fan_out):
    bound = 1.0 / math.sqrt(fan_in)
    kw, kb, kg, kbt, km, kv = jax.random.split(key, 6)
    w = jax.random.uniform(kw, (fan_in, fan_out), jnp.float32, -bound, bound)
    return {
        # torch Linear weight is (out, in); stored transposed (in, out), bf16.
        "W": w.astype(jnp.bfloat16),
        "b": jax.random.uniform(kb, (1, fan_out), jnp.float32, -bound, bound),
        # Non-trivial BN affine params / running stats (as after some training)
        # so the eval-mode BN-folding path is actually exercised by the check.
        "gamma": 1.0 + 0.1 * jax.random.normal(kg, (1, fan_out), jnp.float32),
        "beta": 0.1 * jax.random.normal(kbt, (1, fan_out), jnp.float32),
        "mean": 0.1 * jax.random.normal(km, (1, fan_out), jnp.float32),
        "var": jax.random.uniform(kv, (1, fan_out), jnp.float32, 0.5, 1.5),
    }


def build_my_net(key, num_classes, hidden_size, *, in_dim, d1, d2, dnn1, dnn2):
    dims = {
        "enc1": (in_dim, d1), "enc2": (d1, d2), "enc3": (d2, hidden_size),
        "dec1": (hidden_size, d2), "dec2": (d2, d1), "dec3": (d1, in_dim),
        "dnn1": (hidden_size, dnn1), "dnn2": (dnn1, dnn2),
        "cls": (dnn2, num_classes),
    }
    params = {}
    for name, (fi, fo) in dims.items():
        key, sub = jax.random.split(key)
        params[name] = _init_layer(sub, fi, fo)
    return params


# ----------------------------------------------------------------------------
# Pure-JAX reference for correctness spot-checks
# ----------------------------------------------------------------------------
def _ref_activation(y, act):
    if act == "elu":
        return jnp.where(y > 0.0, y, jnp.exp(jnp.minimum(y, 0.0)) - 1.0)
    if act == "sigmoid":
        return jax.nn.sigmoid(y)
    return y


def _ref_layer(x, p, use_bn, act, *, training, mask=None):
    y = jnp.dot(x.astype(jnp.bfloat16), p["W"],
                preferred_element_type=jnp.float32) + p["b"]
    if use_bn:
        if training:
            mean = jnp.mean(y, axis=0, keepdims=True)
            var = jnp.mean(jnp.square(y - mean), axis=0, keepdims=True)
        else:
            mean, var = p["mean"], p["var"]
        y = (y - mean) * jax.lax.rsqrt(var + _BN_EPS) * p["gamma"] + p["beta"]
    y = _ref_activation(y, act)
    if mask is not None:
        y = y * (mask.astype(jnp.float32) * 2.0)
    return y


def _ref_forward(params, x, *, training, masks=None, branch=0):
    def run(h, names):
        for n in names:
            use_bn, act, use_do = _LAYER_META[n]
            m = None
            if training and use_do:
                fo = params[n]["W"].shape[1]
                m = masks[n][branch, :, :fo]
            h = _ref_layer(h, params[n], use_bn, act, training=training, mask=m)
        return h
    en = run(x, _ENC)
    de = run(en, _DEC)
    dnn = run(en, _DNN)
    p = run(dnn, ("cls",))
    return en, de, dnn, p


if __name__ == "__main__":
    key = jax.random.PRNGKey(0)

    # Small stand-in dims for (1582, 1200, 900, 500, 600, 256, num_classes).
    batch, in_dim, d1, d2, hidden, dnn1, dnn2, num_classes = 8, 128, 96, 64, 32, 48, 32, 4

    kp, ks, kt, kd = jax.random.split(key, 4)
    params = build_my_net(kp, num_classes, hidden,
                          in_dim=in_dim, d1=d1, d2=d2, dnn1=dnn1, dnn2=dnn2)
    source = jax.random.normal(ks, (batch, in_dim), jnp.float32)
    target = jax.random.normal(kt, (batch, in_dim), jnp.float32)

    # --- training mode: both branches, full-batch BN stats, dropout ---------
    masks = make_dropout_masks(kd, params, batch)
    tr = my_net_forward(params, source, target, training=True, dropout_masks=masks)
    jax.block_until_ready(tr)
    assert len(tr) == 8
    want_tr = (_ref_forward(params, source, training=True, masks=masks, branch=0)
               + _ref_forward(params, target, training=True, masks=masks, branch=1))
    for got, want in zip(tr, want_tr):
        assert got.shape == want.shape
        assert jnp.allclose(got, want, atol=2e-2, rtol=2e-2), "train mismatch"

    # --- eval mode: folded BN, batch-tiled grid, target outputs are 0 -------
    ev = my_net_forward(params, source, target, training=False)
    jax.block_until_ready(ev[:4])
    want_ev = _ref_forward(params, source, training=False)
    for got, want in zip(ev[:4], want_ev):
        assert got.shape == want.shape
        assert jnp.allclose(got, want, atol=2e-2, rtol=2e-2), "eval mismatch"
    assert ev[4:] == (0, 0, 0, 0)

    print("KERNEL_OK")
</pallas_src>

<mosaic_0001>
module attributes {stable_mosaic.version = 11 : i64} {
  func.func @kernel(%arg0: i32, %arg1: memref<1x8x128xf32, #tpu.memory_space<vmem>>, %arg2: memref<128x128xbf16, #tpu.memory_space<vmem>>, %arg3: memref<1x128xf32, #tpu.memory_space<vmem>>, %arg4: memref<1x128xf32, #tpu.memory_space<vmem>>, %arg5: memref<1x128xf32, #tpu.memory_space<vmem>>, %arg6: memref<128x128xbf16, #tpu.memory_space<vmem>>, %arg7: memref<1x128xf32, #tpu.memory_space<vmem>>, %arg8: memref<1x128xf32, #tpu.memory_space<vmem>>, %arg9: memref<1x128xf32, #tpu.memory_space<vmem>>, %arg10: memref<128x128xbf16, #tpu.memory_space<vmem>>, %arg11: memref<1x128xf32, #tpu.memory_space<vmem>>, %arg12: memref<1x128xf32, #tpu.memory_space<vmem>>, %arg13: memref<1x128xf32, #tpu.memory_space<vmem>>, %arg14: memref<128x128xbf16, #tpu.memory_space<vmem>>, %arg15: memref<1x128xf32, #tpu.memory_space<vmem>>, %arg16: memref<1x128xf32, #tpu.memory_space<vmem>>, %arg17: memref<1x128xf32, #tpu.memory_space<vmem>>, %arg18: memref<128x128xbf16, #tpu.memory_space<vmem>>, %arg19: memref<1x128xf32, #tpu.memory_space<vmem>>, %arg20: memref<1x128xf32, #tpu.memory_space<vmem>>, %arg21: memref<1x128xf32, #tpu.memory_space<vmem>>, %arg22: memref<128x128xbf16, #tpu.memory_space<vmem>>, %arg23: memref<1x128xf32, #tpu.memory_space<vmem>>, %arg24: memref<1x128xf32, #tpu.memory_space<vmem>>, %arg25: memref<1x128xf32, #tpu.memory_space<vmem>>, %arg26: memref<128x128xbf16, #tpu.memory_space<vmem>>, %arg27: memref<1x128xf32, #tpu.memory_space<vmem>>, %arg28: memref<1x128xf32, #tpu.memory_space<vmem>>, %arg29: memref<1x128xf32, #tpu.memory_space<vmem>>, %arg30: memref<128x128xbf16, #tpu.memory_space<vmem>>, %arg31: memref<1x128xf32, #tpu.memory_space<vmem>>, %arg32: memref<128x128xbf16, #tpu.memory_space<vmem>>, %arg33: memref<1x128xf32, #tpu.memory_space<vmem>>, %arg34: memref<1x8x128xi8, #tpu.memory_space<vmem>>, %arg35: memref<1x8x128xi8, #tpu.memory_space<vmem>>, %arg36: memref<1x8x128xi8, #tpu.memory_space<vmem>>, %arg37: memref<1x8x128xi8, #tpu.memory_space<vmem>>, %arg38: memref<1x8x128xf32, #tpu.memory_space<vmem>>, %arg39: memref<1x8x128xf32, #tpu.memory_space<vmem>>, %arg40: memref<1x8x128xf32, #tpu.memory_space<vmem>>, %arg41: memref<1x8x128xf32, #tpu.memory_space<vmem>>) attributes {dimension_semantics = [#tpu.dimension_semantics<parallel>], iteration_bounds = array<i64: 2>, scalar_prefetch = 0 : i64, scratch_operands = 0 : i64, tpu.core_type = #tpu.core_type<tc>, window_params = [{transform_indices = @transform_0, window_bounds = array<i64: 1, 8, 128>}, {pipeline_mode = #tpu.pipeline_mode<synchronous>, transform_indices = @transform_1, window_bounds = array<i64: 128, 128>}, {pipeline_mode = #tpu.pipeline_mode<synchronous>, transform_indices = @transform_2, window_bounds = array<i64: 1, 128>}, {pipeline_mode = #tpu.pipeline_mode<synchronous>, transform_indices = @transform_3, window_bounds = array<i64: 1, 128>}, {pipeline_mode = #tpu.pipeline_mode<synchronous>, transform_indices = @transform_4, window_bounds = array<i64: 1, 128>}, {pipeline_mode = #tpu.pipeline_mode<synchronous>, transform_indices = @transform_5, window_bounds = array<i64: 128, 128>}, {pipeline_mode = #tpu.pipeline_mode<synchronous>, transform_indices = @transform_6, window_bounds = array<i64: 1, 128>}, {pipeline_mode = #tpu.pipeline_mode<synchronous>, transform_indices = @transform_7, window_bounds = array<i64: 1, 128>}, {pipeline_mode = #tpu.pipeline_mode<synchronous>, transform_indices = @transform_8, window_bounds = array<i64: 1, 128>}, {pipeline_mode = #tpu.pipeline_mode<synchronous>, transform_indices = @transform_9, window_bounds = array<i64: 128, 128>}, {pipeline_mode = #tpu.pipeline_mode<synchronous>, transform_indices = @transform_10, window_bounds = array<i64: 1, 128>}, {pipeline_mode = #tpu.pipeline_mode<synchronous>, transform_indices = @transform_11, window_bounds = array<i64: 1, 128>}, {pipeline_mode = #tpu.pipeline_mode<synchronous>, transform_indices = @transform_12, window_bounds = array<i64: 1, 128>}, {pipeline_mode = #tpu.pipeline_mode<synchronous>, transform_indices = @transform_13, window_bounds = array<i64: 128, 128>}, {pipeline_mode = #tpu.pipeline_mode<synchronous>, transform_indices = @transform_14, window_bounds = array<i64: 1, 128>}, {pipeline_mode = #tpu.pipeline_mode<synchronous>, transform_indices = @transform_15, window_bounds = array<i64: 1, 128>}, {pipeline_mode = #tpu.pipeline_mode<synchronous>, transform_indices = @transform_16, window_bounds = array<i64: 1, 128>}, {pipeline_mode = #tpu.pipeline_mode<synchronous>, transform_indices = @transform_17, window_bounds = array<i64: 128, 128>}, {pipeline_mode = #tpu.pipeline_mode<synchronous>, transform_indices = @transform_18, window_bounds = array<i64: 1, 128>}, {pipeline_mode = #tpu.pipeline_mode<synchronous>, transform_indices = @transform_19, window_bounds = array<i64: 1, 128>}, {pipeline_mode = #tpu.pipeline_mode<synchronous>, transform_indices = @transform_20, window_bounds = array<i64: 1, 128>}, {pipeline_mode = #tpu.pipeline_mode<synchronous>, transform_indices = @transform_21, window_bounds = array<i64: 128, 128>}, {pipeline_mode = #tpu.pipeline_mode<synchronous>, transform_indices = @transform_22, window_bounds = array<i64: 1, 128>}, {pipeline_mode = #tpu.pipeline_mode<synchronous>, transform_indices = @transform_23, window_bounds = array<i64: 1, 128>}, {pipeline_mode = #tpu.pipeline_mode<synchronous>, transform_indices = @transform_24, window_bounds = array<i64: 1, 128>}, {pipeline_mode = #tpu.pipeline_mode<synchronous>, transform_indices = @transform_25, window_bounds = array<i64: 128, 128>}, {pipeline_mode = #tpu.pipeline_mode<synchronous>, transform_indices = @transform_26, window_bounds = array<i64: 1, 128>}, {pipeline_mode = #tpu.pipeline_mode<synchronous>, transform_indices = @transform_27, window_bounds = array<i64: 1, 128>}, {pipeline_mode = #tpu.pipeline_mode<synchronous>, transform_indices = @transform_28, window_bounds = array<i64: 1, 128>}, {pipeline_mode = #tpu.pipeline_mode<synchronous>, transform_indices = @transform_29, window_bounds = array<i64: 128, 128>}, {pipeline_mode = #tpu.pipeline_mode<synchronous>, transform_indices = @transform_30, window_bounds = array<i64: 1, 128>}, {pipeline_mode = #tpu.pipeline_mode<synchronous>, transform_indices = @transform_31, window_bounds = array<i64: 128, 128>}, {pipeline_mode = #tpu.pipeline_mode<synchronous>, transform_indices = @transform_32, window_bounds = array<i64: 1, 128>}, {transform_indices = @transform_33, window_bounds = array<i64: 1, 8, 128>}, {transform_indices = @transform_34, window_bounds = array<i64: 1, 8, 128>}, {transform_indices = @transform_35, window_bounds = array<i64: 1, 8, 128>}, {transform_indices = @transform_36, window_bounds = array<i64: 1, 8, 128>}, {transform_indices = @transform_37, window_bounds = array<i64: 1, 8, 128>}, {transform_indices = @transform_38, window_bounds = array<i64: 1, 8, 128>}, {transform_indices = @transform_39, window_bounds = array<i64: 1, 8, 128>}, {transform_indices = @transform_40, window_bounds = array<i64: 1, 8, 128>}]} {
    %c0 = arith.constant 0 : index
    %c0_0 = arith.constant 0 : index
    %c0_1 = arith.constant 0 : index
    %0 = vector.load %arg1[%c0, %c0_0, %c0_1] : memref<1x8x128xf32, #tpu.memory_space<vmem>>, vector<1x8x128xf32>
    %1 = vector.shape_cast %0 : vector<1x8x128xf32> to vector<8x128xf32>
    %c0_2 = arith.constant 0 : index
    %c0_3 = arith.constant 0 : index
    %2 = vector.load %arg2[%c0_2, %c0_3] : memref<128x128xbf16, #tpu.memory_space<vmem>>, vector<128x128xbf16>
    %3 = arith.truncf %1 : vector<8x128xf32> to vector<8x128xbf16>
    %cst = arith.constant dense<0.000000e+00> : vector<8x128xf32>
    %4 = tpu.matmul %3, %2, %cst {dimension_numbers = #tpu.dot_dimension_numbers<[1], [0], [0], [1], [0, 0, 1, 1], [], []>} : vector<8x128xbf16>, vector<128x128xbf16>, vector<8x128xf32> -> vector<8x128xf32>
    %c0_4 = arith.constant 0 : index
    %c0_5 = arith.constant 0 : index
    %5 = vector.load %arg3[%c0_4, %c0_5] : memref<1x128xf32, #tpu.memory_space<vmem>>, vector<1x128xf32>
    %6 = vector.broadcast %5 : vector<1x128xf32> to vector<8x128xf32>
    %7 = arith.addf %4, %6 : vector<8x128xf32>
    %cst_6 = arith.constant dense<0.000000e+00> : vector<128xf32>
    %8 = vector.multi_reduction <add>, %7, %cst_6 [0] : vector<8x128xf32> to vector<128xf32>
    %9 = vector.shape_cast %8 : vector<128xf32> to vector<1x128xf32>
    %cst_7 = arith.constant 8.000000e+00 : f32
    %10 = vector.broadcast %cst_7 : f32 to vector<1x128xf32>
    %11 = arith.divf %9, %10 : vector<1x128xf32>
    %12 = vector.broadcast %11 : vector<1x128xf32> to vector<8x128xf32>
    %13 = arith.subf %7, %12 : vector<8x128xf32>
    %14 = arith.mulf %13, %13 : vector<8x128xf32>
    %cst_8 = arith.constant dense<0.000000e+00> : vector<128xf32>
    %15 = vector.multi_reduction <add>, %14, %cst_8 [0] : vector<8x128xf32> to vector<128xf32>
    %16 = vector.shape_cast %15 : vector<128xf32> to vector<1x128xf32>
    %cst_9 = arith.constant 8.000000e+00 : f32
    %17 = vector.broadcast %cst_9 : f32 to vector<1x128xf32>
    %18 = arith.divf %16, %17 : vector<1x128xf32>
    %19 = vector.broadcast %11 : vector<1x128xf32> to vector<8x128xf32>
    %20 = arith.subf %7, %19 : vector<8x128xf32>
    %cst_10 = arith.constant 9.99999974E-6 : f32
    %21 = vector.broadcast %cst_10 : f32 to vector<1x128xf32>
    %22 = arith.addf %18, %21 : vector<1x128xf32>
    %23 = math.rsqrt %22 : vector<1x128xf32>
    %24 = vector.broadcast %23 : vector<1x128xf32> to vector<8x128xf32>
    %25 = arith.mulf %20, %24 : vector<8x128xf32>
    %c0_11 = arith.constant 0 : index
    %c0_12 = arith.constant 0 : index
    %26 = vector.load %arg4[%c0_11, %c0_12] : memref<1x128xf32, #tpu.memory_space<vmem>>, vector<1x128xf32>
    %27 = vector.broadcast %26 : vector<1x128xf32> to vector<8x128xf32>
    %28 = arith.mulf %25, %27 : vector<8x128xf32>
    %c0_13 = arith.constant 0 : index
    %c0_14 = arith.constant 0 : index
    %29 = vector.load %arg5[%c0_13, %c0_14] : memref<1x128xf32, #tpu.memory_space<vmem>>, vector<1x128xf32>
    %30 = vector.broadcast %29 : vector<1x128xf32> to vector<8x128xf32>
    %31 = arith.addf %28, %30 : vector<8x128xf32>
    %cst_15 = arith.constant 0.000000e+00 : f32
    %32 = vector.broadcast %cst_15 : f32 to vector<8x128xf32>
    %33 = arith.cmpf ogt, %31, %32 : vector<8x128xf32>
    %cst_16 = arith.constant 0.000000e+00 : f32
    %34 = vector.broadcast %cst_16 : f32 to vector<8x128xf32>
    %35 = arith.minimumf %31, %34 : vector<8x128xf32>
    %36 = math.exp %35 : vector<8x128xf32>
    %cst_17 = arith.constant 1.000000e+00 : f32
    %37 = vector.broadcast %cst_17 : f32 to vector<8x128xf32>
    %38 = arith.subf %36, %37 : vector<8x128xf32>
    %39 = arith.select %33, %31, %38 : vector<8x128xi1>, vector<8x128xf32>
    %c0_18 = arith.constant 0 : index
    %c0_19 = arith.constant 0 : index
    %c0_20 = arith.constant 0 : index
    %40 = vector.load %arg34[%c0_18, %c0_19, %c0_20] : memref<1x8x128xi8, #tpu.memory_space<vmem>>, vector<1x8x128xi8>
    %41 = vector.shape_cast %40 : vector<1x8x128xi8> to vector<8x128xi8>
    %42 = arith.sitofp %41 : vector<8x128xi8> to vector<8x128xf32>
    %cst_21 = arith.constant 2.000000e+00 : f32
    %43 = vector.broadcast %cst_21 : f32 to vector<8x128xf32>
    %44 = arith.mulf %42, %43 : vector<8x128xf32>
    %45 = arith.mulf %39, %44 : vector<8x128xf32>
    %c0_22 = arith.constant 0 : index
    %c0_23 = arith.constant 0 : index
    %46 = vector.load %arg6[%c0_22, %c0_23] : memref<128x128xbf16, #tpu.memory_space<vmem>>, vector<128x128xbf16>
    %47 = arith.truncf %45 : vector<8x128xf32> to vector<8x128xbf16>
    %cst_24 = arith.constant dense<0.000000e+00> : vector<8x128xf32>
    %48 = tpu.matmul %47, %46, %cst_24 {dimension_numbers = #tpu.dot_dimension_numbers<[1], [0], [0], [1], [0, 0, 1, 1], [], []>} : vector<8x128xbf16>, vector<128x128xbf16>, vector<8x128xf32> -> vector<8x128xf32>
    %c0_25 = arith.constant 0 : index
    %c0_26 = arith.constant 0 : index
    %49 = vector.load %arg7[%c0_25, %c0_26] : memref<1x128xf32, #tpu.memory_space<vmem>>, vector<1x128xf32>
    %50 = vector.broadcast %49 : vector<1x128xf32> to vector<8x128xf32>
    %51 = arith.addf %48, %50 : vector<8x128xf32>
    %cst_27 = arith.constant dense<0.000000e+00> : vector<128xf32>
    %52 = vector.multi_reduction <add>, %51, %cst_27 [0] : vector<8x128xf32> to vector<128xf32>
    %53 = vector.shape_cast %52 : vector<128xf32> to vector<1x128xf32>
    %cst_28 = arith.constant 8.000000e+00 : f32
    %54 = vector.broadcast %cst_28 : f32 to vector<1x128xf32>
    %55 = arith.divf %53, %54 : vector<1x128xf32>
    %56 = vector.broadcast %55 : vector<1x128xf32> to vector<8x128xf32>
    %57 = arith.subf %51, %56 : vector<8x128xf32>
    %58 = arith.mulf %57, %57 : vector<8x128xf32>
    %cst_29 = arith.constant dense<0.000000e+00> : vector<128xf32>
    %59 = vector.multi_reduction <add>, %58, %cst_29 [0] : vector<8x128xf32> to vector<128xf32>
    %60 = vector.shape_cast %59 : vector<128xf32> to vector<1x128xf32>
    %cst_30 = arith.constant 8.000000e+00 : f32
    %61 = vector.broadcast %cst_30 : f32 to vector<1x128xf32>
    %62 = arith.divf %60, %61 : vector<1x128xf32>
    %63 = vector.broadcast %55 : vector<1x128xf32> to vector<8x128xf32>
    %64 = arith.subf %51, %63 : vector<8x128xf32>
    %cst_31 = arith.constant 9.99999974E-6 : f32
    %65 = vector.broadcast %cst_31 : f32 to vector<1x128xf32>
    %66 = arith.addf %62, %65 : vector<1x128xf32>
    %67 = math.rsqrt %66 : vector<1x128xf32>
    %68 = vector.broadcast %67 : vector<1x128xf32> to vector<8x128xf32>
    %69 = arith.mulf %64, %68 : vector<8x128xf32>
    %c0_32 = arith.constant 0 : index
    %c0_33 = arith.constant 0 : index
    %70 = vector.load %arg8[%c0_32, %c0_33] : memref<1x128xf32, #tpu.memory_space<vmem>>, vector<1x128xf32>
    %71 = vector.broadcast %70 : vector<1x128xf32> to vector<8x128xf32>
    %72 = arith.mulf %69, %71 : vector<8x128xf32>
    %c0_34 = arith.constant 0 : index
    %c0_35 = arith.constant 0 : index
    %73 = vector.load %arg9[%c0_34, %c0_35] : memref<1x128xf32, #tpu.memory_space<vmem>>, vector<1x128xf32>
    %74 = vector.broadcast %73 : vector<1x128xf32> to vector<8x128xf32>
    %75 = arith.addf %72, %74 : vector<8x128xf32>
    %cst_36 = arith.constant 0.000000e+00 : f32
    %76 = vector.broadcast %cst_36 : f32 to vector<8x128xf32>
    %77 = arith.cmpf ogt, %75, %76 : vector<8x128xf32>
    %cst_37 = arith.constant 0.000000e+00 : f32
    %78 = vector.broadcast %cst_37 : f32 to vector<8x128xf32>
    %79 = arith.minimumf %75, %78 : vector<8x128xf32>
    %80 = math.exp %79 : vector<8x128xf32>
    %cst_38 = arith.constant 1.000000e+00 : f32
    %81 = vector.broadcast %cst_38 : f32 to vector<8x128xf32>
    %82 = arith.subf %80, %81 : vector<8x128xf32>
    %83 = arith.select %77, %75, %82 : vector<8x128xi1>, vector<8x128xf32>
    %c0_39 = arith.constant 0 : index
    %c0_40 = arith.constant 0 : index
    %c0_41 = arith.constant 0 : index
    %84 = vector.load %arg35[%c0_39, %c0_40, %c0_41] : memref<1x8x128xi8, #tpu.memory_space<vmem>>, vector<1x8x128xi8>
    %85 = vector.shape_cast %84 : vector<1x8x128xi8> to vector<8x128xi8>
    %86 = arith.sitofp %85 : vector<8x128xi8> to vector<8x128xf32>
    %cst_42 = arith.constant 2.000000e+00 : f32
    %87 = vector.broadcast %cst_42 : f32 to vector<8x128xf32>
    %88 = arith.mulf %86, %87 : vector<8x128xf32>
    %89 = arith.mulf %83, %88 : vector<8x128xf32>
    %c0_43 = arith.constant 0 : index
    %c0_44 = arith.constant 0 : index
    %90 = vector.load %arg10[%c0_43, %c0_44] : memref<128x128xbf16, #tpu.memory_space<vmem>>, vector<128x128xbf16>
    %91 = arith.truncf %89 : vector<8x128xf32> to vector<8x128xbf16>
    %cst_45 = arith.constant dense<0.000000e+00> : vector<8x128xf32>
    %92 = tpu.matmul %91, %90, %cst_45 {dimension_numbers = #tpu.dot_dimension_numbers<[1], [0], [0], [1], [0, 0, 1, 1], [], []>} : vector<8x128xbf16>, vector<128x128xbf16>, vector<8x128xf32> -> vector<8x128xf32>
    %c0_46 = arith.constant 0 : index
    %c0_47 = arith.constant 0 : index
    %93 = vector.load %arg11[%c0_46, %c0_47] : memref<1x128xf32, #tpu.memory_space<vmem>>, vector<1x128xf32>
    %94 = vector.broadcast %93 : vector<1x128xf32> to vector<8x128xf32>
    %95 = arith.addf %92, %94 : vector<8x128xf32>
    %cst_48 = arith.constant dense<0.000000e+00> : vector<128xf32>
    %96 = vector.multi_reduction <add>, %95, %cst_48 [0] : vector<8x128xf32> to vector<128xf32>
    %97 = vector.shape_cast %96 : vector<128xf32> to vector<1x128xf32>
    %cst_49 = arith.constant 8.000000e+00 : f32
    %98 = vector.broadcast %cst_49 : f32 to vector<1x128xf32>
    %99 = arith.divf %97, %98 : vector<1x128xf32>
    %100 = vector.broadcast %99 : vector<1x128xf32> to vector<8x128xf32>
    %101 = arith.subf %95, %100 : vector<8x128xf32>
    %102 = arith.mulf %101, %101 : vector<8x128xf32>
    %cst_50 = arith.constant dense<0.000000e+00> : vector<128xf32>
    %103 = vector.multi_reduction <add>, %102, %cst_50 [0] : vector<8x128xf32> to vector<128xf32>
    %104 = vector.shape_cast %103 : vector<128xf32> to vector<1x128xf32>
    %cst_51 = arith.constant 8.000000e+00 : f32
    %105 = vector.broadcast %cst_51 : f32 to vector<1x128xf32>
    %106 = arith.divf %104, %105 : vector<1x128xf32>
    %107 = vector.broadcast %99 : vector<1x128xf32> to vector<8x128xf32>
    %108 = arith.subf %95, %107 : vector<8x128xf32>
    %cst_52 = arith.constant 9.99999974E-6 : f32
    %109 = vector.broadcast %cst_52 : f32 to vector<1x128xf32>
    %110 = arith.addf %106, %109 : vector<1x128xf32>
    %111 = math.rsqrt %110 : vector<1x128xf32>
    %112 = vector.broadcast %111 : vector<1x128xf32> to vector<8x128xf32>
    %113 = arith.mulf %108, %112 : vector<8x128xf32>
    %c0_53 = arith.constant 0 : index
    %c0_54 = arith.constant 0 : index
    %114 = vector.load %arg12[%c0_53, %c0_54] : memref<1x128xf32, #tpu.memory_space<vmem>>, vector<1x128xf32>
    %115 = vector.broadcast %114 : vector<1x128xf32> to vector<8x128xf32>
    %116 = arith.mulf %113, %115 : vector<8x128xf32>
    %c0_55 = arith.constant 0 : index
    %c0_56 = arith.constant 0 : index
    %117 = vector.load %arg13[%c0_55, %c0_56] : memref<1x128xf32, #tpu.memory_space<vmem>>, vector<1x128xf32>
    %118 = vector.broadcast %117 : vector<1x128xf32> to vector<8x128xf32>
    %119 = arith.addf %116, %118 : vector<8x128xf32>
    %cst_57 = arith.constant 0.000000e+00 : f32
    %120 = vector.broadcast %cst_57 : f32 to vector<8x128xf32>
    %121 = arith.cmpf ogt, %119, %120 : vector<8x128xf32>
    %cst_58 = arith.constant 0.000000e+00 : f32
    %122 = vector.broadcast %cst_58 : f32 to vector<8x128xf32>
    %123 = arith.minimumf %119, %122 : vector<8x128xf32>
    %124 = math.exp %123 : vector<8x128xf32>
    %cst_59 = arith.constant 1.000000e+00 : f32
    %125 = vector.broadcast %cst_59 : f32 to vector<8x128xf32>
    %126 = arith.subf %124, %125 : vector<8x128xf32>
    %127 = arith.select %121, %119, %126 : vector<8x128xi1>, vector<8x128xf32>
    %c0_60 = arith.constant 0 : index
    %c0_61 = arith.constant 0 : index
    %128 = vector.load %arg14[%c0_60, %c0_61] : memref<128x128xbf16, #tpu.memory_space<vmem>>, vector<128x128xbf16>
    %129 = arith.truncf %127 : vector<8x128xf32> to vector<8x128xbf16>
    %cst_62 = arith.constant dense<0.000000e+00> : vector<8x128xf32>
    %130 = tpu.matmul %129, %128, %cst_62 {dimension_numbers = #tpu.dot_dimension_numbers<[1], [0], [0], [1], [0, 0, 1, 1], [], []>} : vector<8x128xbf16>, vector<128x128xbf16>, vector<8x128xf32> -> vector<8x128xf32>
    %c0_63 = arith.constant 0 : index
    %c0_64 = arith.constant 0 : index
    %131 = vector.load %arg15[%c0_63, %c0_64] : memref<1x128xf32, #tpu.memory_space<vmem>>, vector<1x128xf32>
    %132 = vector.broadcast %131 : vector<1x128xf32> to vector<8x128xf32>
    %133 = arith.addf %130, %132 : vector<8x128xf32>
    %cst_65 = arith.constant dense<0.000000e+00> : vector<128xf32>
    %134 = vector.multi_reduction <add>, %133, %cst_65 [0] : vector<8x128xf32> to vector<128xf32>
    %135 = vector.shape_cast %134 : vector<128xf32> to vector<1x128xf32>
    %cst_66 = arith.constant 8.000000e+00 : f32
    %136 = vector.broadcast %cst_66 : f32 to vector<1x128xf32>
    %137 = arith.divf %135, %136 : vector<1x128xf32>
    %138 = vector.broadcast %137 : vector<1x128xf32> to vector<8x128xf32>
    %139 = arith.subf %133, %138 : vector<8x128xf32>
    %140 = arith.mulf %139, %139 : vector<8x128xf32>
    %cst_67 = arith.constant dense<0.000000e+00> : vector<128xf32>
    %141 = vector.multi_reduction <add>, %140, %cst_67 [0] : vector<8x128xf32> to vector<128xf32>
    %142 = vector.shape_cast %141 : vector<128xf32> to vector<1x128xf32>
    %cst_68 = arith.constant 8.000000e+00 : f32
    %143 = vector.broadcast %cst_68 : f32 to vector<1x128xf32>
    %144 = arith.divf %142, %143 : vector<1x128xf32>
    %145 = vector.broadcast %137 : vector<1x128xf32> to vector<8x128xf32>
    %146 = arith.subf %133, %145 : vector<8x128xf32>
    %cst_69 = arith.constant 9.99999974E-6 : f32
    %147 = vector.broadcast %cst_69 : f32 to vector<1x128xf32>
    %148 = arith.addf %144, %147 : vector<1x128xf32>
    %149 = math.rsqrt %148 : vector<1x128xf32>
    %150 = vector.broadcast %149 : vector<1x128xf32> to vector<8x128xf32>
    %151 = arith.mulf %146, %150 : vector<8x128xf32>
    %c0_70 = arith.constant 0 : index
    %c0_71 = arith.constant 0 : index
    %152 = vector.load %arg16[%c0_70, %c0_71] : memref<1x128xf32, #tpu.memory_space<vmem>>, vector<1x128xf32>
    %153 = vector.broadcast %152 : vector<1x128xf32> to vector<8x128xf32>
    %154 = arith.mulf %151, %153 : vector<8x128xf32>
    %c0_72 = arith.constant 0 : index
    %c0_73 = arith.constant 0 : index
    %155 = vector.load %arg17[%c0_72, %c0_73] : memref<1x128xf32, #tpu.memory_space<vmem>>, vector<1x128xf32>
    %156 = vector.broadcast %155 : vector<1x128xf32> to vector<8x128xf32>
    %157 = arith.addf %154, %156 : vector<8x128xf32>
    %cst_74 = arith.constant 0.000000e+00 : f32
    %158 = vector.broadcast %cst_74 : f32 to vector<8x128xf32>
    %159 = arith.subf %158, %157 : vector<8x128xf32>
    %160 = math.exp %159 : vector<8x128xf32>
    %cst_75 = arith.constant 1.000000e+00 : f32
    %161 = vector.broadcast %cst_75 : f32 to vector<8x128xf32>
    %162 = arith.addf %161, %160 : vector<8x128xf32>
    %163 = tpu.reciprocal %162 {approx = true} : vector<8x128xf32> -> vector<8x128xf32>
    %c0_76 = arith.constant 0 : index
    %c0_77 = arith.constant 0 : index
    %c0_78 = arith.constant 0 : index
    %164 = vector.load %arg36[%c0_76, %c0_77, %c0_78] : memref<1x8x128xi8, #tpu.memory_space<vmem>>, vector<1x8x128xi8>
    %165 = vector.shape_cast %164 : vector<1x8x128xi8> to vector<8x128xi8>
    %166 = arith.sitofp %165 : vector<8x128xi8> to vector<8x128xf32>
    %cst_79 = arith.constant 2.000000e+00 : f32
    %167 = vector.broadcast %cst_79 : f32 to vector<8x128xf32>
    %168 = arith.mulf %166, %167 : vector<8x128xf32>
    %169 = arith.mulf %163, %168 : vector<8x128xf32>
    %c0_80 = arith.constant 0 : index
    %c0_81 = arith.constant 0 : index
    %170 = vector.load %arg18[%c0_80, %c0_81] : memref<128x128xbf16, #tpu.memory_space<vmem>>, vector<128x128xbf16>
    %171 = arith.truncf %169 : vector<8x128xf32> to vector<8x128xbf16>
    %cst_82 = arith.constant dense<0.000000e+00> : vector<8x128xf32>
    %172 = tpu.matmul %171, %170, %cst_82 {dimension_numbers = #tpu.dot_dimension_numbers<[1], [0], [0], [1], [0, 0, 1, 1], [], []>} : vector<8x128xbf16>, vector<128x128xbf16>, vector<8x128xf32> -> vector<8x128xf32>
    %c0_83 = arith.constant 0 : index
    %c0_84 = arith.constant 0 : index
    %173 = vector.load %arg19[%c0_83, %c0_84] : memref<1x128xf32, #tpu.memory_space<vmem>>, vector<1x128xf32>
    %174 = vector.broadcast %173 : vector<1x128xf32> to vector<8x128xf32>
    %175 = arith.addf %172, %174 : vector<8x128xf32>
    %cst_85 = arith.constant dense<0.000000e+00> : vector<128xf32>
    %176 = vector.multi_reduction <add>, %175, %cst_85 [0] : vector<8x128xf32> to vector<128xf32>
    %177 = vector.shape_cast %176 : vector<128xf32> to vector<1x128xf32>
    %cst_86 = arith.constant 8.000000e+00 : f32
    %178 = vector.broadcast %cst_86 : f32 to vector<1x128xf32>
    %179 = arith.divf %177, %178 : vector<1x128xf32>
    %180 = vector.broadcast %179 : vector<1x128xf32> to vector<8x128xf32>
    %181 = arith.subf %175, %180 : vector<8x128xf32>
    %182 = arith.mulf %181, %181 : vector<8x128xf32>
    %cst_87 = arith.constant dense<0.000000e+00> : vector<128xf32>
    %183 = vector.multi_reduction <add>, %182, %cst_87 [0] : vector<8x128xf32> to vector<128xf32>
    %184 = vector.shape_cast %183 : vector<128xf32> to vector<1x128xf32>
    %cst_88 = arith.constant 8.000000e+00 : f32
    %185 = vector.broadcast %cst_88 : f32 to vector<1x128xf32>
    %186 = arith.divf %184, %185 : vector<1x128xf32>
    %187 = vector.broadcast %179 : vector<1x128xf32> to vector<8x128xf32>
    %188 = arith.subf %175, %187 : vector<8x128xf32>
    %cst_89 = arith.constant 9.99999974E-6 : f32
    %189 = vector.broadcast %cst_89 : f32 to vector<1x128xf32>
    %190 = arith.addf %186, %189 : vector<1x128xf32>
    %191 = math.rsqrt %190 : vector<1x128xf32>
    %192 = vector.broadcast %191 : vector<1x128xf32> to vector<8x128xf32>
    %193 = arith.mulf %188, %192 : vector<8x128xf32>
    %c0_90 = arith.constant 0 : index
    %c0_91 = arith.constant 0 : index
    %194 = vector.load %arg20[%c0_90, %c0_91] : memref<1x128xf32, #tpu.memory_space<vmem>>, vector<1x128xf32>
    %195 = vector.broadcast %194 : vector<1x128xf32> to vector<8x128xf32>
    %196 = arith.mulf %193, %195 : vector<8x128xf32>
    %c0_92 = arith.constant 0 : index
    %c0_93 = arith.constant 0 : index
    %197 = vector.load %arg21[%c0_92, %c0_93] : memref<1x128xf32, #tpu.memory_space<vmem>>, vector<1x128xf32>
    %198 = vector.broadcast %197 : vector<1x128xf32> to vector<8x128xf32>
    %199 = arith.addf %196, %198 : vector<8x128xf32>
    %cst_94 = arith.constant 0.000000e+00 : f32
    %200 = vector.broadcast %cst_94 : f32 to vector<8x128xf32>
    %201 = arith.subf %200, %199 : vector<8x128xf32>
    %202 = math.exp %201 : vector<8x128xf32>
    %cst_95 = arith.constant 1.000000e+00 : f32
    %203 = vector.broadcast %cst_95 : f32 to vector<8x128xf32>
    %204 = arith.addf %203, %202 : vector<8x128xf32>
    %205 = tpu.reciprocal %204 {approx = true} : vector<8x128xf32> -> vector<8x128xf32>
    %c0_96 = arith.constant 0 : index
    %c0_97 = arith.constant 0 : index
    %c0_98 = arith.constant 0 : index
    %206 = vector.load %arg37[%c0_96, %c0_97, %c0_98] : memref<1x8x128xi8, #tpu.memory_space<vmem>>, vector<1x8x128xi8>
    %207 = vector.shape_cast %206 : vector<1x8x128xi8> to vector<8x128xi8>
    %208 = arith.sitofp %207 : vector<8x128xi8> to vector<8x128xf32>
    %cst_99 = arith.constant 2.000000e+00 : f32
    %209 = vector.broadcast %cst_99 : f32 to vector<8x128xf32>
    %210 = arith.mulf %208, %209 : vector<8x128xf32>
    %211 = arith.mulf %205, %210 : vector<8x128xf32>
    %c0_100 = arith.constant 0 : index
    %c0_101 = arith.constant 0 : index
    %212 = vector.load %arg22[%c0_100, %c0_101] : memref<128x128xbf16, #tpu.memory_space<vmem>>, vector<128x128xbf16>
    %213 = arith.truncf %211 : vector<8x128xf32> to vector<8x128xbf16>
    %cst_102 = arith.constant dense<0.000000e+00> : vector<8x128xf32>
    %214 = tpu.matmul %213, %212, %cst_102 {dimension_numbers = #tpu.dot_dimension_numbers<[1], [0], [0], [1], [0, 0, 1, 1], [], []>} : vector<8x128xbf16>, vector<128x128xbf16>, vector<8x128xf32> -> vector<8x128xf32>
    %c0_103 = arith.constant 0 : index
    %c0_104 = arith.constant 0 : index
    %215 = vector.load %arg23[%c0_103, %c0_104] : memref<1x128xf32, #tpu.memory_space<vmem>>, vector<1x128xf32>
    %216 = vector.broadcast %215 : vector<1x128xf32> to vector<8x128xf32>
    %217 = arith.addf %214, %216 : vector<8x128xf32>
    %cst_105 = arith.constant dense<0.000000e+00> : vector<128xf32>
    %218 = vector.multi_reduction <add>, %217, %cst_105 [0] : vector<8x128xf32> to vector<128xf32>
    %219 = vector.shape_cast %218 : vector<128xf32> to vector<1x128xf32>
    %cst_106 = arith.constant 8.000000e+00 : f32
    %220 = vector.broadcast %cst_106 : f32 to vector<1x128xf32>
    %221 = arith.divf %219, %220 : vector<1x128xf32>
    %222 = vector.broadcast %221 : vector<1x128xf32> to vector<8x128xf32>
    %223 = arith.subf %217, %222 : vector<8x128xf32>
    %224 = arith.mulf %223, %223 : vector<8x128xf32>
    %cst_107 = arith.constant dense<0.000000e+00> : vector<128xf32>
    %225 = vector.multi_reduction <add>, %224, %cst_107 [0] : vector<8x128xf32> to vector<128xf32>
    %226 = vector.shape_cast %225 : vector<128xf32> to vector<1x128xf32>
    %cst_108 = arith.constant 8.000000e+00 : f32
    %227 = vector.broadcast %cst_108 : f32 to vector<1x128xf32>
    %228 = arith.divf %226, %227 : vector<1x128xf32>
    %229 = vector.broadcast %221 : vector<1x128xf32> to vector<8x128xf32>
    %230 = arith.subf %217, %229 : vector<8x128xf32>
    %cst_109 = arith.constant 9.99999974E-6 : f32
    %231 = vector.broadcast %cst_109 : f32 to vector<1x128xf32>
    %232 = arith.addf %228, %231 : vector<1x128xf32>
    %233 = math.rsqrt %232 : vector<1x128xf32>
    %234 = vector.broadcast %233 : vector<1x128xf32> to vector<8x128xf32>
    %235 = arith.mulf %230, %234 : vector<8x128xf32>
    %c0_110 = arith.constant 0 : index
    %c0_111 = arith.constant 0 : index
    %236 = vector.load %arg24[%c0_110, %c0_111] : memref<1x128xf32, #tpu.memory_space<vmem>>, vector<1x128xf32>
    %237 = vector.broadcast %236 : vector<1x128xf32> to vector<8x128xf32>
    %238 = arith.mulf %235, %237 : vector<8x128xf32>
    %c0_112 = arith.constant 0 : index
    %c0_113 = arith.constant 0 : index
    %239 = vector.load %arg25[%c0_112, %c0_113] : memref<1x128xf32, #tpu.memory_space<vmem>>, vector<1x128xf32>
    %240 = vector.broadcast %239 : vector<1x128xf32> to vector<8x128xf32>
    %241 = arith.addf %238, %240 : vector<8x128xf32>
    %cst_114 = arith.constant 0.000000e+00 : f32
    %242 = vector.broadcast %cst_114 : f32 to vector<8x128xf32>
    %243 = arith.subf %242, %241 : vector<8x128xf32>
    %244 = math.exp %243 : vector<8x128xf32>
    %cst_115 = arith.constant 1.000000e+00 : f32
    %245 = vector.broadcast %cst_115 : f32 to vector<8x128xf32>
    %246 = arith.addf %245, %244 : vector<8x128xf32>
    %247 = tpu.reciprocal %246 {approx = true} : vector<8x128xf32> -> vector<8x128xf32>
    %c0_116 = arith.constant 0 : index
    %c0_117 = arith.constant 0 : index
    %248 = vector.load %arg26[%c0_116, %c0_117] : memref<128x128xbf16, #tpu.memory_space<vmem>>, vector<128x128xbf16>
    %249 = arith.truncf %127 : vector<8x128xf32> to vector<8x128xbf16>
    %cst_118 = arith.constant dense<0.000000e+00> : vector<8x128xf32>
    %250 = tpu.matmul %249, %248, %cst_118 {dimension_numbers = #tpu.dot_dimension_numbers<[1], [0], [0], [1], [0, 0, 1, 1], [], []>} : vector<8x128xbf16>, vector<128x128xbf16>, vector<8x128xf32> -> vector<8x128xf32>
    %c0_119 = arith.constant 0 : index
    %c0_120 = arith.constant 0 : index
    %251 = vector.load %arg27[%c0_119, %c0_120] : memref<1x128xf32, #tpu.memory_space<vmem>>, vector<1x128xf32>
    %252 = vector.broadcast %251 : vector<1x128xf32> to vector<8x128xf32>
    %253 = arith.addf %250, %252 : vector<8x128xf32>
    %cst_121 = arith.constant dense<0.000000e+00> : vector<128xf32>
    %254 = vector.multi_reduction <add>, %253, %cst_121 [0] : vector<8x128xf32> to vector<128xf32>
    %255 = vector.shape_cast %254 : vector<128xf32> to vector<1x128xf32>
    %cst_122 = arith.constant 8.000000e+00 : f32
    %256 = vector.broadcast %cst_122 : f32 to vector<1x128xf32>
    %257 = arith.divf %255, %256 : vector<1x128xf32>
    %258 = vector.broadcast %257 : vector<1x128xf32> to vector<8x128xf32>
    %259 = arith.subf %253, %258 : vector<8x128xf32>
    %260 = arith.mulf %259, %259 : vector<8x128xf32>
    %cst_123 = arith.constant dense<0.000000e+00> : vector<128xf32>
    %261 = vector.multi_reduction <add>, %260, %cst_123 [0] : vector<8x128xf32> to vector<128xf32>
    %262 = vector.shape_cast %261 : vector<128xf32> to vector<1x128xf32>
    %cst_124 = arith.constant 8.000000e+00 : f32
    %263 = vector.broadcast %cst_124 : f32 to vector<1x128xf32>
    %264 = arith.divf %262, %263 : vector<1x128xf32>
    %265 = vector.broadcast %257 : vector<1x128xf32> to vector<8x128xf32>
    %266 = arith.subf %253, %265 : vector<8x128xf32>
    %cst_125 = arith.constant 9.99999974E-6 : f32
    %267 = vector.broadcast %cst_125 : f32 to vector<1x128xf32>
    %268 = arith.addf %264, %267 : vector<1x128xf32>
    %269 = math.rsqrt %268 : vector<1x128xf32>
    %270 = vector.broadcast %269 : vector<1x128xf32> to vector<8x128xf32>
    %271 = arith.mulf %266, %270 : vector<8x128xf32>
    %c0_126 = arith.constant 0 : index
    %c0_127 = arith.constant 0 : index
    %272 = vector.load %arg28[%c0_126, %c0_127] : memref<1x128xf32, #tpu.memory_space<vmem>>, vector<1x128xf32>
    %273 = vector.broadcast %272 : vector<1x128xf32> to vector<8x128xf32>
    %274 = arith.mulf %271, %273 : vector<8x128xf32>
    %c0_128 = arith.constant 0 : index
    %c0_129 = arith.constant 0 : index
    %275 = vector.load %arg29[%c0_128, %c0_129] : memref<1x128xf32, #tpu.memory_space<vmem>>, vector<1x128xf32>
    %276 = vector.broadcast %275 : vector<1x128xf32> to vector<8x128xf32>
    %277 = arith.addf %274, %276 : vector<8x128xf32>
    %cst_130 = arith.constant 0.000000e+00 : f32
    %278 = vector.broadcast %cst_130 : f32 to vector<8x128xf32>
    %279 = arith.subf %278, %277 : vector<8x128xf32>
    %280 = math.exp %279 : vector<8x128xf32>
    %cst_131 = arith.constant 1.000000e+00 : f32
    %281 = vector.broadcast %cst_131 : f32 to vector<8x128xf32>
    %282 = arith.addf %281, %280 : vector<8x128xf32>
    %283 = tpu.reciprocal %282 {approx = true} : vector<8x128xf32> -> vector<8x128xf32>
    %c0_132 = arith.constant 0 : index
    %c0_133 = arith.constant 0 : index
    %284 = vector.load %arg30[%c0_132, %c0_133] : memref<128x128xbf16, #tpu.memory_space<vmem>>, vector<128x128xbf16>
    %285 = arith.truncf %283 : vector<8x128xf32> to vector<8x128xbf16>
    %cst_134 = arith.constant dense<0.000000e+00> : vector<8x128xf32>
    %286 = tpu.matmul %285, %284, %cst_134 {dimension_numbers = #tpu.dot_dimension_numbers<[1], [0], [0], [1], [0, 0, 1, 1], [], []>} : vector<8x128xbf16>, vector<128x128xbf16>, vector<8x128xf32> -> vector<8x128xf32>
    %c0_135 = arith.constant 0 : index
    %c0_136 = arith.constant 0 : index
    %287 = vector.load %arg31[%c0_135, %c0_136] : memref<1x128xf32, #tpu.memory_space<vmem>>, vector<1x128xf32>
    %288 = vector.broadcast %287 : vector<1x128xf32> to vector<8x128xf32>
    %289 = arith.addf %286, %288 : vector<8x128xf32>
    %cst_137 = arith.constant 0.000000e+00 : f32
    %290 = vector.broadcast %cst_137 : f32 to vector<8x128xf32>
    %291 = arith.subf %290, %289 : vector<8x128xf32>
    %292 = math.exp %291 : vector<8x128xf32>
    %cst_138 = arith.constant 1.000000e+00 : f32
    %293 = vector.broadcast %cst_138 : f32 to vector<8x128xf32>
    %294 = arith.addf %293, %292 : vector<8x128xf32>
    %295 = tpu.reciprocal %294 {approx = true} : vector<8x128xf32> -> vector<8x128xf32>
    %c0_139 = arith.constant 0 : index
    %c0_140 = arith.constant 0 : index
    %296 = vector.load %arg32[%c0_139, %c0_140] : memref<128x128xbf16, #tpu.memory_space<vmem>>, vector<128x128xbf16>
    %297 = arith.truncf %295 : vector<8x128xf32> to vector<8x128xbf16>
    %cst_141 = arith.constant dense<0.000000e+00> : vector<8x128xf32>
    %298 = tpu.matmul %297, %296, %cst_141 {dimension_numbers = #tpu.dot_dimension_numbers<[1], [0], [0], [1], [0, 0, 1, 1], [], []>} : vector<8x128xbf16>, vector<128x128xbf16>, vector<8x128xf32> -> vector<8x128xf32>
    %c0_142 = arith.constant 0 : index
    %c0_143 = arith.constant 0 : index
    %299 = vector.load %arg33[%c0_142, %c0_143] : memref<1x128xf32, #tpu.memory_space<vmem>>, vector<1x128xf32>
    %300 = vector.broadcast %299 : vector<1x128xf32> to vector<8x128xf32>
    %301 = arith.addf %298, %300 : vector<8x128xf32>
    %c0_144 = arith.constant 0 : index
    %c0_145 = arith.constant 0 : index
    %c0_146 = arith.constant 0 : index
    %302 = vector.load %arg38[%c0_144, %c0_145, %c0_146] : memref<1x8x128xf32, #tpu.memory_space<vmem>>, vector<1x8x128xf32>
    %303 = vector.shape_cast %302 : vector<1x8x128xf32> to vector<8x128xf32>
    %304 = vector.shape_cast %127 : vector<8x128xf32> to vector<1x8x128xf32>
    tpu.vector_store %arg38[%c0_144, %c0_145, %c0_146], %304 {strides = array<i32>} : memref<1x8x128xf32, #tpu.memory_space<vmem>>, vector<1x8x128xf32>,
    %c0_147 = arith.constant 0 : index
    %c0_148 = arith.constant 0 : index
    %c0_149 = arith.constant 0 : index
    %305 = vector.load %arg39[%c0_147, %c0_148, %c0_149] : memref<1x8x128xf32, #tpu.memory_space<vmem>>, vector<1x8x128xf32>
    %306 = vector.shape_cast %305 : vector<1x8x128xf32> to vector<8x128xf32>
    %307 = vector.shape_cast %247 : vector<8x128xf32> to vector<1x8x128xf32>
    tpu.vector_store %arg39[%c0_147, %c0_148, %c0_149], %307 {strides = array<i32>} : memref<1x8x128xf32, #tpu.memory_space<vmem>>, vector<1x8x128xf32>,
    %c0_150 = arith.constant 0 : index
    %c0_151 = arith.constant 0 : index
    %c0_152 = arith.constant 0 : index
    %308 = vector.load %arg40[%c0_150, %c0_151, %c0_152] : memref<1x8x128xf32, #tpu.memory_space<vmem>>, vector<1x8x128xf32>
    %309 = vector.shape_cast %308 : vector<1x8x128xf32> to vector<8x128xf32>
    %310 = vector.shape_cast %295 : vector<8x128xf32> to vector<1x8x128xf32>
    tpu.vector_store %arg40[%c0_150, %c0_151, %c0_152], %310 {strides = array<i32>} : memref<1x8x128xf32, #tpu.memory_space<vmem>>, vector<1x8x128xf32>,
    %c0_153 = arith.constant 0 : index
    %c0_154 = arith.constant 0 : index
    %c0_155 = arith.constant 0 : index
    %311 = vector.load %arg41[%c0_153, %c0_154, %c0_155] : memref<1x8x128xf32, #tpu.memory_space<vmem>>, vector<1x8x128xf32>
    %312 = vector.shape_cast %311 : vector<1x8x128xf32> to vector<8x128xf32>
    %313 = vector.shape_cast %301 : vector<8x128xf32> to vector<1x8x128xf32>
    tpu.vector_store %arg41[%c0_153, %c0_154, %c0_155], %313 {strides = array<i32>} : memref<1x8x128xf32, #tpu.memory_space<vmem>>, vector<1x8x128xf32>,
    return
  }
  func.func @transform_0(%arg0: i32) -> (i32, i32, i32) {
    %c0_i32 = arith.constant 0 : i32
    %c0_i32_0 = arith.constant 0 : i32
    %c0_i32_1 = arith.constant 0 : i32
    return %arg0, %c0_i32, %c0_i32_0 : i32, i32, i32
  }
  func.func @transform_1(%arg0: i32) -> (i32, i32) {
    %c0_i32 = arith.constant 0 : i32
    %c0_i32_0 = arith.constant 0 : i32
    %c0_i32_1 = arith.constant 0 : i32
    return %c0_i32, %c0_i32_0 : i32, i32
  }
  func.func @transform_2(%arg0: i32) -> (i32, i32) {
    %c0_i32 = arith.constant 0 : i32
    %c0_i32_0 = arith.constant 0 : i32
    %c0_i32_1 = arith.constant 0 : i32
    return %c0_i32, %c0_i32_0 : i32, i32
  }
  func.func @transform_3(%arg0: i32) -> (i32, i32) {
    %c0_i32 = arith.constant 0 : i32
    %c0_i32_0 = arith.constant 0 : i32
    %c0_i32_1 = arith.constant 0 : i32
    return %c0_i32, %c0_i32_0 : i32, i32
  }
  func.func @transform_4(%arg0: i32) -> (i32, i32) {
    %c0_i32 = arith.constant 0 : i32
    %c0_i32_0 = arith.constant 0 : i32
    %c0_i32_1 = arith.constant 0 : i32
    return %c0_i32, %c0_i32_0 : i32, i32
  }
  func.func @transform_5(%arg0: i32) -> (i32, i32) {
    %c0_i32 = arith.constant 0 : i32
    %c0_i32_0 = arith.constant 0 : i32
    %c0_i32_1 = arith.constant 0 : i32
    return %c0_i32, %c0_i32_0 : i32, i32
  }
  func.func @transform_6(%arg0: i32) -> (i32, i32) {
    %c0_i32 = arith.constant 0 : i32
    %c0_i32_0 = arith.constant 0 : i32
    %c0_i32_1 = arith.constant 0 : i32
    return %c0_i32, %c0_i32_0 : i32, i32
  }
  func.func @transform_7(%arg0: i32) -> (i32, i32) {
    %c0_i32 = arith.constant 0 : i32
    %c0_i32_0 = arith.constant 0 : i32
    %c0_i32_1 = arith.constant 0 : i32
    return %c0_i32, %c0_i32_0 : i32, i32
  }
  func.func @transform_8(%arg0: i32) -> (i32, i32) {
    %c0_i32 = arith.constant 0 : i32
    %c0_i32_0 = arith.constant 0 : i32
    %c0_i32_1 = arith.constant 0 : i32
    return %c0_i32, %c0_i32_0 : i32, i32
  }
  func.func @transform_9(%arg0: i32) -> (i32, i32) {
    %c0_i32 = arith.constant 0 : i32
    %c0_i32_0 = arith.constant 0 : i32
    %c0_i32_1 = arith.constant 0 : i32
    return %c0_i32, %c0_i32_0 : i32, i32
  }
  func.func @transform_10(%arg0: i32) -> (i32, i32) {
    %c0_i32 = arith.constant 0 : i32
    %c0_i32_0 = arith.constant 0 : i32
    %c0_i32_1 = arith.constant 0 : i32
    return %c0_i32, %c0_i32_0 : i32, i32
  }
  func.func @transform_11(%arg0: i32) -> (i32, i32) {
    %c0_i32 = arith.constant 0 : i32
    %c0_i32_0 = arith.constant 0 : i32
    %c0_i32_1 = arith.constant 0 : i32
    return %c0_i32, %c0_i32_0 : i32, i32
  }
  func.func @transform_12(%arg0: i32) -> (i32, i32) {
    %c0_i32 = arith.constant 0 : i32
    %c0_i32_0 = arith.constant 0 : i32
    %c0_i32_1 = arith.constant 0 : i32
    return %c0_i32, %c0_i32_0 : i32, i32
  }
  func.func @transform_13(%arg0: i32) -> (i32, i32) {
    %c0_i32 = arith.constant 0 : i32
    %c0_i32_0 = arith.constant 0 : i32
    %c0_i32_1 = arith.constant 0 : i32
    return %c0_i32, %c0_i32_0 : i32, i32
  }
  func.func @transform_14(%arg0: i32) -> (i32, i32) {
    %c0_i32 = arith.constant 0 : i32
    %c0_i32_0 = arith.constant 0 : i32
    %c0_i32_1 = arith.constant 0 : i32
    return %c0_i32, %c0_i32_0 : i32, i32
  }
  func.func @transform_15(%arg0: i32) -> (i32, i32) {
    %c0_i32 = arith.constant 0 : i32
    %c0_i32_0 = arith.constant 0 : i32
    %c0_i32_1 = arith.constant 0 : i32
    return %c0_i32, %c0_i32_0 : i32, i32
  }
  func.func @transform_16(%arg0: i32) -> (i32, i32) {
    %c0_i32 = arith.constant 0 : i32
    %c0_i32_0 = arith.constant 0 : i32
    %c0_i32_1 = arith.constant 0 : i32
    return %c0_i32, %c0_i32_0 : i32, i32
  }
  func.func @transform_17(%arg0: i32) -> (i32, i32) {
    %c0_i32 = arith.constant 0 : i32
    %c0_i32_0 = arith.constant 0 : i32
    %c0_i32_1 = arith.constant 0 : i32
    return %c0_i32, %c0_i32_0 : i32, i32
  }
  func.func @transform_18(%arg0: i32) -> (i32, i32) {
    %c0_i32 = arith.constant 0 : i32
    %c0_i32_0 = arith.constant 0 : i32
    %c0_i32_1 = arith.constant 0 : i32
    return %c0_i32, %c0_i32_0 : i32, i32
  }
  func.func @transform_19(%arg0: i32) -> (i32, i32) {
    %c0_i32 = arith.constant 0 : i32
    %c0_i32_0 = arith.constant 0 : i32
    %c0_i32_1 = arith.constant 0 : i32
    return %c0_i32, %c0_i32_0 : i32, i32
  }
  func.func @transform_20(%arg0: i32) -> (i32, i32) {
    %c0_i32 = arith.constant 0 : i32
    %c0_i32_0 = arith.constant 0 : i32
    %c0_i32_1 = arith.constant 0 : i32
    return %c0_i32, %c0_i32_0 : i32, i32
  }
  func.func @transform_21(%arg0: i32) -> (i32, i32) {
    %c0_i32 = arith.constant 0 : i32
    %c0_i32_0 = arith.constant 0 : i32
    %c0_i32_1 = arith.constant 0 : i32
    return %c0_i32, %c0_i32_0 : i32, i32
  }
  func.func @transform_22(%arg0: i32) -> (i32, i32) {
    %c0_i32 = arith.constant 0 : i32
    %c0_i32_0 = arith.constant 0 : i32
    %c0_i32_1 = arith.constant 0 : i32
    return %c0_i32, %c0_i32_0 : i32, i32
  }
  func.func @transform_23(%arg0: i32) -> (i32, i32) {
    %c0_i32 = arith.constant 0 : i32
    %c0_i32_0 = arith.constant 0 : i32
    %c0_i32_1 = arith.constant 0 : i32
    return %c0_i32, %c0_i32_0 : i32, i32
  }
  func.func @transform_24(%arg0: i32) -> (i32, i32) {
    %c0_i32 = arith.constant 0 : i32
    %c0_i32_0 = arith.constant 0 : i32
    %c0_i32_1 = arith.constant 0 : i32
    return %c0_i32, %c0_i32_0 : i32, i32
  }
  func.func @transform_25(%arg0: i32) -> (i32, i32) {
    %c0_i32 = arith.constant 0 : i32
    %c0_i32_0 = arith.constant 0 : i32
    %c0_i32_1 = arith.constant 0 : i32
    return %c0_i32, %c0_i32_0 : i32, i32
  }
  func.func @transform_26(%arg0: i32) -> (i32, i32) {
    %c0_i32 = arith.constant 0 : i32
    %c0_i32_0 = arith.constant 0 : i32
    %c0_i32_1 = arith.constant 0 : i32
    return %c0_i32, %c0_i32_0 : i32, i32
  }
  func.func @transform_27(%arg0: i32) -> (i32, i32) {
    %c0_i32 = arith.constant 0 : i32
    %c0_i32_0 = arith.constant 0 : i32
    %c0_i32_1 = arith.constant 0 : i32
    return %c0_i32, %c0_i32_0 : i32, i32
  }
  func.func @transform_28(%arg0: i32) -> (i32, i32) {
    %c0_i32 = arith.constant 0 : i32
    %c0_i32_0 = arith.constant 0 : i32
    %c0_i32_1 = arith.constant 0 : i32
    return %c0_i32, %c0_i32_0 : i32, i32
  }
  func.func @transform_29(%arg0: i32) -> (i32, i32) {
    %c0_i32 = arith.constant 0 : i32
    %c0_i32_0 = arith.constant 0 : i32
    %c0_i32_1 = arith.constant 0 : i32
    return %c0_i32, %c0_i32_0 : i32, i32
  }
  func.func @transform_30(%arg0: i32) -> (i32, i32) {
    %c0_i32 = arith.constant 0 : i32
    %c0_i32_0 = arith.constant 0 : i32
    %c0_i32_1 = arith.constant 0 : i32
    return %c0_i32, %c0_i32_0 : i32, i32
  }
  func.func @transform_31(%arg0: i32) -> (i32, i32) {
    %c0_i32 = arith.constant 0 : i32
    %c0_i32_0 = arith.constant 0 : i32
    %c0_i32_1 = arith.constant 0 : i32
    return %c0_i32, %c0_i32_0 : i32, i32
  }
  func.func @transform_32(%arg0: i32) -> (i32, i32) {
    %c0_i32 = arith.constant 0 : i32
    %c0_i32_0 = arith.constant 0 : i32
    %c0_i32_1 = arith.constant 0 : i32
    return %c0_i32, %c0_i32_0 : i32, i32
  }
  func.func @transform_33(%arg0: i32) -> (i32, i32, i32) {
    %c0_i32 = arith.constant 0 : i32
    %c0_i32_0 = arith.constant 0 : i32
    %c0_i32_1 = arith.constant 0 : i32
    return %arg0, %c0_i32, %c0_i32_0 : i32, i32, i32
  }
  func.func @transform_34(%arg0: i32) -> (i32, i32, i32) {
    %c0_i32 = arith.constant 0 : i32
    %c0_i32_0 = arith.constant 0 : i32
    %c0_i32_1 = arith.constant 0 : i32
    return %arg0, %c0_i32, %c0_i32_0 : i32, i32, i32
  }
  func.func @transform_35(%arg0: i32) -> (i32, i32, i32) {
    %c0_i32 = arith.constant 0 : i32
    %c0_i32_0 = arith.constant 0 : i32
    %c0_i32_1 = arith.constant 0 : i32
    return %arg0, %c0_i32, %c0_i32_0 : i32, i32, i32
  }
  func.func @transform_36(%arg0: i32) -> (i32, i32, i32) {
    %c0_i32 = arith.constant 0 : i32
    %c0_i32_0 = arith.constant 0 : i32
    %c0_i32_1 = arith.constant 0 : i32
    return %arg0, %c0_i32, %c0_i32_0 : i32, i32, i32
  }
  func.func @transform_37(%arg0: i32) -> (i32, i32, i32) {
    %c0_i32 = arith.constant 0 : i32
    %c0_i32_0 = arith.constant 0 : i32
    %c0_i32_1 = arith.constant 0 : i32
    return %arg0, %c0_i32, %c0_i32_0 : i32, i32, i32
  }
  func.func @transform_38(%arg0: i32) -> (i32, i32, i32) {
    %c0_i32 = arith.constant 0 : i32
    %c0_i32_0 = arith.constant 0 : i32
    %c0_i32_1 = arith.constant 0 : i32
    return %arg0, %c0_i32, %c0_i32_0 : i32, i32, i32
  }
  func.func @transform_39(%arg0: i32) -> (i32, i32, i32) {
    %c0_i32 = arith.constant 0 : i32
    %c0_i32_0 = arith.constant 0 : i32
    %c0_i32_1 = arith.constant 0 : i32
    return %arg0, %c0_i32, %c0_i32_0 : i32, i32, i32
  }
  func.func @transform_40(%arg0: i32) -> (i32, i32, i32) {
    %c0_i32 = arith.constant 0 : i32
    %c0_i32_0 = arith.constant 0 : i32
    %c0_i32_1 = arith.constant 0 : i32
    return %arg0, %c0_i32, %c0_i32_0 : i32, i32, i32
  }
}

</mosaic_0001>

<llo_original>
// kernel: tpu_custom_call.1
$region0: #{tpu_custom_call.1}
  #allocation0 [shape = 'u32[]', space=smem, size = 0x4, offset = 0x4, fixed_abs, tag = 'smem constant byte address 0x4 - core index']
  #allocation1 [shape = 'u32[144,128]{1,0:T(1,128)}', space=vmem, size = 0x12000, scoped, tag = 'internal scratch']
  %s0 = inlined_call_operand.smem [shape: u32[41], index: -1, kind: input, shape index: {}]
  %s1 = sld [smem:[%s0]]
  %s2 = scalar_lea.smem %s0, 1
  %s3 = sld [smem:[%s2]]
  %s4 = scalar_lea.smem %s0, 2
  %s5 = sld [smem:[%s4]]
  %s6 = scalar_lea.smem %s0, 3
  %s7 = sld [smem:[%s6]]
  %s8 = scalar_lea.smem %s0, 4
  %s9 = sld [smem:[%s8]]
  %s10 = scalar_lea.smem %s0, 5
  %s11 = sld [smem:[%s10]]
  %s12 = scalar_lea.smem %s0, 6
  %s13 = sld [smem:[%s12]]
  %s14 = scalar_lea.smem %s0, 7
  %s15 = sld [smem:[%s14]]
  %s16 = scalar_lea.smem %s0, 8
  %s17 = sld [smem:[%s16]]
  %s18 = scalar_lea.smem %s0, 9
  %s19 = sld [smem:[%s18]]
  %s20 = scalar_lea.smem %s0, 10
  %s21 = sld [smem:[%s20]]
  %s22 = scalar_lea.smem %s0, 11
  %s23 = sld [smem:[%s22]]
  %s24 = scalar_lea.smem %s0, 12
  %s25 = sld [smem:[%s24]]
  %s26 = scalar_lea.smem %s0, 13
  %s27 = sld [smem:[%s26]]
  %s28 = scalar_lea.smem %s0, 14
  %s29 = sld [smem:[%s28]]
  %s30 = scalar_lea.smem %s0, 15
  %s31 = sld [smem:[%s30]]
  %s32 = scalar_lea.smem %s0, 16
  %s33 = sld [smem:[%s32]]
  %s34 = scalar_lea.smem %s0, 17
  %s35 = sld [smem:[%s34]]
  %s36 = scalar_lea.smem %s0, 18
  %s37 = sld [smem:[%s36]]
  %s38 = scalar_lea.smem %s0, 19
  %s39 = sld [smem:[%s38]]
  %s40 = scalar_lea.smem %s0, 20
  %s41 = sld [smem:[%s40]]
  %s42 = scalar_lea.smem %s0, 21
  %s43 = sld [smem:[%s42]]
  %s44 = scalar_lea.smem %s0, 22
  %s45 = sld [smem:[%s44]]
  %s46 = scalar_lea.smem %s0, 23
  %s47 = sld [smem:[%s46]]
  %s48 = scalar_lea.smem %s0, 24
  %s49 = sld [smem:[%s48]]
  %s50 = scalar_lea.smem %s0, 25
  %s51 = sld [smem:[%s50]]
  %s52 = scalar_lea.smem %s0, 26
  %s53 = sld [smem:[%s52]]
  %s54 = scalar_lea.smem %s0, 27
  %s55 = sld [smem:[%s54]]
  %s56 = scalar_lea.smem %s0, 28
  %s57 = sld [smem:[%s56]]
  %s58 = scalar_lea.smem %s0, 29
  %s59 = sld [smem:[%s58]]
  %s60 = scalar_lea.smem %s0, 30
  %s61 = sld [smem:[%s60]]
  %s62 = scalar_lea.smem %s0, 31
  %s63 = sld [smem:[%s62]]
  %s64 = scalar_lea.smem %s0, 32
  %s65 = sld [smem:[%s64]]
  %s66 = scalar_lea.smem %s0, 33
  %s67 = sld [smem:[%s66]]
  %s68 = scalar_lea.smem %s0, 34
  %s69 = sld [smem:[%s68]]
  %s70 = scalar_lea.smem %s0, 35
  %s71 = sld [smem:[%s70]]
  %s72 = scalar_lea.smem %s0, 36
  %s73 = sld [smem:[%s72]]
  %s74 = scalar_lea.smem %s0, 37
  %s75 = sld [smem:[%s74]]
  %s76 = scalar_lea.smem %s0, 38
  %s77 = sld [smem:[%s76]]
  %s78 = scalar_lea.smem %s0, 39
  %s79 = sld [smem:[%s78]]
  %s80 = scalar_lea.smem %s0, 40
  %s81 = sld [smem:[%s80]]
  %82 = xla_tuple %s75, %s77, %s79, %s81
  %s83 = sld [smem:[#allocation0]]
  $region269: #{tpu_custom_call.1} parent=0
    _
  %s85 = ssub.s32 1, %s83
  %s86 = scalar_select 0, %s85, %s83
  $region1: #{tpu_custom_call.1} parent=0
    #allocation2 [shape = 'u8[8192]{0}', space=vmem, size = 0x2000, scoped, tag = 'input window, operand 0']
    #allocation3 [shape = 's32[2]{0}', space=sflag, size = 0x8, scoped, tag = 'scoped memory for tpu_custom_call.1']
    #allocation4 [shape = 's32[2]{0}', space=sflag, size = 0x8, scoped, tag = 'scoped memory for tpu_custom_call.1']
    #allocation5 [shape = 'u8[32768]{0}', space=vmem, size = 0x8000, scoped, tag = 'input window, operand 1, single buffered']
    #allocation6 [shape = 's32[1]{0}', space=sflag, size = 0x4, scoped, tag = 'scoped memory for tpu_custom_call.1']
    #allocation7 [shape = 'u8[512]{0}', space=vmem, size = 0x400, scoped, tag = 'input window, operand 2, single buffered']
    #allocation8 [shape = 'u8[512]{0}', space=vmem, size = 0x400, scoped, tag = 'input window, operand 3, single buffered']
    #allocation9 [shape = 's32[1]{0}', space=sflag, size = 0x4, scoped, tag = 'scoped memory for tpu_custom_call.1']
    #allocation10 [shape = 'u8[512]{0}', space=vmem, size = 0x400, scoped, tag = 'input window, operand 4, single buffered']
    #allocation11 [shape = 'u8[32768]{0}', space=vmem, size = 0x8000, scoped, tag = 'input window, operand 5, single buffered']
    #allocation12 [shape = 's32[1]{0}', space=sflag, size = 0x4, scoped, tag = 'scoped memory for tpu_custom_call.1']
    #allocation13 [shape = 'u8[512]{0}', space=vmem, size = 0x400, scoped, tag = 'input window, operand 6, single buffered']
    #allocation14 [shape = 'u8[512]{0}', space=vmem, size = 0x400, scoped, tag = 'input window, operand 7, single buffered']
    #allocation15 [shape = 's32[1]{0}', space=sflag, size = 0x4, scoped, tag = 'scoped memory for tpu_custom_call.1']
    #allocation16 [shape = 'u8[512]{0}', space=vmem, size = 0x400, scoped, tag = 'input window, operand 8, single buffered']
    #allocation17 [shape = 'u8[32768]{0}', space=vmem, size = 0x8000, scoped, tag = 'input window, operand 9, single buffered']
    #allocation18 [shape = 's32[1]{0}', space=sflag, size = 0x4, scoped, tag = 'scoped memory for tpu_custom_call.1']
    #allocation19 [shape = 'u8[32768]{0}', space=vmem, size = 0x8000, scoped, tag = 'input window, operand 13, single buffered']
    #allocation20 [shape = 'u8[32768]{0}', space=vmem, size = 0x8000, scoped, tag = 'input window, operand 17, single buffered']
    #allocation21 [shape = 's32[1]{0}', space=sflag, size = 0x4, scoped, tag = 'scoped memory for tpu_custom_call.1']
    #allocation22 [shape = 'u8[32768]{0}', space=vmem, size = 0x8000, scoped, tag = 'input window, operand 21, single buffered']
    #allocation23 [shape = 'u8[32768]{0}', space=vmem, size = 0x8000, scoped, tag = 'input window, operand 25, single buffered']
    #allocation24 [shape = 's32[1]{0}', space=sflag, size = 0x4, scoped, tag = 'scoped memory for tpu_custom_call.1']
    #allocation25 [shape = 'u8[32768]{0}', space=vmem, size = 0x8000, scoped, tag = 'input window, operand 29, single buffered']
    #allocation26 [shape = 'u8[32768]{0}', space=vmem, size = 0x8000, scoped, tag = 'input window, operand 31, single buffered']
    #allocation27 [shape = 's32[1]{0}', space=sflag, size = 0x4, scoped, tag = 'scoped memory for tpu_custom_call.1']
    #allocation28 [shape = 'u8[8192]{0}', space=vmem, size = 0x2000, scoped, tag = 'output window, operand 0']
    #allocation29 [shape = 'u8[8192]{0}', space=vmem, size = 0x2000, scoped, tag = 'output window, operand 1']
    #allocation30 [shape = 's32[2]{0}', space=sflag, size = 0x8, scoped, tag = 'scoped memory for tpu_custom_call.1']
    #allocation31 [shape = 'u8[8192]{0}', space=vmem, size = 0x2000, scoped, tag = 'output window, operand 2']
    #allocation32 [shape = 'u8[8192]{0}', space=vmem, size = 0x2000, scoped, tag = 'output window, operand 3']
    #allocation33 [shape = 's32[2]{0}', space=sflag, size = 0x8, scoped, tag = 'scoped memory for tpu_custom_call.1']
    %87 = vsyncpa [#allocation3], 0
    %s88 = scalar_lea.sflag [#allocation3], 1
    %89 = vsyncpa %s88, 0
    %90 = vsyncpa [#allocation6], 0
    %91 = vsyncpa [#allocation9], 0
    %92 = vsyncpa [#allocation12], 0
    %93 = vsyncpa [#allocation15], 0
    %94 = vsyncpa [#allocation18], 0
    %95 = vsyncpa [#allocation21], 0
    %96 = vsyncpa [#allocation24], 0
    %97 = vsyncpa [#allocation27], 0
    %98 = vsyncpa [#allocation4], 0
    %s99 = scalar_lea.sflag [#allocation4], 1
    %100 = vsyncpa %s99, 0
    %101 = vsyncpa [#allocation30], 0
    %s102 = scalar_lea.sflag [#allocation30], 1
    %103 = vsyncpa %s102, 0
    %104 = vsyncpa [#allocation33], 0
    %s105 = scalar_lea.sflag [#allocation33], 1
    %106 = vsyncpa %s105, 0
    loop: start=0, step=1, limit=4
    $region2: #{tpu_custom_call.1} parent=1 // loop_pre_header
      _
    $region3: #{tpu_custom_call.1} parent=1 // loop_header
      %s108 = sphi 0, %s112
      %p109 = scmp.ge.s32.totalorder %s108, 4
      %s118 = sphi 0, %s120
      %s121 = sphi 0, %s118
      %s122 = sphi 0, %s121
      %s138 = sphi 0, %s122
      %s142 = sphi 0, %s142
      %s144 = sphi 0, %s142
      %s145 = sphi 0, %s144
      %s159 = sphi 0, %s145
      %s163 = sphi 0, %s163
      %s165 = sphi 0, %s163
      %s166 = sphi 0, %s165
      %s180 = sphi 0, %s166
      %s184 = sphi 0, %s184
      %s186 = sphi 0, %s184
      %s187 = sphi 0, %s186
      %s201 = sphi 0, %s187
      %s205 = sphi 0, %s205
      %s207 = sphi 0, %s205
      %s208 = sphi 0, %s207
      %s222 = sphi 0, %s208
      %s226 = sphi 0, %s226
      %s228 = sphi 0, %s226
      %s229 = sphi 0, %s228
      %s243 = sphi 0, %s229
      %s247 = sphi 0, %s247
      %s249 = sphi 0, %s247
      %s250 = sphi 0, %s249
      %s264 = sphi 0, %s250
      %s268 = sphi 0, %s268
      %s270 = sphi 0, %s268
      %s271 = sphi 0, %s270
      %s285 = sphi 0, %s271
      %s289 = sphi 0, %s289
      %s291 = sphi 0, %s289
      %s292 = sphi 0, %s291
      %s306 = sphi 0, %s292
      %s310 = sphi 0, %s310
      %s312 = sphi 0, %s310
      %s313 = sphi 0, %s312
      %s327 = sphi 0, %s313
      %s331 = sphi 0, %s331
      %s333 = sphi 0, %s331
      %s334 = sphi 0, %s333
      %s348 = sphi 0, %s334
      %s352 = sphi 0, %s352
      %s354 = sphi 0, %s352
      %s355 = sphi 0, %s354
      %s369 = sphi 0, %s355
      %s373 = sphi 0, %s373
      %s375 = sphi 0, %s373
      %s376 = sphi 0, %s375
      %s390 = sphi 0, %s376
      %s394 = sphi 0, %s394
      %s396 = sphi 0, %s394
      %s397 = sphi 0, %s396
      %s411 = sphi 0, %s397
      %s415 = sphi 0, %s415
      %s417 = sphi 0, %s415
      %s418 = sphi 0, %s417
      %s432 = sphi 0, %s418
      %s436 = sphi 0, %s436
      %s438 = sphi 0, %s436
      %s439 = sphi 0, %s438
      %s453 = sphi 0, %s439
      %s457 = sphi 0, %s457
      %s459 = sphi 0, %s457
      %s460 = sphi 0, %s459
      %s474 = sphi 0, %s460
      %s478 = sphi 0, %s478
      %s480 = sphi 0, %s478
      %s481 = sphi 0, %s480
      %s495 = sphi 0, %s481
      %s499 = sphi 0, %s499
      %s501 = sphi 0, %s499
      %s502 = sphi 0, %s501
      %s516 = sphi 0, %s502
      %s520 = sphi 0, %s520
      %s522 = sphi 0, %s520
      %s523 = sphi 0, %s522
      %s537 = sphi 0, %s523
      %s541 = sphi 0, %s541
      %s543 = sphi 0, %s541
      %s544 = sphi 0, %s543
      %s558 = sphi 0, %s544
      %s562 = sphi 0, %s562
      %s564 = sphi 0, %s562
      %s565 = sphi 0, %s564
      %s579 = sphi 0, %s565
      %s583 = sphi 0, %s583
      %s585 = sphi 0, %s583
      %s586 = sphi 0, %s585
      %s600 = sphi 0, %s586
      %s604 = sphi 0, %s604
      %s606 = sphi 0, %s604
      %s607 = sphi 0, %s606
      %s621 = sphi 0, %s607
      %s625 = sphi 0, %s625
      %s627 = sphi 0, %s625
      %s628 = sphi 0, %s627
      %s642 = sphi 0, %s628
      %s646 = sphi 0, %s646
      %s648 = sphi 0, %s646
      %s649 = sphi 0, %s648
      %s663 = sphi 0, %s649
      %s667 = sphi 0, %s667
      %s669 = sphi 0, %s667
      %s670 = sphi 0, %s669
      %s684 = sphi 0, %s670
      %s688 = sphi 0, %s688
      %s690 = sphi 0, %s688
      %s691 = sphi 0, %s690
      %s705 = sphi 0, %s691
      %s709 = sphi 0, %s709
      %s711 = sphi 0, %s709
      %s712 = sphi 0, %s711
      %s726 = sphi 0, %s712
      %s730 = sphi 0, %s730
      %s732 = sphi 0, %s730
      %s733 = sphi 0, %s732
      %s747 = sphi 0, %s733
      %s751 = sphi 0, %s751
      %s753 = sphi 0, %s751
      %s754 = sphi 0, %s753
      %s768 = sphi 0, %s754
      %s772 = sphi 0, %s772
      %s774 = sphi 0, %s772
      %s775 = sphi 0, %s774
      %s789 = sphi 0, %s775
      %s793 = sphi 0, %s793
      %s795 = sphi 0, %s793
      %s796 = sphi 0, %s795
      %s810 = sphi 0, %s796
      %s816 = sphi 0, %s818
      %s819 = sphi 0, %s816
      %s820 = sphi 0, %s819
      %s836 = sphi 0, %s820
      %s842 = sphi 0, %s844
      %s845 = sphi 0, %s842
      %s846 = sphi 0, %s845
      %s862 = sphi 0, %s846
      %s868 = sphi 0, %s870
      %s871 = sphi 0, %s868
      %s872 = sphi 0, %s871
      %s888 = sphi 0, %s872
      %s894 = sphi 0, %s896
      %s897 = sphi 0, %s894
      %s898 = sphi 0, %s897
      %s914 = sphi 0, %s898
      %s920 = sphi 0, %s922
      %s923 = sphi 0, %s920
      %s924 = sphi 0, %s923
      %s940 = sphi 0, %s924
      %s946 = sphi 0, %s948
      %s949 = sphi 0, %s946
      %s950 = sphi 0, %s949
      %s966 = sphi 0, %s950
      %s972 = sphi 0, %s974
      %s975 = sphi 0, %s972
      %s976 = sphi 0, %s975
      %s992 = sphi 0, %s976
      %s998 = sphi 0, %s1000
      %s1001 = sphi 0, %s998
      %s1002 = sphi 0, %s1001
      %s1018 = sphi 0, %s1002
    $region4: #{tpu_custom_call.1} parent=1 // loop_header_branch
      %111 = sbr.rel (%p109) target = $region8
    $region5: #{tpu_custom_call.1} parent=1 // loop_body
      %s113 = ssub.s32 %s108, 1
      %s114 = ssub.s32 %s108, 2
      %s115 = sadd.s32 %s108, 1
      %s116 = ssub.s32 %s108, %s115
      %p117 = scmp.eq.s32.totalorder %s116, 0
      %s119 = sadd.s32 %s118, 1
      %s120 = scalar_select %p117, %s118, %s119
      %p123 = pneg %p117
      %p124 = scmp.eq.s32.totalorder %s108, 1
      %p125 = por %p123, %p124
      %p126 = scmp.ne.s32.totalorder %s118, %s121
      %p127 = scmp.eq.s32.totalorder %s108, 0
      %p128 = por %p126, %p127
      %p129 = scmp.ne.s32.totalorder %s118, %s121
      %p130 = scmp.eq.s32.totalorder %s113, 1
      %p131 = por %p129, %p130
      %p132 = scmp.ne.s32.totalorder %s121, %s122
      %p133 = scmp.eq.s32.totalorder %s113, 0
      %p134 = por %p132, %p133
      %p135 = scmp.ne.s32.totalorder %s121, %s122
      %p136 = scmp.eq.s32.totalorder %s114, 1
      %p137 = por %p135, %p136
      %p139 = scmp.ne.s32.totalorder %s122, %s138
      %p140 = scmp.eq.s32.totalorder %s114, 0
      %p141 = por %p139, %p140
      %s143 = sadd.s32 %s142, 1
      %p146 = scmp.eq.s32.totalorder %s108, 1
      %p147 = scmp.ne.s32.totalorder %s142, %s144
      %p148 = scmp.eq.s32.totalorder %s108, 0
      %p149 = por %p147, %p148
      %p150 = scmp.ne.s32.totalorder %s142, %s144
      %p151 = scmp.eq.s32.totalorder %s113, 1
      %p152 = por %p150, %p151
      %p153 = scmp.ne.s32.totalorder %s144, %s145
      %p154 = scmp.eq.s32.totalorder %s113, 0
      %p155 = por %p153, %p154
      %p156 = scmp.ne.s32.totalorder %s144, %s145
      %p157 = scmp.eq.s32.totalorder %s114, 1
      %p158 = por %p156, %p157
      %p160 = scmp.ne.s32.totalorder %s145, %s159
      %p161 = scmp.eq.s32.totalorder %s114, 0
      %p162 = por %p160, %p161
      %s164 = sadd.s32 %s163, 1
      %p167 = scmp.eq.s32.totalorder %s108, 1
      %p168 = scmp.ne.s32.totalorder %s163, %s165
      %p169 = scmp.eq.s32.totalorder %s108, 0
      %p170 = por %p168, %p169
      %p171 = scmp.ne.s32.totalorder %s163, %s165
      %p172 = scmp.eq.s32.totalorder %s113, 1
      %p173 = por %p171, %p172
      %p174 = scmp.ne.s32.totalorder %s165, %s166
      %p175 = scmp.eq.s32.totalorder %s113, 0
      %p176 = por %p174, %p175
      %p177 = scmp.ne.s32.totalorder %s165, %s166
      %p178 = scmp.eq.s32.totalorder %s114, 1
      %p179 = por %p177, %p178
      %p181 = scmp.ne.s32.totalorder %s166, %s180
      %p182 = scmp.eq.s32.totalorder %s114, 0
      %p183 = por %p181, %p182
      %s185 = sadd.s32 %s184, 1
      %p188 = scmp.eq.s32.totalorder %s108, 1
      %p189 = scmp.ne.s32.totalorder %s184, %s186
      %p190 = scmp.eq.s32.totalorder %s108, 0
      %p191 = por %p189, %p190
      %p192 = scmp.ne.s32.totalorder %s184, %s186
      %p193 = scmp.eq.s32.totalorder %s113, 1
      %p194 = por %p192, %p193
      %p195 = scmp.ne.s32.totalorder %s186, %s187
      %p196 = scmp.eq.s32.totalorder %s113, 0
      %p197 = por %p195, %p196
      %p198 = scmp.ne.s32.totalorder %s186, %s187
      %p199 = scmp.eq.s32.totalorder %s114, 1
      %p200 = por %p198, %p199
      %p202 = scmp.ne.s32.totalorder %s187, %s201
      %p203 = scmp.eq.s32.totalorder %s114, 0
      %p204 = por %p202, %p203
      %s206 = sadd.s32 %s205, 1
      %p209 = scmp.eq.s32.totalorder %s108, 1
      %p210 = scmp.ne.s32.totalorder %s205, %s207
      %p211 = scmp.eq.s32.totalorder %s108, 0
      %p212 = por %p210, %p211
      %p213 = scmp.ne.s32.totalorder %s205, %s207
      %p214 = scmp.eq.s32.totalorder %s113, 1
      %p215 = por %p213, %p214
      %p216 = scmp.ne.s32.totalorder %s207, %s208
      %p217 = scmp.eq.s32.totalorder %s113, 0
      %p218 = por %p216, %p217
      %p219 = scmp.ne.s32.totalorder %s207, %s208
      %p220 = scmp.eq.s32.totalorder %s114, 1
      %p221 = por %p219, %p220
      %p223 = scmp.ne.s32.totalorder %s208, %s222
      %p224 = scmp.eq.s32.totalorder %s114, 0
      %p225 = por %p223, %p224
      %s227 = sadd.s32 %s226, 1
      %p230 = scmp.eq.s32.totalorder %s108, 1
      %p231 = scmp.ne.s32.totalorder %s226, %s228
      %p232 = scmp.eq.s32.totalorder %s108, 0
      %p233 = por %p231, %p232
      %p234 = scmp.ne.s32.totalorder %s226, %s228
      %p235 = scmp.eq.s32.totalorder %s113, 1
      %p236 = por %p234, %p235
      %p237 = scmp.ne.s32.totalorder %s228, %s229
      %p238 = scmp.eq.s32.totalorder %s113, 0
      %p239 = por %p237, %p238
      %p240 = scmp.ne.s32.totalorder %s228, %s229
      %p241 = scmp.eq.s32.totalorder %s114, 1
      %p242 = por %p240, %p241
      %p244 = scmp.ne.s32.totalorder %s229, %s243
      %p245 = scmp.eq.s32.totalorder %s114, 0
      %p246 = por %p244, %p245
      %s248 = sadd.s32 %s247, 1
      %p251 = scmp.eq.s32.totalorder %s108, 1
      %p252 = scmp.ne.s32.totalorder %s247, %s249
      %p253 = scmp.eq.s32.totalorder %s108, 0
      %p254 = por %p252, %p253
      %p255 = scmp.ne.s32.totalorder %s247, %s249
      %p256 = scmp.eq.s32.totalorder %s113, 1
      %p257 = por %p255, %p256
      %p258 = scmp.ne.s32.totalorder %s249, %s250
      %p259 = scmp.eq.s32.totalorder %s113, 0
      %p260 = por %p258, %p259
      %p261 = scmp.ne.s32.totalorder %s249, %s250
      %p262 = scmp.eq.s32.totalorder %s114, 1
      %p263 = por %p261, %p262
      %p265 = scmp.ne.s32.totalorder %s250, %s264
      %p266 = scmp.eq.s32.totalorder %s114, 0
      %p267 = por %p265, %p266
      %s269 = sadd.s32 %s268, 1
      %p272 = scmp.eq.s32.totalorder %s108, 1
      %p273 = scmp.ne.s32.totalorder %s268, %s270
      %p274 = scmp.eq.s32.totalorder %s108, 0
      %p275 = por %p273, %p274
      %p276 = scmp.ne.s32.totalorder %s268, %s270
      %p277 = scmp.eq.s32.totalorder %s113, 1
      %p278 = por %p276, %p277
      %p279 = scmp.ne.s32.totalorder %s270, %s271
      %p280 = scmp.eq.s32.totalorder %s113, 0
      %p281 = por %p279, %p280
      %p282 = scmp.ne.s32.totalorder %s270, %s271
      %p283 = scmp.eq.s32.totalorder %s114, 1
      %p284 = por %p282, %p283
      %p286 = scmp.ne.s32.totalorder %s271, %s285
      %p287 = scmp.eq.s32.totalorder %s114, 0
      %p288 = por %p286, %p287
      %s290 = sadd.s32 %s289, 1
      %p293 = scmp.eq.s32.totalorder %s108, 1
      %p294 = scmp.ne.s32.totalorder %s289, %s291
      %p295 = scmp.eq.s32.totalorder %s108, 0
      %p296 = por %p294, %p295
      %p297 = scmp.ne.s32.totalorder %s289, %s291
      %p298 = scmp.eq.s32.totalorder %s113, 1
      %p299 = por %p297, %p298
      %p300 = scmp.ne.s32.totalorder %s291, %s292
      %p301 = scmp.eq.s32.totalorder %s113, 0
      %p302 = por %p300, %p301
      %p303 = scmp.ne.s32.totalorder %s291, %s292
      %p304 = scmp.eq.s32.totalorder %s114, 1
      %p305 = por %p303, %p304
      %p307 = scmp.ne.s32.totalorder %s292, %s306
      %p308 = scmp.eq.s32.totalorder %s114, 0
      %p309 = por %p307, %p308
      %s311 = sadd.s32 %s310, 1
      %p314 = scmp.eq.s32.totalorder %s108, 1
      %p315 = scmp.ne.s32.totalorder %s310, %s312
      %p316 = scmp.eq.s32.totalorder %s108, 0
      %p317 = por %p315, %p316
      %p318 = scmp.ne.s32.totalorder %s310, %s312
      %p319 = scmp.eq.s32.totalorder %s113, 1
      %p320 = por %p318, %p319
      %p321 = scmp.ne.s32.totalorder %s312, %s313
      %p322 = scmp.eq.s32.totalorder %s113, 0
      %p323 = por %p321, %p322
      %p324 = scmp.ne.s32.totalorder %s312, %s313
      %p325 = scmp.eq.s32.totalorder %s114, 1
      %p326 = por %p324, %p325
      %p328 = scmp.ne.s32.totalorder %s313, %s327
      %p329 = scmp.eq.s32.totalorder %s114, 0
      %p330 = por %p328, %p329
      %s332 = sadd.s32 %s331, 1
      %p335 = scmp.eq.s32.totalorder %s108, 1
      %p336 = scmp.ne.s32.totalorder %s331, %s333
      %p337 = scmp.eq.s32.totalorder %s108, 0
      %p338 = por %p336, %p337
      %p339 = scmp.ne.s32.totalorder %s331, %s333
      %p340 = scmp.eq.s32.totalorder %s113, 1
      %p341 = por %p339, %p340
      %p342 = scmp.ne.s32.totalorder %s333, %s334
      %p343 = scmp.eq.s32.totalorder %s113, 0
      %p344 = por %p342, %p343
      %p345 = scmp.ne.s32.totalorder %s333, %s334
      %p346 = scmp.eq.s32.totalorder %s114, 1
      %p347 = por %p345, %p346
      %p349 = scmp.ne.s32.totalorder %s334, %s348
      %p350 = scmp.eq.s32.totalorder %s114, 0
      %p351 = por %p349, %p350
      %s353 = sadd.s32 %s352, 1
      %p356 = scmp.eq.s32.totalorder %s108, 1
      %p357 = scmp.ne.s32.totalorder %s352, %s354
      %p358 = scmp.eq.s32.totalorder %s108, 0
      %p359 = por %p357, %p358
      %p360 = scmp.ne.s32.totalorder %s352, %s354
      %p361 = scmp.eq.s32.totalorder %s113, 1
      %p362 = por %p360, %p361
      %p363 = scmp.ne.s32.totalorder %s354, %s355
      %p364 = scmp.eq.s32.totalorder %s113, 0
      %p365 = por %p363, %p364
      %p366 = scmp.ne.s32.totalorder %s354, %s355
      %p367 = scmp.eq.s32.totalorder %s114, 1
      %p368 = por %p366, %p367
      %p370 = scmp.ne.s32.totalorder %s355, %s369
      %p371 = scmp.eq.s32.totalorder %s114, 0
      %p372 = por %p370, %p371
      %s374 = sadd.s32 %s373, 1
      %p377 = scmp.eq.s32.totalorder %s108, 1
      %p378 = scmp.ne.s32.totalorder %s373, %s375
      %p379 = scmp.eq.s32.totalorder %s108, 0
      %p380 = por %p378, %p379
      %p381 = scmp.ne.s32.totalorder %s373, %s375
      %p382 = scmp.eq.s32.totalorder %s113, 1
      %p383 = por %p381, %p382
      %p384 = scmp.ne.s32.totalorder %s375, %s376
      %p385 = scmp.eq.s32.totalorder %s113, 0
      %p386 = por %p384, %p385
      %p387 = scmp.ne.s32.totalorder %s375, %s376
      %p388 = scmp.eq.s32.totalorder %s114, 1
      %p389 = por %p387, %p388
      %p391 = scmp.ne.s32.totalorder %s376, %s390
      %p392 = scmp.eq.s32.totalorder %s114, 0
      %p393 = por %p391, %p392
      %s395 = sadd.s32 %s394, 1
      %p398 = scmp.eq.s32.totalorder %s108, 1
      %p399 = scmp.ne.s32.totalorder %s394, %s396
      %p400 = scmp.eq.s32.totalorder %s108, 0
      %p401 = por %p399, %p400
      %p402 = scmp.ne.s32.totalorder %s394, %s396
      %p403 = scmp.eq.s32.totalorder %s113, 1
      %p404 = por %p402, %p403
      %p405 = scmp.ne.s32.totalorder %s396, %s397
      %p406 = scmp.eq.s32.totalorder %s113, 0
      %p407 = por %p405, %p406
      %p408 = scmp.ne.s32.totalorder %s396, %s397
      %p409 = scmp.eq.s32.totalorder %s114, 1
      %p410 = por %p408, %p409
      %p412 = scmp.ne.s32.totalorder %s397, %s411
      %p413 = scmp.eq.s32.totalorder %s114, 0
      %p414 = por %p412, %p413
      %s416 = sadd.s32 %s415, 1
      %p419 = scmp.eq.s32.totalorder %s108, 1
      %p420 = scmp.ne.s32.totalorder %s415, %s417
      %p421 = scmp.eq.s32.totalorder %s108, 0
      %p422 = por %p420, %p421
      %p423 = scmp.ne.s32.totalorder %s415, %s417
      %p424 = scmp.eq.s32.totalorder %s113, 1
      %p425 = por %p423, %p424
      %p426 = scmp.ne.s32.totalorder %s417, %s418
      %p427 = scmp.eq.s32.totalorder %s113, 0
      %p428 = por %p426, %p427
      %p429 = scmp.ne.s32.totalorder %s417, %s418
      %p430 = scmp.eq.s32.totalorder %s114, 1
      %p431 = por %p429, %p430
      %p433 = scmp.ne.s32.totalorder %s418, %s432
      %p434 = scmp.eq.s32.totalorder %s114, 0
      %p435 = por %p433, %p434
      %s437 = sadd.s32 %s436, 1
      %p440 = scmp.eq.s32.totalorder %s108, 1
      %p441 = scmp.ne.s32.totalorder %s436, %s438
      %p442 = scmp.eq.s32.totalorder %s108, 0
      %p443 = por %p441, %p442
      %p444 = scmp.ne.s32.totalorder %s436, %s438
      %p445 = scmp.eq.s32.totalorder %s113, 1
      %p446 = por %p444, %p445
      %p447 = scmp.ne.s32.totalorder %s438, %s439
      %p448 = scmp.eq.s32.totalorder %s113, 0
      %p449 = por %p447, %p448
      %p450 = scmp.ne.s32.totalorder %s438, %s439
      %p451 = scmp.eq.s32.totalorder %s114, 1
      %p452 = por %p450, %p451
      %p454 = scmp.ne.s32.totalorder %s439, %s453
      %p455 = scmp.eq.s32.totalorder %s114, 0
      %p456 = por %p454, %p455
      %s458 = sadd.s32 %s457, 1
      %p461 = scmp.eq.s32.totalorder %s108, 1
      %p462 = scmp.ne.s32.totalorder %s457, %s459
      %p463 = scmp.eq.s32.totalorder %s108, 0
      %p464 = por %p462, %p463
      %p465 = scmp.ne.s32.totalorder %s457, %s459
      %p466 = scmp.eq.s32.totalorder %s113, 1
      %p467 = por %p465, %p466
      %p468 = scmp.ne.s32.totalorder %s459, %s460
      %p469 = scmp.eq.s32.totalorder %s113, 0
      %p470 = por %p468, %p469
      %p471 = scmp.ne.s32.totalorder %s459, %s460
      %p472 = scmp.eq.s32.totalorder %s114, 1
      %p473 = por %p471, %p472
      %p475 = scmp.ne.s32.totalorder %s460, %s474
      %p476 = scmp.eq.s32.totalorder %s114, 0
      %p477 = por %p475, %p476
      %s479 = sadd.s32 %s478, 1
      %p482 = scmp.eq.s32.totalorder %s108, 1
      %p483 = scmp.ne.s32.totalorder %s478, %s480
      %p484 = scmp.eq.s32.totalorder %s108, 0
      %p485 = por %p483, %p484
      %p486 = scmp.ne.s32.totalorder %s478, %s480
      %p487 = scmp.eq.s32.totalorder %s113, 1
      %p488 = por %p486, %p487
      %p489 = scmp.ne.s32.totalorder %s480, %s481
      %p490 = scmp.eq.s32.totalorder %s113, 0
      %p491 = por %p489, %p490
      %p492 = scmp.ne.s32.totalorder %s480, %s481
      %p493 = scmp.eq.s32.totalorder %s114, 1
      %p494 = por %p492, %p493
      %p496 = scmp.ne.s32.totalorder %s481, %s495
      %p497 = scmp.eq.s32.totalorder %s114, 0
      %p498 = por %p496, %p497
      %s500 = sadd.s32 %s499, 1
      %p503 = scmp.eq.s32.totalorder %s108, 1
      %p504 = scmp.ne.s32.totalorder %s499, %s501
      %p505 = scmp.eq.s32.totalorder %s108, 0
      %p506 = por %p504, %p505
      %p507 = scmp.ne.s32.totalorder %s499, %s501
      %p508 = scmp.eq.s32.totalorder %s113, 1
      %p509 = por %p507, %p508
      %p510 = scmp.ne.s32.totalorder %s501, %s502
      %p511 = scmp.eq.s32.totalorder %s113, 0
      %p512 = por %p510, %p511
      %p513 = scmp.ne.s32.totalorder %s501, %s502
      %p514 = scmp.eq.s32.totalorder %s114, 1
      %p515 = por %p513, %p514
      %p517 = scmp.ne.s32.totalorder %s502, %s516
      %p518 = scmp.eq.s32.totalorder %s114, 0
      %p519 = por %p517, %p518
      %s521 = sadd.s32 %s520, 1
      %p524 = scmp.eq.s32.totalorder %s108, 1
      %p525 = scmp.ne.s32.totalorder %s520, %s522
      %p526 = scmp.eq.s32.totalorder %s108, 0
      %p527 = por %p525, %p526
      %p528 = scmp.ne.s32.totalorder %s520, %s522
      %p529 = scmp.eq.s32.totalorder %s113, 1
      %p530 = por %p528, %p529
      %p531 = scmp.ne.s32.totalorder %s522, %s523
      %p532 = scmp.eq.s32.totalorder %s113, 0
      %p533 = por %p531, %p532
      %p534 = scmp.ne.s32.totalorder %s522, %s523
      %p535 = scmp.eq.s32.totalorder %s114, 1
      %p536 = por %p534, %p535
      %p538 = scmp.ne.s32.totalorder %s523, %s537
      %p539 = scmp.eq.s32.totalorder %s114, 0
      %p540 = por %p538, %p539
      %s542 = sadd.s32 %s541, 1
      %p545 = scmp.eq.s32.totalorder %s108, 1
      %p546 = scmp.ne.s32.totalorder %s541, %s543
      %p547 = scmp.eq.s32.totalorder %s108, 0
      %p548 = por %p546, %p547
      %p549 = scmp.ne.s32.totalorder %s541, %s543
      %p550 = scmp.eq.s32.totalorder %s113, 1
      %p551 = por %p549, %p550
      %p552 = scmp.ne.s32.totalorder %s543, %s544
      %p553 = scmp.eq.s32.totalorder %s113, 0
      %p554 = por %p552, %p553
      %p555 = scmp.ne.s32.totalorder %s543, %s544
      %p556 = scmp.eq.s32.totalorder %s114, 1
      %p557 = por %p555, %p556
      %p559 = scmp.ne.s32.totalorder %s544, %s558
      %p560 = scmp.eq.s32.totalorder %s114, 0
      %p561 = por %p559, %p560
      %s563 = sadd.s32 %s562, 1
      %p566 = scmp.eq.s32.totalorder %s108, 1
      %p567 = scmp.ne.s32.totalorder %s562, %s564
      %p568 = scmp.eq.s32.totalorder %s108, 0
      %p569 = por %p567, %p568
      %p570 = scmp.ne.s32.totalorder %s562, %s564
      %p571 = scmp.eq.s32.totalorder %s113, 1
      %p572 = por %p570, %p571
      %p573 = scmp.ne.s32.totalorder %s564, %s565
      %p574 = scmp.eq.s32.totalorder %s113, 0
      %p575 = por %p573, %p574
      %p576 = scmp.ne.s32.totalorder %s564, %s565
      %p577 = scmp.eq.s32.totalorder %s114, 1
      %p578 = por %p576, %p577
      %p580 = scmp.ne.s32.totalorder %s565, %s579
      %p581 = scmp.eq.s32.totalorder %s114, 0
      %p582 = por %p580, %p581
      %s584 = sadd.s32 %s583, 1
      %p587 = scmp.eq.s32.totalorder %s108, 1
      %p588 = scmp.ne.s32.totalorder %s583, %s585
      %p589 = scmp.eq.s32.totalorder %s108, 0
      %p590 = por %p588, %p589
      %p591 = scmp.ne.s32.totalorder %s583, %s585
      %p592 = scmp.eq.s32.totalorder %s113, 1
      %p593 = por %p591, %p592
      %p594 = scmp.ne.s32.totalorder %s585, %s586
      %p595 = scmp.eq.s32.totalorder %s113, 0
      %p596 = por %p594, %p595
      %p597 = scmp.ne.s32.totalorder %s585, %s586
      %p598 = scmp.eq.s32.totalorder %s114, 1
      %p599 = por %p597, %p598
      %p601 = scmp.ne.s32.totalorder %s586, %s600
      %p602 = scmp.eq.s32.totalorder %s114, 0
      %p603 = por %p601, %p602
      %s605 = sadd.s32 %s604, 1
      %p608 = scmp.eq.s32.totalorder %s108, 1
      %p609 = scmp.ne.s32.totalorder %s604, %s606
      %p610 = scmp.eq.s32.totalorder %s108, 0
      %p611 = por %p609, %p610
      %p612 = scmp.ne.s32.totalorder %s604, %s606
      %p613 = scmp.eq.s32.totalorder %s113, 1
      %p614 = por %p612, %p613
      %p615 = scmp.ne.s32.totalorder %s606, %s607
      %p616 = scmp.eq.s32.totalorder %s113, 0
      %p617 = por %p615, %p616
      %p618 = scmp.ne.s32.totalorder %s606, %s607
      %p619 = scmp.eq.s32.totalorder %s114, 1
      %p620 = por %p618, %p619
      %p622 = scmp.ne.s32.totalorder %s607, %s621
      %p623 = scmp.eq.s32.totalorder %s114, 0
      %p624 = por %p622, %p623
      %s626 = sadd.s32 %s625, 1
      %p629 = scmp.eq.s32.totalorder %s108, 1
      %p630 = scmp.ne.s32.totalorder %s625, %s627
      %p631 = scmp.eq.s32.totalorder %s108, 0
      %p632 = por %p630, %p631
      %p633 = scmp.ne.s32.totalorder %s625, %s627
      %p634 = scmp.eq.s32.totalorder %s113, 1
      %p635 = por %p633, %p634
      %p636 = scmp.ne.s32.totalorder %s627, %s628
      %p637 = scmp.eq.s32.totalorder %s113, 0
      %p638 = por %p636, %p637
      %p639 = scmp.ne.s32.totalorder %s627, %s628
      %p640 = scmp.eq.s32.totalorder %s114, 1
      %p641 = por %p639, %p640
      %p643 = scmp.ne.s32.totalorder %s628, %s642
      %p644 = scmp.eq.s32.totalorder %s114, 0
      %p645 = por %p643, %p644
      %s647 = sadd.s32 %s646, 1
      %p650 = scmp.eq.s32.totalorder %s108, 1
      %p651 = scmp.ne.s32.totalorder %s646, %s648
      %p652 = scmp.eq.s32.totalorder %s108, 0
      %p653 = por %p651, %p652
      %p654 = scmp.ne.s32.totalorder %s646, %s648
      %p655 = scmp.eq.s32.totalorder %s113, 1
      %p656 = por %p654, %p655
      %p657 = scmp.ne.s32.totalorder %s648, %s649
      %p658 = scmp.eq.s32.totalorder %s113, 0
      %p659 = por %p657, %p658
      %p660 = scmp.ne.s32.totalorder %s648, %s649
      %p661 = scmp.eq.s32.totalorder %s114, 1
      %p662 = por %p660, %p661
      %p664 = scmp.ne.s32.totalorder %s649, %s663
      %p665 = scmp.eq.s32.totalorder %s114, 0
      %p666 = por %p664, %p665
      %s668 = sadd.s32 %s667, 1
      %p671 = scmp.eq.s32.totalorder %s108, 1
      %p672 = scmp.ne.s32.totalorder %s667, %s669
      %p673 = scmp.eq.s32.totalorder %s108, 0
      %p674 = por %p672, %p673
      %p675 = scmp.ne.s32.totalorder %s667, %s669
      %p676 = scmp.eq.s32.totalorder %s113, 1
      %p677 = por %p675, %p676
      %p678 = scmp.ne.s32.totalorder %s669, %s670
      %p679 = scmp.eq.s32.totalorder %s113, 0
      %p680 = por %p678, %p679
      %p681 = scmp.ne.s32.totalorder %s669, %s670
      %p682 = scmp.eq.s32.totalorder %s114, 1
      %p683 = por %p681, %p682
      %p685 = scmp.ne.s32.totalorder %s670, %s684
      %p686 = scmp.eq.s32.totalorder %s114, 0
      %p687 = por %p685, %p686
      %s689 = sadd.s32 %s688, 1
      %p692 = scmp.eq.s32.totalorder %s108, 1
      %p693 = scmp.ne.s32.totalorder %s688, %s690
      %p694 = scmp.eq.s32.totalorder %s108, 0
      %p695 = por %p693, %p694
      %p696 = scmp.ne.s32.totalorder %s688, %s690
      %p697 = scmp.eq.s32.totalorder %s113, 1
      %p698 = por %p696, %p697
      %p699 = scmp.ne.s32.totalorder %s690, %s691
      %p700 = scmp.eq.s32.totalorder %s113, 0
      %p701 = por %p699, %p700
      %p702 = scmp.ne.s32.totalorder %s690, %s691
      %p703 = scmp.eq.s32.totalorder %s114, 1
      %p704 = por %p702, %p703
      %p706 = scmp.ne.s32.totalorder %s691, %s705
      %p707 = scmp.eq.s32.totalorder %s114, 0
      %p708 = por %p706, %p707
      %s710 = sadd.s32 %s709, 1
      %p713 = scmp.eq.s32.totalorder %s108, 1
      %p714 = scmp.ne.s32.totalorder %s709, %s711
      %p715 = scmp.eq.s32.totalorder %s108, 0
      %p716 = por %p714, %p715
      %p717 = scmp.ne.s32.totalorder %s709, %s711
      %p718 = scmp.eq.s32.totalorder %s113, 1
      %p719 = por %p717, %p718
      %p720 = scmp.ne.s32.totalorder %s711, %s712
      %p721 = scmp.eq.s32.totalorder %s113, 0
      %p722 = por %p720, %p721
      %p723 = scmp.ne.s32.totalorder %s711, %s712
      %p724 = scmp.eq.s32.totalorder %s114, 1
      %p725 = por %p723, %p724
      %p727 = scmp.ne.s32.totalorder %s712, %s726
      %p728 = scmp.eq.s32.totalorder %s114, 0
      %p729 = por %p727, %p728
      %s731 = sadd.s32 %s730, 1
      %p734 = scmp.eq.s32.totalorder %s108, 1
      %p735 = scmp.ne.s32.totalorder %s730, %s732
      %p736 = scmp.eq.s32.totalorder %s108, 0
      %p737 = por %p735, %p736
      %p738 = scmp.ne.s32.totalorder %s730, %s732
      %p739 = scmp.eq.s32.totalorder %s113, 1
      %p740 = por %p738, %p739
      %p741 = scmp.ne.s32.totalorder %s732, %s733
      %p742 = scmp.eq.s32.totalorder %s113, 0
      %p743 = por %p741, %p742
      %p744 = scmp.ne.s32.totalorder %s732, %s733
      %p745 = scmp.eq.s32.totalorder %s114, 1
      %p746 = por %p744, %p745
      %p748 = scmp.ne.s32.totalorder %s733, %s747
      %p749 = scmp.eq.s32.totalorder %s114, 0
      %p750 = por %p748, %p749
      %s752 = sadd.s32 %s751, 1
      %p755 = scmp.eq.s32.totalorder %s108, 1
      %p756 = scmp.ne.s32.totalorder %s751, %s753
      %p757 = scmp.eq.s32.totalorder %s108, 0
      %p758 = por %p756, %p757
      %p759 = scmp.ne.s32.totalorder %s751, %s753
      %p760 = scmp.eq.s32.totalorder %s113, 1
      %p761 = por %p759, %p760
      %p762 = scmp.ne.s32.totalorder %s753, %s754
      %p763 = scmp.eq.s32.totalorder %s113, 0
      %p764 = por %p762, %p763
      %p765 = scmp.ne.s32.totalorder %s753, %s754
      %p766 = scmp.eq.s32.totalorder %s114, 1
      %p767 = por %p765, %p766
      %p769 = scmp.ne.s32.totalorder %s754, %s768
      %p770 = scmp.eq.s32.totalorder %s114, 0
      %p771 = por %p769, %p770
      %s773 = sadd.s32 %s772, 1
      %p776 = scmp.eq.s32.totalorder %s108, 1
      %p777 = scmp.ne.s32.totalorder %s772, %s774
      %p778 = scmp.eq.s32.totalorder %s108, 0
      %p779 = por %p777, %p778
      %p780 = scmp.ne.s32.totalorder %s772, %s774
      %p781 = scmp.eq.s32.totalorder %s113, 1
      %p782 = por %p780, %p781
      %p783 = scmp.ne.s32.totalorder %s774, %s775
      %p784 = scmp.eq.s32.totalorder %s113, 0
      %p785 = por %p783, %p784
      %p786 = scmp.ne.s32.totalorder %s774, %s775
      %p787 = scmp.eq.s32.totalorder %s114, 1
      %p788 = por %p786, %p787
      %p790 = scmp.ne.s32.totalorder %s775, %s789
      %p791 = scmp.eq.s32.totalorder %s114, 0
      %p792 = por %p790, %p791
      %s794 = sadd.s32 %s793, 1
      %p797 = scmp.eq.s32.totalorder %s108, 1
      %p798 = scmp.ne.s32.totalorder %s793, %s795
      %p799 = scmp.eq.s32.totalorder %s108, 0
      %p800 = por %p798, %p799
      %p801 = scmp.ne.s32.totalorder %s793, %s795
      %p802 = scmp.eq.s32.totalorder %s113, 1
      %p803 = por %p801, %p802
      %p804 = scmp.ne.s32.totalorder %s795, %s796
      %p805 = scmp.eq.s32.totalorder %s113, 0
      %p806 = por %p804, %p805
      %p807 = scmp.ne.s32.totalorder %s795, %s796
      %p808 = scmp.eq.s32.totalorder %s114, 1
      %p809 = por %p807, %p808
      %p811 = scmp.ne.s32.totalorder %s796, %s810
      %p812 = scmp.eq.s32.totalorder %s114, 0
      %p813 = por %p811, %p812
      %s814 = ssub.s32 %s108, %s115
      %p815 = scmp.eq.s32.totalorder %s814, 0
      %s817 = sadd.s32 %s816, 1
      %s818 = scalar_select %p815, %s816, %s817
      %p821 = pneg %p815
      %p822 = scmp.eq.s32.totalorder %s108, 1
      %p823 = por %p821, %p822
      %p824 = scmp.ne.s32.totalorder %s816, %s819
      %p825 = scmp.eq.s32.totalorder %s108, 0
      %p826 = por %p824, %p825
      %p827 = scmp.ne.s32.totalorder %s816, %s819
      %p828 = scmp.eq.s32.totalorder %s113, 1
      %p829 = por %p827, %p828
      %p830 = scmp.ne.s32.totalorder %s819, %s820
      %p831 = scmp.eq.s32.totalorder %s113, 0
      %p832 = por %p830, %p831
      %p833 = scmp.ne.s32.totalorder %s819, %s820
      %p834 = scmp.eq.s32.totalorder %s114, 1
      %p835 = por %p833, %p834
      %p837 = scmp.ne.s32.totalorder %s820, %s836
      %p838 = scmp.eq.s32.totalorder %s114, 0
      %p839 = por %p837, %p838
      %s840 = ssub.s32 %s108, %s115
      %p841 = scmp.eq.s32.totalorder %s840, 0
      %s843 = sadd.s32 %s842, 1
      %s844 = scalar_select %p841, %s842, %s843
      %p847 = pneg %p841
      %p848 = scmp.eq.s32.totalorder %s108, 1
      %p849 = por %p847, %p848
      %p850 = scmp.ne.s32.totalorder %s842, %s845
      %p851 = scmp.eq.s32.totalorder %s108, 0
      %p852 = por %p850, %p851
      %p853 = scmp.ne.s32.totalorder %s842, %s845
      %p854 = scmp.eq.s32.totalorder %s113, 1
      %p855 = por %p853, %p854
      %p856 = scmp.ne.s32.totalorder %s845, %s846
      %p857 = scmp.eq.s32.totalorder %s113, 0
      %p858 = por %p856, %p857
      %p859 = scmp.ne.s32.totalorder %s845, %s846
      %p860 = scmp.eq.s32.totalorder %s114, 1
      %p861 = por %p859, %p860
      %p863 = scmp.ne.s32.totalorder %s846, %s862
      %p864 = scmp.eq.s32.totalorder %s114, 0
      %p865 = por %p863, %p864
      %s866 = ssub.s32 %s108, %s115
      %p867 = scmp.eq.s32.totalorder %s866, 0
      %s869 = sadd.s32 %s868, 1
      %s870 = scalar_select %p867, %s868, %s869
      %p873 = pneg %p867
      %p874 = scmp.eq.s32.totalorder %s108, 1
      %p875 = por %p873, %p874
      %p876 = scmp.ne.s32.totalorder %s868, %s871
      %p877 = scmp.eq.s32.totalorder %s108, 0
      %p878 = por %p876, %p877
      %p879 = scmp.ne.s32.totalorder %s868, %s871
      %p880 = scmp.eq.s32.totalorder %s113, 1
      %p881 = por %p879, %p880
      %p882 = scmp.ne.s32.totalorder %s871, %s872
      %p883 = scmp.eq.s32.totalorder %s113, 0
      %p884 = por %p882, %p883
      %p885 = scmp.ne.s32.totalorder %s871, %s872
      %p886 = scmp.eq.s32.totalorder %s114, 1
      %p887 = por %p885, %p886
      %p889 = scmp.ne.s32.totalorder %s872, %s888
      %p890 = scmp.eq.s32.totalorder %s114, 0
      %p891 = por %p889, %p890
      %s892 = ssub.s32 %s108, %s115
      %p893 = scmp.eq.s32.totalorder %s892, 0
      %s895 = sadd.s32 %s894, 1
      %s896 = scalar_select %p893, %s894, %s895
      %p899 = pneg %p893
      %p900 = scmp.eq.s32.totalorder %s108, 1
      %p901 = por %p899, %p900
      %p902 = scmp.ne.s32.totalorder %s894, %s897
      %p903 = scmp.eq.s32.totalorder %s108, 0
      %p904 = por %p902, %p903
      %p905 = scmp.ne.s32.totalorder %s894, %s897
      %p906 = scmp.eq.s32.totalorder %s113, 1
      %p907 = por %p905, %p906
      %p908 = scmp.ne.s32.totalorder %s897, %s898
      %p909 = scmp.eq.s32.totalorder %s113, 0
      %p910 = por %p908, %p909
      %p911 = scmp.ne.s32.totalorder %s897, %s898
      %p912 = scmp.eq.s32.totalorder %s114, 1
      %p913 = por %p911, %p912
      %p915 = scmp.ne.s32.totalorder %s898, %s914
      %p916 = scmp.eq.s32.totalorder %s114, 0
      %p917 = por %p915, %p916
      %s918 = ssub.s32 %s108, %s115
      %p919 = scmp.eq.s32.totalorder %s918, 0
      %s921 = sadd.s32 %s920, 1
      %s922 = scalar_select %p919, %s920, %s921
      %p925 = pneg %p919
      %p926 = scmp.eq.s32.totalorder %s108, 1
      %p927 = por %p925, %p926
      %p928 = scmp.ne.s32.totalorder %s920, %s923
      %p929 = scmp.eq.s32.totalorder %s108, 0
      %p930 = por %p928, %p929
      %p931 = scmp.ne.s32.totalorder %s920, %s923
      %p932 = scmp.eq.s32.totalorder %s113, 1
      %p933 = por %p931, %p932
      %p934 = scmp.ne.s32.totalorder %s923, %s924
      %p935 = scmp.eq.s32.totalorder %s113, 0
      %p936 = por %p934, %p935
      %p937 = scmp.ne.s32.totalorder %s923, %s924
      %p938 = scmp.eq.s32.totalorder %s114, 1
      %p939 = por %p937, %p938
      %p941 = scmp.ne.s32.totalorder %s924, %s940
      %p942 = scmp.eq.s32.totalorder %s114, 0
      %p943 = por %p941, %p942
      %s944 = ssub.s32 %s108, %s115
      %p945 = scmp.eq.s32.totalorder %s944, 0
      %s947 = sadd.s32 %s946, 1
      %s948 = scalar_select %p945, %s946, %s947
      %p951 = pneg %p945
      %p952 = scmp.eq.s32.totalorder %s108, 1
      %p953 = por %p951, %p952
      %p954 = scmp.ne.s32.totalorder %s946, %s949
      %p955 = scmp.eq.s32.totalorder %s108, 0
      %p956 = por %p954, %p955
      %p957 = scmp.ne.s32.totalorder %s946, %s949
      %p958 = scmp.eq.s32.totalorder %s113, 1
      %p959 = por %p957, %p958
      %p960 = scmp.ne.s32.totalorder %s949, %s950
      %p961 = scmp.eq.s32.totalorder %s113, 0
      %p962 = por %p960, %p961
      %p963 = scmp.ne.s32.totalorder %s949, %s950
      %p964 = scmp.eq.s32.totalorder %s114, 1
      %p965 = por %p963, %p964
      %p967 = scmp.ne.s32.totalorder %s950, %s966
      %p968 = scmp.eq.s32.totalorder %s114, 0
      %p969 = por %p967, %p968
      %s970 = ssub.s32 %s108, %s115
      %p971 = scmp.eq.s32.totalorder %s970, 0
      %s973 = sadd.s32 %s972, 1
      %s974 = scalar_select %p971, %s972, %s973
      %p977 = pneg %p971
      %p978 = scmp.eq.s32.totalorder %s108, 1
      %p979 = por %p977, %p978
      %p980 = scmp.ne.s32.totalorder %s972, %s975
      %p981 = scmp.eq.s32.totalorder %s108, 0
      %p982 = por %p980, %p981
      %p983 = scmp.ne.s32.totalorder %s972, %s975
      %p984 = scmp.eq.s32.totalorder %s113, 1
      %p985 = por %p983, %p984
      %p986 = scmp.ne.s32.totalorder %s975, %s976
      %p987 = scmp.eq.s32.totalorder %s113, 0
      %p988 = por %p986, %p987
      %p989 = scmp.ne.s32.totalorder %s975, %s976
      %p990 = scmp.eq.s32.totalorder %s114, 1
      %p991 = por %p989, %p990
      %p993 = scmp.ne.s32.totalorder %s976, %s992
      %p994 = scmp.eq.s32.totalorder %s114, 0
      %p995 = por %p993, %p994
      %s996 = ssub.s32 %s108, %s115
      %p997 = scmp.eq.s32.totalorder %s996, 0
      %s999 = sadd.s32 %s998, 1
      %s1000 = scalar_select %p997, %s998, %s999
      %p1003 = pneg %p997
      %p1004 = scmp.eq.s32.totalorder %s108, 1
      %p1005 = por %p1003, %p1004
      %p1006 = scmp.ne.s32.totalorder %s998, %s1001
      %p1007 = scmp.eq.s32.totalorder %s108, 0
      %p1008 = por %p1006, %p1007
      %p1009 = scmp.ne.s32.totalorder %s998, %s1001
      %p1010 = scmp.eq.s32.totalorder %s113, 1
      %p1011 = por %p1009, %p1010
      %p1012 = scmp.ne.s32.totalorder %s1001, %s1002
      %p1013 = scmp.eq.s32.totalorder %s113, 0
      %p1014 = por %p1012, %p1013
      %p1015 = scmp.ne.s32.totalorder %s1001, %s1002
      %p1016 = scmp.eq.s32.totalorder %s114, 1
      %p1017 = por %p1015, %p1016
      %p1019 = scmp.ne.s32.totalorder %s1002, %s1018
      %p1020 = scmp.eq.s32.totalorder %s114, 0
      %p1021 = por %p1019, %p1020
      %p1022 = scmp.le.s32.totalorder 1, %s108
      %p1023 = scmp.lt.s32.totalorder %s108, 3
      %p1024 = pnand %p1022, %p1023
      %p1025 = pneg %p1024
      // Predicated region
      $region9: #{tpu_custom_call.1} parent=5 // pred_check
        _
      $region10: #{tpu_custom_call.1} parent=5 // pred_check_branch
        %1027 = sbr.rel (%p1024) target = $region12
      $region11: #{tpu_custom_call.1} parent=5 // pred_region
        %s1028 = ssub.s32 %s108, 1
        // Predicated region
        $region13: #{tpu_custom_call.1} parent=11 // pred_check
          %p1029 = pneg %p155
        $region14: #{tpu_custom_call.1} parent=11 // pred_check_branch
          %1031 = sbr.rel (%p1029) target = $region16
        $region15: #{tpu_custom_call.1} parent=11 // pred_region
          %s1033 = ssub.s32 1024, 1024
          %1034 = vsyncadd [#allocation6], %s1033
          %s1035 = sshll.u32 [#allocation5], 4
          %s1036 = int_to_ptr.vmem [resolvable:$true] %s1035
          %1041 = dma.hbm_to_vmem [thread:$0]  %s3, 1024, %s1036, [#allocation6], 64, 64, 4
        $region16: #{tpu_custom_call.1} parent=11 // pred_fallthru
          _
        // Predicated region
        $region17: #{tpu_custom_call.1} parent=11 // pred_check
          %p1042 = pneg %p176
        $region18: #{tpu_custom_call.1} parent=11 // pred_check_branch
          %1044 = sbr.rel (%p1042) target = $region20
        $region19: #{tpu_custom_call.1} parent=11 // pred_region
          %s1046 = ssub.s32 16, 16
          %1047 = vsyncadd [#allocation6], %s1046
          %s1049 = sshll.u32 [#allocation7], 4
          %s1050 = int_to_ptr.vmem [resolvable:$true] %s1049
          %1052 = dma.hbm_to_vmem [thread:$0]  %s5, 16, %s1050, [#allocation6]
        $region20: #{tpu_custom_call.1} parent=11 // pred_fallthru
          _
        // Predicated region
        $region21: #{tpu_custom_call.1} parent=11 // pred_check
          %p1053 = pneg %p197
        $region22: #{tpu_custom_call.1} parent=11 // pred_check_branch
          %1055 = sbr.rel (%p1053) target = $region24
        $region23: #{tpu_custom_call.1} parent=11 // pred_region
          %s1057 = ssub.s32 16, 16
          %1058 = vsyncadd [#allocation9], %s1057
          %s1060 = sshll.u32 [#allocation8], 4
          %s1061 = int_to_ptr.vmem [resolvable:$true] %s1060
          %1063 = dma.hbm_to_vmem [thread:$0]  %s7, 16, %s1061, [#allocation9]
        $region24: #{tpu_custom_call.1} parent=11 // pred_fallthru
          _
        // Predicated region
        $region25: #{tpu_custom_call.1} parent=11 // pred_check
          %p1064 = pneg %p218
        $region26: #{tpu_custom_call.1} parent=11 // pred_check_branch
          %1066 = sbr.rel (%p1064) target = $region28
        $region27: #{tpu_custom_call.1} parent=11 // pred_region
          %s1068 = ssub.s32 16, 16
          %1069 = vsyncadd [#allocation9], %s1068
          %s1071 = sshll.u32 [#allocation10], 4
          %s1072 = int_to_ptr.vmem [resolvable:$true] %s1071
          %1074 = dma.hbm_to_vmem [thread:$0]  %s9, 16, %s1072, [#allocation9]
        $region28: #{tpu_custom_call.1} parent=11 // pred_fallthru
          _
        // Predicated region
        $region29: #{tpu_custom_call.1} parent=11 // pred_check
          %p1075 = pneg %p239
        $region30: #{tpu_custom_call.1} parent=11 // pred_check_branch
          %1077 = sbr.rel (%p1075) target = $region32
        $region31: #{tpu_custom_call.1} parent=11 // pred_region
          %s1079 = ssub.s32 1024, 1024
          %1080 = vsyncadd [#allocation12], %s1079
          %s1081 = sshll.u32 [#allocation11], 4
          %s1082 = int_to_ptr.vmem [resolvable:$true] %s1081
          %1087 = dma.hbm_to_vmem [thread:$0]  %s11, 1024, %s1082, [#allocation12], 64, 64, 4
        $region32: #{tpu_custom_call.1} parent=11 // pred_fallthru
          _
        // Predicated region
        $region33: #{tpu_custom_call.1} parent=11 // pred_check
          %p1088 = pneg %p260
        $region34: #{tpu_custom_call.1} parent=11 // pred_check_branch
          %1090 = sbr.rel (%p1088) target = $region36
        $region35: #{tpu_custom_call.1} parent=11 // pred_region
          %s1092 = ssub.s32 16, 16
          %1093 = vsyncadd [#allocation12], %s1092
          %s1095 = sshll.u32 [#allocation13], 4
          %s1096 = int_to_ptr.vmem [resolvable:$true] %s1095
          %1098 = dma.hbm_to_vmem [thread:$0]  %s13, 16, %s1096, [#allocation12]
        $region36: #{tpu_custom_call.1} parent=11 // pred_fallthru
          _
        // Predicated region
        $region37: #{tpu_custom_call.1} parent=11 // pred_check
          %p1099 = pneg %p281
        $region38: #{tpu_custom_call.1} parent=11 // pred_check_branch
          %1101 = sbr.rel (%p1099) target = $region40
        $region39: #{tpu_custom_call.1} parent=11 // pred_region
          %s1103 = ssub.s32 16, 16
          %1104 = vsyncadd [#allocation15], %s1103
          %s1106 = sshll.u32 [#allocation14], 4
          %s1107 = int_to_ptr.vmem [resolvable:$true] %s1106
          %1109 = dma.hbm_to_vmem [thread:$0]  %s15, 16, %s1107, [#allocation15]
        $region40: #{tpu_custom_call.1} parent=11 // pred_fallthru
          _
        // Predicated region
        $region41: #{tpu_custom_call.1} parent=11 // pred_check
          %p1110 = pneg %p302
        $region42: #{tpu_custom_call.1} parent=11 // pred_check_branch
          %1112 = sbr.rel (%p1110) target = $region44
        $region43: #{tpu_custom_call.1} parent=11 // pred_region
          %s1114 = ssub.s32 16, 16
          %1115 = vsyncadd [#allocation15], %s1114
          %s1117 = sshll.u32 [#allocation16], 4
          %s1118 = int_to_ptr.vmem [resolvable:$true] %s1117
          %1120 = dma.hbm_to_vmem [thread:$0]  %s17, 16, %s1118, [#allocation15]
        $region44: #{tpu_custom_call.1} parent=11 // pred_fallthru
          _
        // Predicated region
        $region45: #{tpu_custom_call.1} parent=11 // pred_check
          %p1121 = pneg %p323
        $region46: #{tpu_custom_call.1} parent=11 // pred_check_branch
          %1123 = sbr.rel (%p1121) target = $region48
        $region47: #{tpu_custom_call.1} parent=11 // pred_region
          %s1125 = ssub.s32 1024, 1024
          %1126 = vsyncadd [#allocation18], %s1125
          %s1127 = sshll.u32 [#allocation17], 4
          %s1128 = int_to_ptr.vmem [resolvable:$true] %s1127
          %1133 = dma.hbm_to_vmem [thread:$0]  %s19, 1024, %s1128, [#allocation18], 64, 64, 4
        $region48: #{tpu_custom_call.1} parent=11 // pred_fallthru
          _
        // Predicated region
        $region49: #{tpu_custom_call.1} parent=11 // pred_check
          %p1134 = pneg %p344
        $region50: #{tpu_custom_call.1} parent=11 // pred_check_branch
          %1136 = sbr.rel (%p1134) target = $region52
        $region51: #{tpu_custom_call.1} parent=11 // pred_region
          _
        $region52: #{tpu_custom_call.1} parent=11 // pred_fallthru
          _
        // Predicated region
        $region53: #{tpu_custom_call.1} parent=11 // pred_check
          %p1137 = pneg %p365
        $region54: #{tpu_custom_call.1} parent=11 // pred_check_branch
          %1139 = sbr.rel (%p1137) target = $region56
        $region55: #{tpu_custom_call.1} parent=11 // pred_region
          _
        $region56: #{tpu_custom_call.1} parent=11 // pred_fallthru
          _
        // Predicated region
        $region57: #{tpu_custom_call.1} parent=11 // pred_check
          %p1140 = pneg %p386
        $region58: #{tpu_custom_call.1} parent=11 // pred_check_branch
          %1142 = sbr.rel (%p1140) target = $region60
        $region59: #{tpu_custom_call.1} parent=11 // pred_region
          _
        $region60: #{tpu_custom_call.1} parent=11 // pred_fallthru
          _
        // Predicated region
        $region61: #{tpu_custom_call.1} parent=11 // pred_check
          %p1143 = pneg %p407
        $region62: #{tpu_custom_call.1} parent=11 // pred_check_branch
          %1145 = sbr.rel (%p1143) target = $region64
        $region63: #{tpu_custom_call.1} parent=11 // pred_region
          %s1147 = ssub.s32 1024, 1024
          %1148 = vsyncadd [#allocation18], %s1147
          %s1149 = sshll.u32 [#allocation19], 4
          %s1150 = int_to_ptr.vmem [resolvable:$true] %s1149
          %1155 = dma.hbm_to_vmem [thread:$0]  %s27, 1024, %s1150, [#allocation18], 64, 64, 4
        $region64: #{tpu_custom_call.1} parent=11 // pred_fallthru
          _
        // Predicated region
        $region65: #{tpu_custom_call.1} parent=11 // pred_check
          %p1156 = pneg %p428
        $region66: #{tpu_custom_call.1} parent=11 // pred_check_branch
          %1158 = sbr.rel (%p1156) target = $region68
        $region67: #{tpu_custom_call.1} parent=11 // pred_region
          _
        $region68: #{tpu_custom_call.1} parent=11 // pred_fallthru
          _
        // Predicated region
        $region69: #{tpu_custom_call.1} parent=11 // pred_check
          %p1159 = pneg %p449
        $region70: #{tpu_custom_call.1} parent=11 // pred_check_branch
          %1161 = sbr.rel (%p1159) target = $region72
        $region71: #{tpu_custom_call.1} parent=11 // pred_region
          _
        $region72: #{tpu_custom_call.1} parent=11 // pred_fallthru
          _
        // Predicated region
        $region73: #{tpu_custom_call.1} parent=11 // pred_check
          %p1162 = pneg %p470
        $region74: #{tpu_custom_call.1} parent=11 // pred_check_branch
          %1164 = sbr.rel (%p1162) target = $region76
        $region75: #{tpu_custom_call.1} parent=11 // pred_region
          _
        $region76: #{tpu_custom_call.1} parent=11 // pred_fallthru
          _
        // Predicated region
        $region77: #{tpu_custom_call.1} parent=11 // pred_check
          %p1165 = pneg %p491
        $region78: #{tpu_custom_call.1} parent=11 // pred_check_branch
          %1167 = sbr.rel (%p1165) target = $region80
        $region79: #{tpu_custom_call.1} parent=11 // pred_region
          %s1169 = ssub.s32 1024, 1024
          %1170 = vsyncadd [#allocation21], %s1169
          %s1171 = sshll.u32 [#allocation20], 4
          %s1172 = int_to_ptr.vmem [resolvable:$true] %s1171
          %1177 = dma.hbm_to_vmem [thread:$0]  %s35, 1024, %s1172, [#allocation21], 64, 64, 4
        $region80: #{tpu_custom_call.1} parent=11 // pred_fallthru
          _
        // Predicated region
        $region81: #{tpu_custom_call.1} parent=11 // pred_check
          %p1178 = pneg %p512
        $region82: #{tpu_custom_call.1} parent=11 // pred_check_branch
          %1180 = sbr.rel (%p1178) target = $region84
        $region83: #{tpu_custom_call.1} parent=11 // pred_region
          _
        $region84: #{tpu_custom_call.1} parent=11 // pred_fallthru
          _
        // Predicated region
        $region85: #{tpu_custom_call.1} parent=11 // pred_check
          %p1181 = pneg %p533
        $region86: #{tpu_custom_call.1} parent=11 // pred_check_branch
          %1183 = sbr.rel (%p1181) target = $region88
        $region87: #{tpu_custom_call.1} parent=11 // pred_region
          _
        $region88: #{tpu_custom_call.1} parent=11 // pred_fallthru
          _
        // Predicated region
        $region89: #{tpu_custom_call.1} parent=11 // pred_check
          %p1184 = pneg %p554
        $region90: #{tpu_custom_call.1} parent=11 // pred_check_branch
          %1186 = sbr.rel (%p1184) target = $region92
        $region91: #{tpu_custom_call.1} parent=11 // pred_region
          _
        $region92: #{tpu_custom_call.1} parent=11 // pred_fallthru
          _
        // Predicated region
        $region93: #{tpu_custom_call.1} parent=11 // pred_check
          %p1187 = pneg %p575
        $region94: #{tpu_custom_call.1} parent=11 // pred_check_branch
          %1189 = sbr.rel (%p1187) target = $region96
        $region95: #{tpu_custom_call.1} parent=11 // pred_region
          %s1191 = ssub.s32 1024, 1024
          %1192 = vsyncadd [#allocation21], %s1191
          %s1193 = sshll.u32 [#allocation22], 4
          %s1194 = int_to_ptr.vmem [resolvable:$true] %s1193
          %1199 = dma.hbm_to_vmem [thread:$0]  %s43, 1024, %s1194, [#allocation21], 64, 64, 4
        $region96: #{tpu_custom_call.1} parent=11 // pred_fallthru
          _
        // Predicated region
        $region97: #{tpu_custom_call.1} parent=11 // pred_check
          %p1200 = pneg %p596
        $region98: #{tpu_custom_call.1} parent=11 // pred_check_branch
          %1202 = sbr.rel (%p1200) target = $region100
        $region99: #{tpu_custom_call.1} parent=11 // pred_region
          _
        $region100: #{tpu_custom_call.1} parent=11 // pred_fallthru
          _
        // Predicated region
        $region101: #{tpu_custom_call.1} parent=11 // pred_check
          %p1203 = pneg %p617
        $region102: #{tpu_custom_call.1} parent=11 // pred_check_branch
          %1205 = sbr.rel (%p1203) target = $region104
        $region103: #{tpu_custom_call.1} parent=11 // pred_region
          _
        $region104: #{tpu_custom_call.1} parent=11 // pred_fallthru
          _
        // Predicated region
        $region105: #{tpu_custom_call.1} parent=11 // pred_check
          %p1206 = pneg %p638
        $region106: #{tpu_custom_call.1} parent=11 // pred_check_branch
          %1208 = sbr.rel (%p1206) target = $region108
        $region107: #{tpu_custom_call.1} parent=11 // pred_region
          _
        $region108: #{tpu_custom_call.1} parent=11 // pred_fallthru
          _
        // Predicated region
        $region109: #{tpu_custom_call.1} parent=11 // pred_check
          %p1209 = pneg %p659
        $region110: #{tpu_custom_call.1} parent=11 // pred_check_branch
          %1211 = sbr.rel (%p1209) target = $region112
        $region111: #{tpu_custom_call.1} parent=11 // pred_region
          %s1213 = ssub.s32 1024, 1024
          %1214 = vsyncadd [#allocation24], %s1213
          %s1215 = sshll.u32 [#allocation23], 4
          %s1216 = int_to_ptr.vmem [resolvable:$true] %s1215
          %1221 = dma.hbm_to_vmem [thread:$0]  %s51, 1024, %s1216, [#allocation24], 64, 64, 4
        $region112: #{tpu_custom_call.1} parent=11 // pred_fallthru
          _
        // Predicated region
        $region113: #{tpu_custom_call.1} parent=11 // pred_check
          %p1222 = pneg %p680
        $region114: #{tpu_custom_call.1} parent=11 // pred_check_branch
          %1224 = sbr.rel (%p1222) target = $region116
        $region115: #{tpu_custom_call.1} parent=11 // pred_region
          _
        $region116: #{tpu_custom_call.1} parent=11 // pred_fallthru
          _
        // Predicated region
        $region117: #{tpu_custom_call.1} parent=11 // pred_check
          %p1225 = pneg %p701
        $region118: #{tpu_custom_call.1} parent=11 // pred_check_branch
          %1227 = sbr.rel (%p1225) target = $region120
        $region119: #{tpu_custom_call.1} parent=11 // pred_region
          _
        $region120: #{tpu_custom_call.1} parent=11 // pred_fallthru
          _
        // Predicated region
        $region121: #{tpu_custom_call.1} parent=11 // pred_check
          %p1228 = pneg %p722
        $region122: #{tpu_custom_call.1} parent=11 // pred_check_branch
          %1230 = sbr.rel (%p1228) target = $region124
        $region123: #{tpu_custom_call.1} parent=11 // pred_region
          _
        $region124: #{tpu_custom_call.1} parent=11 // pred_fallthru
          _
        // Predicated region
        $region125: #{tpu_custom_call.1} parent=11 // pred_check
          %p1231 = pneg %p743
        $region126: #{tpu_custom_call.1} parent=11 // pred_check_branch
          %1233 = sbr.rel (%p1231) target = $region128
        $region127: #{tpu_custom_call.1} parent=11 // pred_region
          %s1235 = ssub.s32 1024, 1024
          %1236 = vsyncadd [#allocation24], %s1235
          %s1237 = sshll.u32 [#allocation25], 4
          %s1238 = int_to_ptr.vmem [resolvable:$true] %s1237
          %1243 = dma.hbm_to_vmem [thread:$0]  %s59, 1024, %s1238, [#allocation24], 64, 64, 4
        $region128: #{tpu_custom_call.1} parent=11 // pred_fallthru
          _
        // Predicated region
        $region129: #{tpu_custom_call.1} parent=11 // pred_check
          %p1244 = pneg %p764
        $region130: #{tpu_custom_call.1} parent=11 // pred_check_branch
          %1246 = sbr.rel (%p1244) target = $region132
        $region131: #{tpu_custom_call.1} parent=11 // pred_region
          _
        $region132: #{tpu_custom_call.1} parent=11 // pred_fallthru
          _
        // Predicated region
        $region133: #{tpu_custom_call.1} parent=11 // pred_check
          %p1247 = pneg %p785
        $region134: #{tpu_custom_call.1} parent=11 // pred_check_branch
          %1249 = sbr.rel (%p1247) target = $region136
        $region135: #{tpu_custom_call.1} parent=11 // pred_region
          %s1251 = ssub.s32 1024, 1024
          %1252 = vsyncadd [#allocation27], %s1251
          %s1253 = sshll.u32 [#allocation26], 4
          %s1254 = int_to_ptr.vmem [resolvable:$true] %s1253
          %1259 = dma.hbm_to_vmem [thread:$0]  %s63, 1024, %s1254, [#allocation27], 64, 64, 4
        $region136: #{tpu_custom_call.1} parent=11 // pred_fallthru
          _
        // Predicated region
        $region137: #{tpu_custom_call.1} parent=11 // pred_check
          %p1260 = pneg %p806
        $region138: #{tpu_custom_call.1} parent=11 // pred_check_branch
          %1262 = sbr.rel (%p1260) target = $region140
        $region139: #{tpu_custom_call.1} parent=11 // pred_region
          _
        $region140: #{tpu_custom_call.1} parent=11 // pred_fallthru
          _
      $region12: #{tpu_custom_call.1} parent=5 // pred_fallthru
        _
      %p1263 = scmp.lt.s32.totalorder %s108, 2
      // Predicated region
      $region141: #{tpu_custom_call.1} parent=5 // pred_check
        %p1264 = pneg %p1263
      $region142: #{tpu_custom_call.1} parent=5 // pred_check_branch
        %1266 = sbr.rel (%p1264) target = $region144
      $region143: #{tpu_custom_call.1} parent=5 // pred_region
        // Predicated region
        $region145: #{tpu_custom_call.1} parent=143 // pred_check
          %p1267 = pneg %p128
        $region146: #{tpu_custom_call.1} parent=143 // pred_check_branch
          %1269 = sbr.rel (%p1267) target = $region148
        $region147: #{tpu_custom_call.1} parent=143 // pred_region
          %s1270 = sand.u32 %s118, 1
          %s1271 = scalar_lea.sflag [#allocation3], %s1270
          %s1272 = sand.u32 %s118, 1
          %s1273 = smul.addr %s1272, 8
          %s1274 = scalar_lea.vmem [#allocation2], %s1273
          %s1276 = ssub.s32 128, 128
          %1277 = vsyncadd %s1271, %s1276
          %s1278 = smul.addr %s108, 128
          %s1279 = scalar_lea.hbm %s1, %s1278
          %s1281 = sshll.u32 %s1274, 4
          %s1282 = int_to_ptr.vmem [resolvable:$true] %s1281
          %1284 = dma.hbm_to_vmem [thread:$0]  %s1279, 128, %s1282, %s1271
        $region148: #{tpu_custom_call.1} parent=143 // pred_fallthru
          _
        // Predicated region
        $region149: #{tpu_custom_call.1} parent=143 // pred_check
          %p1285 = pneg %p826
        $region150: #{tpu_custom_call.1} parent=143 // pred_check_branch
          %1287 = sbr.rel (%p1285) target = $region152
        $region151: #{tpu_custom_call.1} parent=143 // pred_region
          %p1288 = scmp.lt.s32.totalorder %s108, 1
          %s1289 = scalar_select %p1288, %s108, 1
          %s1290 = smul.addr %s1289, 2
          %s1291 = scalar_lea.vmem %s67, %s1290
        $region152: #{tpu_custom_call.1} parent=143 // pred_fallthru
          _
        // Predicated region
        $region153: #{tpu_custom_call.1} parent=143 // pred_check
          %p1292 = pneg %p852
        $region154: #{tpu_custom_call.1} parent=143 // pred_check_branch
          %1294 = sbr.rel (%p1292) target = $region156
        $region155: #{tpu_custom_call.1} parent=143 // pred_region
          %p1295 = scmp.lt.s32.totalorder %s108, 1
          %s1296 = scalar_select %p1295, %s108, 1
          %s1297 = smul.addr %s1296, 2
          %s1298 = scalar_lea.vmem %s69, %s1297
        $region156: #{tpu_custom_call.1} parent=143 // pred_fallthru
          _
        // Predicated region
        $region157: #{tpu_custom_call.1} parent=143 // pred_check
          %p1299 = pneg %p878
        $region158: #{tpu_custom_call.1} parent=143 // pred_check_branch
          %1301 = sbr.rel (%p1299) target = $region160
        $region159: #{tpu_custom_call.1} parent=143 // pred_region
          %p1302 = scmp.lt.s32.totalorder %s108, 1
          %s1303 = scalar_select %p1302, %s108, 1
          %s1304 = smul.addr %s1303, 2
          %s1305 = scalar_lea.vmem %s71, %s1304
        $region160: #{tpu_custom_call.1} parent=143 // pred_fallthru
          _
        // Predicated region
        $region161: #{tpu_custom_call.1} parent=143 // pred_check
          %p1306 = pneg %p904
        $region162: #{tpu_custom_call.1} parent=143 // pred_check_branch
          %1308 = sbr.rel (%p1306) target = $region164
        $region163: #{tpu_custom_call.1} parent=143 // pred_region
          %p1309 = scmp.lt.s32.totalorder %s108, 1
          %s1310 = scalar_select %p1309, %s108, 1
          %s1311 = smul.addr %s1310, 2
          %s1312 = scalar_lea.vmem %s73, %s1311
        $region164: #{tpu_custom_call.1} parent=143 // pred_fallthru
          _
      $region144: #{tpu_custom_call.1} parent=5 // pred_fallthru
        _
      %p1313 = scmp.le.s32.totalorder 1, %s108
      %p1314 = scmp.lt.s32.totalorder %s108, 3
      %p1315 = pnand %p1313, %p1314
      %p1316 = pneg %p1315
      // Predicated region
      $region165: #{tpu_custom_call.1} parent=5 // pred_check
        _
      $region166: #{tpu_custom_call.1} parent=5 // pred_check_branch
        %1318 = sbr.rel (%p1315) target = $region168
      $region167: #{tpu_custom_call.1} parent=5 // pred_region
        %s1319 = ssub.s32 %s108, 1
        %s1320 = sand.u32 %s121, 1
        %s1321 = scalar_lea.sflag [#allocation3], %s1320
        %s1322 = sand.u32 %s121, 1
        %s1323 = smul.addr %s1322, 8
        %s1324 = scalar_lea.vmem [#allocation2], %s1323
        // Predicated region
        $region169: #{tpu_custom_call.1} parent=167 // pred_check
          %p1325 = pneg %p134
        $region170: #{tpu_custom_call.1} parent=167 // pred_check_branch
          %1327 = sbr.rel (%p1325) target = $region172
        $region171: #{tpu_custom_call.1} parent=167 // pred_region
          %1328 = dma.done %s1321, 128
        $region172: #{tpu_custom_call.1} parent=167 // pred_fallthru
          _
        // Predicated region
        $region173: #{tpu_custom_call.1} parent=167 // pred_check
          %p1329 = pneg %p155
        $region174: #{tpu_custom_call.1} parent=167 // pred_check_branch
          %1331 = sbr.rel (%p1329) target = $region176
        $region175: #{tpu_custom_call.1} parent=167 // pred_region
          %1332 = dma.done [#allocation6], 1024
        $region176: #{tpu_custom_call.1} parent=167 // pred_fallthru
          _
        // Predicated region
        $region177: #{tpu_custom_call.1} parent=167 // pred_check
          %p1333 = pneg %p176
        $region178: #{tpu_custom_call.1} parent=167 // pred_check_branch
          %1335 = sbr.rel (%p1333) target = $region180
        $region179: #{tpu_custom_call.1} parent=167 // pred_region
          %1336 = dma.done [#allocation6], 16
        $region180: #{tpu_custom_call.1} parent=167 // pred_fallthru
          _
        // Predicated region
        $region181: #{tpu_custom_call.1} parent=167 // pred_check
          %p1337 = pneg %p197
        $region182: #{tpu_custom_call.1} parent=167 // pred_check_branch
          %1339 = sbr.rel (%p1337) target = $region184
        $region183: #{tpu_custom_call.1} parent=167 // pred_region
          %1340 = dma.done [#allocation9], 16
        $region184: #{tpu_custom_call.1} parent=167 // pred_fallthru
          _
        // Predicated region
        $region185: #{tpu_custom_call.1} parent=167 // pred_check
          %p1341 = pneg %p218
        $region186: #{tpu_custom_call.1} parent=167 // pred_check_branch
          %1343 = sbr.rel (%p1341) target = $region188
        $region187: #{tpu_custom_call.1} parent=167 // pred_region
          %1344 = dma.done [#allocation9], 16
        $region188: #{tpu_custom_call.1} parent=167 // pred_fallthru
          _
        // Predicated region
        $region189: #{tpu_custom_call.1} parent=167 // pred_check
          %p1345 = pneg %p239
        $region190: #{tpu_custom_call.1} parent=167 // pred_check_branch
          %1347 = sbr.rel (%p1345) target = $region192
        $region191: #{tpu_custom_call.1} parent=167 // pred_region
          %1348 = dma.done [#allocation12], 1024
        $region192: #{tpu_custom_call.1} parent=167 // pred_fallthru
          _
        // Predicated region
        $region193: #{tpu_custom_call.1} parent=167 // pred_check
          %p1349 = pneg %p260
        $region194: #{tpu_custom_call.1} parent=167 // pred_check_branch
          %1351 = sbr.rel (%p1349) target = $region196
        $region195: #{tpu_custom_call.1} parent=167 // pred_region
          %1352 = dma.done [#allocation12], 16
        $region196: #{tpu_custom_call.1} parent=167 // pred_fallthru
          _
        // Predicated region
        $region197: #{tpu_custom_call.1} parent=167 // pred_check
          %p1353 = pneg %p281
        $region198: #{tpu_custom_call.1} parent=167 // pred_check_branch
          %1355 = sbr.rel (%p1353) target = $region200
        $region199: #{tpu_custom_call.1} parent=167 // pred_region
          %1356 = dma.done [#allocation15], 16
        $region200: #{tpu_custom_call.1} parent=167 // pred_fallthru
          _
        // Predicated region
        $region201: #{tpu_custom_call.1} parent=167 // pred_check
          %p1357 = pneg %p302
        $region202: #{tpu_custom_call.1} parent=167 // pred_check_branch
          %1359 = sbr.rel (%p1357) target = $region204
        $region203: #{tpu_custom_call.1} parent=167 // pred_region
          %1360 = dma.done [#allocation15], 16
        $region204: #{tpu_custom_call.1} parent=167 // pred_fallthru
          _
        // Predicated region
        $region205: #{tpu_custom_call.1} parent=167 // pred_check
          %p1361 = pneg %p323
        $region206: #{tpu_custom_call.1} parent=167 // pred_check_branch
          %1363 = sbr.rel (%p1361) target = $region208
        $region207: #{tpu_custom_call.1} parent=167 // pred_region
          %1364 = dma.done [#allocation18], 1024
        $region208: #{tpu_custom_call.1} parent=167 // pred_fallthru
          _
        // Predicated region
        $region209: #{tpu_custom_call.1} parent=167 // pred_check
          %p1365 = pneg %p407
        $region210: #{tpu_custom_call.1} parent=167 // pred_check_branch
          %1367 = sbr.rel (%p1365) target = $region212
        $region211: #{tpu_custom_call.1} parent=167 // pred_region
          %1368 = dma.done [#allocation18], 1024
        $region212: #{tpu_custom_call.1} parent=167 // pred_fallthru
          _
        // Predicated region
        $region213: #{tpu_custom_call.1} parent=167 // pred_check
          %p1369 = pneg %p491
        $region214: #{tpu_custom_call.1} parent=167 // pred_check_branch
          %1371 = sbr.rel (%p1369) target = $region216
        $region215: #{tpu_custom_call.1} parent=167 // pred_region
          %1372 = dma.done [#allocation21], 1024
        $region216: #{tpu_custom_call.1} parent=167 // pred_fallthru
          _
        // Predicated region
        $region217: #{tpu_custom_call.1} parent=167 // pred_check
          %p1373 = pneg %p575
        $region218: #{tpu_custom_call.1} parent=167 // pred_check_branch
          %1375 = sbr.rel (%p1373) target = $region220
        $region219: #{tpu_custom_call.1} parent=167 // pred_region
          %1376 = dma.done [#allocation21], 1024
        $region220: #{tpu_custom_call.1} parent=167 // pred_fallthru
          _
        // Predicated region
        $region221: #{tpu_custom_call.1} parent=167 // pred_check
          %p1377 = pneg %p659
        $region222: #{tpu_custom_call.1} parent=167 // pred_check_branch
          %1379 = sbr.rel (%p1377) target = $region224
        $region223: #{tpu_custom_call.1} parent=167 // pred_region
          %1380 = dma.done [#allocation24], 1024
        $region224: #{tpu_custom_call.1} parent=167 // pred_fallthru
          _
        // Predicated region
        $region225: #{tpu_custom_call.1} parent=167 // pred_check
          %p1381 = pneg %p743
        $region226: #{tpu_custom_call.1} parent=167 // pred_check_branch
          %1383 = sbr.rel (%p1381) target = $region228
        $region227: #{tpu_custom_call.1} parent=167 // pred_region
          %1384 = dma.done [#allocation24], 1024
        $region228: #{tpu_custom_call.1} parent=167 // pred_fallthru
          _
        // Predicated region
        $region229: #{tpu_custom_call.1} parent=167 // pred_check
          %p1385 = pneg %p785
        $region230: #{tpu_custom_call.1} parent=167 // pred_check_branch
          %1387 = sbr.rel (%p1385) target = $region232
        $region231: #{tpu_custom_call.1} parent=167 // pred_region
          %1388 = dma.done [#allocation27], 1024
        $region232: #{tpu_custom_call.1} parent=167 // pred_fallthru
          _
        %s1389 = sand.u32 %s121, 1
        %s1390 = scalar_lea.sflag [#allocation3], %s1389
        %s1391 = sand.u32 %s121, 1
        %s1392 = smul.addr %s1391, 8
        %s1393 = scalar_lea.vmem [#allocation2], %s1392
        %p1394 = pneg %p134
        %p1395 = pneg %p131
        %p1396 = pneg %p155
        %p1397 = pneg %p152
        %p1398 = pneg %p176
        %p1399 = pneg %p173
        %p1400 = pneg %p197
        %p1401 = pneg %p194
        %p1402 = pneg %p218
        %p1403 = pneg %p215
        %p1404 = pneg %p239
        %p1405 = pneg %p236
        %p1406 = pneg %p260
        %p1407 = pneg %p257
        %p1408 = pneg %p281
        %p1409 = pneg %p278
        %p1410 = pneg %p302
        %p1411 = pneg %p299
        %p1412 = pneg %p323
        %p1413 = pneg %p320
        %p1414 = pneg %p344
        %p1415 = pneg %p341
        %p1416 = pneg %p365
        %p1417 = pneg %p362
        %p1418 = pneg %p386
        %p1419 = pneg %p383
        %p1420 = pneg %p407
        %p1421 = pneg %p404
        %p1422 = pneg %p428
        %p1423 = pneg %p425
        %p1424 = pneg %p449
        %p1425 = pneg %p446
        %p1426 = pneg %p470
        %p1427 = pneg %p467
        %p1428 = pneg %p491
        %p1429 = pneg %p488
        %p1430 = pneg %p512
        %p1431 = pneg %p509
        %p1432 = pneg %p533
        %p1433 = pneg %p530
        %p1434 = pneg %p554
        %p1435 = pneg %p551
        %p1436 = pneg %p575
        %p1437 = pneg %p572
        %p1438 = pneg %p596
        %p1439 = pneg %p593
        %p1440 = pneg %p617
        %p1441 = pneg %p614
        %p1442 = pneg %p638
        %p1443 = pneg %p635
        %p1444 = pneg %p659
        %p1445 = pneg %p656
        %p1446 = pneg %p680
        %p1447 = pneg %p677
        %p1448 = pneg %p701
        %p1449 = pneg %p698
        %p1450 = pneg %p722
        %p1451 = pneg %p719
        %p1452 = pneg %p743
        %p1453 = pneg %p740
        %p1454 = pneg %p764
        %p1455 = pneg %p761
        %p1456 = pneg %p785
        %p1457 = pneg %p782
        %p1458 = pneg %p806
        %p1459 = pneg %p803
        %p1460 = scmp.lt.s32.totalorder %s113, 1
        %s1461 = scalar_select %p1460, %s113, 1
        %s1462 = smul.addr %s1461, 2
        %s1463 = scalar_lea.vmem %s67, %s1462
        %p1464 = pneg %p832
        %p1465 = pneg %p829
        %p1466 = scmp.lt.s32.totalorder %s113, 1
        %s1467 = scalar_select %p1466, %s113, 1
        %s1468 = smul.addr %s1467, 2
        %s1469 = scalar_lea.vmem %s69, %s1468
        %p1470 = pneg %p858
        %p1471 = pneg %p855
        %p1472 = scmp.lt.s32.totalorder %s113, 1
        %s1473 = scalar_select %p1472, %s113, 1
        %s1474 = smul.addr %s1473, 2
        %s1475 = scalar_lea.vmem %s71, %s1474
        %p1476 = pneg %p884
        %p1477 = pneg %p881
        %p1478 = scmp.lt.s32.totalorder %s113, 1
        %s1479 = scalar_select %p1478, %s113, 1
        %s1480 = smul.addr %s1479, 2
        %s1481 = scalar_lea.vmem %s73, %s1480
        %p1482 = pneg %p910
        %p1483 = pneg %p907
        %p1484 = pneg %p936
        %p1485 = pneg %p933
        %s1486 = sand.u32 %s923, 1
        %s1487 = scalar_lea.sflag [#allocation4], %s1486
        %s1488 = sand.u32 %s923, 1
        %s1489 = smul.addr %s1488, 8
        %s1490 = scalar_lea.vmem [#allocation28], %s1489
        %p1491 = pneg %p962
        %p1492 = pneg %p959
        %s1493 = sand.u32 %s113, 1
        %s1494 = scalar_lea.sflag [#allocation30], %s1493
        %s1495 = sand.u32 %s949, 1
        %s1496 = smul.addr %s1495, 8
        %s1497 = scalar_lea.vmem [#allocation29], %s1496
        %p1498 = pneg %p988
        %p1499 = pneg %p985
        %s1500 = sand.u32 %s113, 1
        %s1501 = scalar_lea.sflag [#allocation30], %s1500
        %s1502 = sand.u32 %s975, 1
        %s1503 = smul.addr %s1502, 8
        %s1504 = scalar_lea.vmem [#allocation31], %s1503
        %p1505 = pneg %p1014
        %p1506 = pneg %p1011
        %s1507 = sand.u32 %s1001, 1
        %s1508 = scalar_lea.sflag [#allocation33], %s1507
        %s1509 = sand.u32 %s1001, 1
        %s1510 = smul.addr %s1509, 8
        %s1511 = scalar_lea.vmem [#allocation32], %s1510
        %p1512 = scmp.lt.s32.totalorder %s113, 1
        %s1513 = scalar_select %p1512, %s113, 1
        %s1514 = smul.addr %s1513, 2
        %s1515 = scalar_lea.vmem %s67, %s1514
        %p1516 = scmp.lt.s32.totalorder %s113, 1
        %s1517 = scalar_select %p1516, %s113, 1
        %s1518 = smul.addr %s1517, 2
        %s1519 = scalar_lea.vmem %s69, %s1518
        %p1520 = scmp.lt.s32.totalorder %s113, 1
        %s1521 = scalar_select %p1520, %s113, 1
        %s1522 = smul.addr %s1521, 2
        %s1523 = scalar_lea.vmem %s71, %s1522
        %p1524 = scmp.lt.s32.totalorder %s113, 1
        %s1525 = scalar_select %p1524, %s113, 1
        %s1526 = smul.addr %s1525, 2
        %s1527 = scalar_lea.vmem %s73, %s1526
        %v1529 = vld [vmem:[%s1324] sm:$0xff]
        %v1530 = vld [vmem:[#allocation5] sm:$0xf]
        %v1531 = vld [vmem:[#allocation5 + $0x4] sm:$0xf]
        %v1532 = vld [vmem:[#allocation5 + $0x8] sm:$0xf]
        %v1533 = vld [vmem:[#allocation5 + $0xc] sm:$0xf]
        %v1534 = vld [vmem:[#allocation5 + $0x10] sm:$0xf]
        %v1535 = vld [vmem:[#allocation5 + $0x14] sm:$0xf]
        %v1536 = vld [vmem:[#allocation5 + $0x18] sm:$0xf]
        %v1537 = vld [vmem:[#allocation5 + $0x1c] sm:$0xf]
        %v1538 = vld [vmem:[#allocation5 + $0x20] sm:$0xf]
        %v1539 = vld [vmem:[#allocation5 + $0x24] sm:$0xf]
        %v1540 = vld [vmem:[#allocation5 + $0x28] sm:$0xf]
        %v1541 = vld [vmem:[#allocation5 + $0x2c] sm:$0xf]
        %v1542 = vld [vmem:[#allocation5 + $0x30] sm:$0xf]
        %v1543 = vld [vmem:[#allocation5 + $0x34] sm:$0xf]
        %v1544 = vld [vmem:[#allocation5 + $0x38] sm:$0xf]
        %v1545 = vld [vmem:[#allocation5 + $0x3c] sm:$0xf]
        %v1546 = vpack.c.bf16 %v1529, %v1529
        %v1547 = vld [vmem:[#allocation7] sm:$0x1]
        %v1549 = vlaneseq
        %v1550 = vshrl.u32 %v1549, 7
        %v1551 = vsub.s32 0, %v1550
        %v1552 = vrot.slane %v1547, %v1551
        %v1570 = vunpack.c.l.b16 %v1530
        %v1571 = vunpack.c.l.b16 %v1531
        %v1572 = vunpack.c.l.b16 %v1532
        %v1573 = vunpack.c.l.b16 %v1533
        %v1574 = vunpack.c.l.b16 %v1534
        %v1575 = vunpack.c.l.b16 %v1535
        %v1576 = vunpack.c.l.b16 %v1536
        %v1577 = vunpack.c.l.b16 %v1537
        %v1578 = vunpack.c.l.b16 %v1538
        %v1579 = vunpack.c.l.b16 %v1539
        %v1580 = vunpack.c.l.b16 %v1540
        %v1581 = vunpack.c.l.b16 %v1541
        %v1582 = vunpack.c.l.b16 %v1542
        %v1583 = vunpack.c.l.b16 %v1543
        %v1584 = vunpack.c.l.b16 %v1544
        %v1585 = vunpack.c.l.b16 %v1545
        %v1586 = vpack.c.b16 %v1571, %v1570
        %v1587 = vpack.c.b16 %v1573, %v1572
        %v1588 = vpack.c.b16 %v1575, %v1574
        %v1589 = vpack.c.b16 %v1577, %v1576
        %v1590 = vpack.c.b16 %v1579, %v1578
        %v1591 = vpack.c.b16 %v1581, %v1580
        %v1592 = vpack.c.b16 %v1583, %v1582
        %v1593 = vpack.c.b16 %v1585, %v1584
        %1602 = vmatprep.subr.bf16.mxu0 0
        %1603 = vmatpush1.bf16.msra.mxu0 %v1593
        %1604 = vmatprep.subr.bf16.mxu0 0
        %1605 = vmatpush1.bf16.msra.mxu0 %v1592
        %1606 = vmatprep.subr.bf16.mxu0 0
        %1607 = vmatpush1.bf16.msra.mxu0 %v1591
        %1608 = vmatprep.subr.bf16.mxu0 0
        %1609 = vmatpush1.bf16.msra.mxu0 %v1590
        %1610 = vmatprep.subr.bf16.mxu0 0
        %1611 = vmatpush1.bf16.msra.mxu0 %v1589
        %1612 = vmatprep.subr.bf16.mxu0 0
        %1613 = vmatpush1.bf16.msra.mxu0 %v1588
        %1614 = vmatprep.subr.bf16.mxu0 0
        %1615 = vmatpush1.bf16.msra.mxu0 %v1587
        %1616 = vmatprep.subr.bf16.mxu0 0
        %1617 = vmatpush1.bf16.msra.mxu0 %v1586
        %1618 = vmatprep.subr.bf16.mxu0 0
        %1619 = vmatpush2.bf16.msra.mxu0 0
        %1620 = vmatprep.subr.bf16.mxu0 0
        %1621 = vmatpush2.bf16.msra.mxu0 0
        %1622 = vmatprep.subr.bf16.mxu0 0
        %1623 = vmatpush2.bf16.msra.mxu0 0
        %1624 = vmatprep.subr.bf16.mxu0 0
        %1625 = vmatpush2.bf16.msra.mxu0 0
        %1626 = vmatprep.subr.bf16.mxu0 0
        %1627 = vmatpush2.bf16.msra.mxu0 0
        %1628 = vmatprep.subr.bf16.mxu0 0
        %1629 = vmatpush2.bf16.msra.mxu0 0
        %1630 = vmatprep.subr.bf16.mxu0 0
        %1631 = vmatpush2.bf16.msra.mxu0 0
        %1632 = vmatprep.subr.bf16.mxu0 0
        %1633 = vmatpush2.bf16.msra.mxu0 0
        %1634 = vmatprep.mubr.bf16.mxu0 0
        %1635 = vmatmul.mubr.bf16.gmra.mxu0 %v1546
        %v1636 = vpop.f32.mrf.mxu0
        %v1637 = vadd.f32 %v1552, %v1636
        %v1638 = vpop.f32.mrf.mxu0
        %v1639 = vpop.f32.mrf.mxu0
        %v1640 = vpop.f32.mrf.mxu0
        %1641 = vdwg.mxu0
        %v1642 = vrot.slane %v1637, 4
        %v1643 = vadd.f32 %v1637, %v1642
        %v1644 = vrot.slane %v1643, 2
        %v1645 = vadd.f32 %v1643, %v1644
        %v1646 = vrot.slane %v1645, 1
        %v1647 = vadd.f32 %v1645, %v1646
        %v1648 = vrcp.pop 8.0
        %v1649 = vmul.f32 %v1647, %v1648
        %v1650 = vsub.f32 %v1637, %v1649
        %v1651 = vmul.f32 %v1650, %v1650
        %v1652 = vrot.slane %v1651, 4
        %v1653 = vadd.f32 %v1651, %v1652
        %v1654 = vrot.slane %v1653, 2
        %v1655 = vadd.f32 %v1653, %v1654
        %v1656 = vrot.slane %v1655, 1
        %v1657 = vadd.f32 %v1655, %v1656
        %v1658 = vmul.f32 %v1657, %v1648
        %v1659 = vadd.f32 %v1658, 1e-05
        %v1660 = vrsqrt.pop %v1659
        %v1661 = vmul.f32 %v1650, %v1660
        %v1662 = vld [vmem:[#allocation8] sm:$0x1]
        %v1664 = vlaneseq
        %v1665 = vshrl.u32 %v1664, 7
        %v1666 = vsub.s32 0, %v1665
        %v1667 = vrot.slane %v1662, %v1666
        %v1669 = vmul.f32 %v1661, %v1667
        %v1670 = vld [vmem:[#allocation10] sm:$0x1]
        %v1672 = vlaneseq
        %v1673 = vshrl.u32 %v1672, 7
        %v1674 = vsub.s32 0, %v1673
        %v1675 = vrot.slane %v1670, %v1674
        %v1677 = vadd.f32 %v1669, %v1675
        %vm1678 = vcmp.gt.f32.partialorder %v1677, 0.0
        %v1679 = vmin.f32 %v1677, 0.0
        %v1680 = vmul.f32 %v1679, 1.442695
        %v1681 = vpow.pop %v1680
        %v1682 = vsub.f32 %v1681, 1.0
        %v1683 = vsel %vm1678, %v1677, %v1682
        %v1684 = vld [vmem:[%s1515] sm:$0x3]
        %v1685 = vunpack.c.0.s8 %v1684
        %v1686 = vcvt.s32.f32 %v1685
        %v1687 = vmul.f32 %v1686, 2.0
        %v1688 = vmul.f32 %v1683, %v1687
        %v1689 = vld [vmem:[#allocation11] sm:$0xf]
        %v1690 = vld [vmem:[#allocation11 + $0x4] sm:$0xf]
        %v1691 = vld [vmem:[#allocation11 + $0x8] sm:$0xf]
        %v1692 = vld [vmem:[#allocation11 + $0xc] sm:$0xf]
        %v1693 = vld [vmem:[#allocation11 + $0x10] sm:$0xf]
        %v1694 = vld [vmem:[#allocation11 + $0x14] sm:$0xf]
        %v1695 = vld [vmem:[#allocation11 + $0x18] sm:$0xf]
        %v1696 = vld [vmem:[#allocation11 + $0x1c] sm:$0xf]
        %v1697 = vld [vmem:[#allocation11 + $0x20] sm:$0xf]
        %v1698 = vld [vmem:[#allocation11 + $0x24] sm:$0xf]
        %v1699 = vld [vmem:[#allocation11 + $0x28] sm:$0xf]
        %v1700 = vld [vmem:[#allocation11 + $0x2c] sm:$0xf]
        %v1701 = vld [vmem:[#allocation11 + $0x30] sm:$0xf]
        %v1702 = vld [vmem:[#allocation11 + $0x34] sm:$0xf]
        %v1703 = vld [vmem:[#allocation11 + $0x38] sm:$0xf]
        %v1704 = vld [vmem:[#allocation11 + $0x3c] sm:$0xf]
        %v1705 = vpack.c.bf16 %v1688, %v1688
        %v1706 = vld [vmem:[#allocation13] sm:$0x1]
        %v1708 = vlaneseq
        %v1709 = vshrl.u32 %v1708, 7
        %v1710 = vsub.s32 0, %v1709
        %v1711 = vrot.slane %v1706, %v1710
        %v1729 = vunpack.c.l.b16 %v1689
        %v1730 = vunpack.c.l.b16 %v1690
        %v1731 = vunpack.c.l.b16 %v1691
        %v1732 = vunpack.c.l.b16 %v1692
        %v1733 = vunpack.c.l.b16 %v1693
        %v1734 = vunpack.c.l.b16 %v1694
        %v1735 = vunpack.c.l.b16 %v1695
        %v1736 = vunpack.c.l.b16 %v1696
        %v1737 = vunpack.c.l.b16 %v1697
        %v1738 = vunpack.c.l.b16 %v1698
        %v1739 = vunpack.c.l.b16 %v1699
        %v1740 = vunpack.c.l.b16 %v1700
        %v1741 = vunpack.c.l.b16 %v1701
        %v1742 = vunpack.c.l.b16 %v1702
        %v1743 = vunpack.c.l.b16 %v1703
        %v1744 = vunpack.c.l.b16 %v1704
        %v1745 = vpack.c.b16 %v1730, %v1729
        %v1746 = vpack.c.b16 %v1732, %v1731
        %v1747 = vpack.c.b16 %v1734, %v1733
        %v1748 = vpack.c.b16 %v1736, %v1735
        %v1749 = vpack.c.b16 %v1738, %v1737
        %v1750 = vpack.c.b16 %v1740, %v1739
        %v1751 = vpack.c.b16 %v1742, %v1741
        %v1752 = vpack.c.b16 %v1744, %v1743
        %1761 = vmatprep.subr.bf16.mxu0 0
        %1762 = vmatpush1.bf16.msra.mxu0 %v1752
        %1763 = vmatprep.subr.bf16.mxu0 0
        %1764 = vmatpush1.bf16.msra.mxu0 %v1751
        %1765 = vmatprep.subr.bf16.mxu0 0
        %1766 = vmatpush1.bf16.msra.mxu0 %v1750
        %1767 = vmatprep.subr.bf16.mxu0 0
        %1768 = vmatpush1.bf16.msra.mxu0 %v1749
        %1769 = vmatprep.subr.bf16.mxu0 0
        %1770 = vmatpush1.bf16.msra.mxu0 %v1748
        %1771 = vmatprep.subr.bf16.mxu0 0
        %1772 = vmatpush1.bf16.msra.mxu0 %v1747
        %1773 = vmatprep.subr.bf16.mxu0 0
        %1774 = vmatpush1.bf16.msra.mxu0 %v1746
        %1775 = vmatprep.subr.bf16.mxu0 0
        %1776 = vmatpush1.bf16.msra.mxu0 %v1745
        %1777 = vmatprep.subr.bf16.mxu0 0
        %1778 = vmatpush2.bf16.msra.mxu0 0
        %1779 = vmatprep.subr.bf16.mxu0 0
        %1780 = vmatpush2.bf16.msra.mxu0 0
        %1781 = vmatprep.subr.bf16.mxu0 0
        %1782 = vmatpush2.bf16.msra.mxu0 0
        %1783 = vmatprep.subr.bf16.mxu0 0
        %1784 = vmatpush2.bf16.msra.mxu0 0
        %1785 = vmatprep.subr.bf16.mxu0 0
        %1786 = vmatpush2.bf16.msra.mxu0 0
        %1787 = vmatprep.subr.bf16.mxu0 0
        %1788 = vmatpush2.bf16.msra.mxu0 0
        %1789 = vmatprep.subr.bf16.mxu0 0
        %1790 = vmatpush2.bf16.msra.mxu0 0
        %1791 = vmatprep.subr.bf16.mxu0 0
        %1792 = vmatpush2.bf16.msra.mxu0 0
        %1793 = vmatprep.mubr.bf16.mxu0 0
        %1794 = vmatmul.mubr.bf16.gmra.mxu0 %v1705
        %v1795 = vpop.f32.mrf.mxu0
        %v1796 = vadd.f32 %v1711, %v1795
        %v1797 = vpop.f32.mrf.mxu0
        %v1798 = vpop.f32.mrf.mxu0
        %v1799 = vpop.f32.mrf.mxu0
        %1800 = vdwg.mxu0
        %v1801 = vrot.slane %v1796, 4
        %v1802 = vadd.f32 %v1796, %v1801
        %v1803 = vrot.slane %v1802, 2
        %v1804 = vadd.f32 %v1802, %v1803
        %v1805 = vrot.slane %v1804, 1
        %v1806 = vadd.f32 %v1804, %v1805
        %v1807 = vmul.f32 %v1806, %v1648
        %v1808 = vsub.f32 %v1796, %v1807
        %v1809 = vmul.f32 %v1808, %v1808
        %v1810 = vrot.slane %v1809, 4
        %v1811 = vadd.f32 %v1809, %v1810
        %v1812 = vrot.slane %v1811, 2
        %v1813 = vadd.f32 %v1811, %v1812
        %v1814 = vrot.slane %v1813, 1
        %v1815 = vadd.f32 %v1813, %v1814
        %v1816 = vmul.f32 %v1815, %v1648
        %v1817 = vadd.f32 %v1816, 1e-05
        %v1818 = vrsqrt.pop %v1817
        %v1819 = vmul.f32 %v1808, %v1818
        %v1820 = vld [vmem:[#allocation14] sm:$0x1]
        %v1822 = vlaneseq
        %v1823 = vshrl.u32 %v1822, 7
        %v1824 = vsub.s32 0, %v1823
        %v1825 = vrot.slane %v1820, %v1824
        %v1827 = vmul.f32 %v1819, %v1825
        %v1828 = vld [vmem:[#allocation16] sm:$0x1]
        %v1830 = vlaneseq
        %v1831 = vshrl.u32 %v1830, 7
        %v1832 = vsub.s32 0, %v1831
        %v1833 = vrot.slane %v1828, %v1832
        %v1835 = vadd.f32 %v1827, %v1833
        %vm1836 = vcmp.gt.f32.partialorder %v1835, 0.0
        %v1837 = vmin.f32 %v1835, 0.0
        %v1838 = vmul.f32 %v1837, 1.442695
        %v1839 = vpow.pop %v1838
        %v1840 = vsub.f32 %v1839, 1.0
        %v1841 = vsel %vm1836, %v1835, %v1840
        %v1842 = vld [vmem:[%s1519] sm:$0x3]
        %v1843 = vunpack.c.0.s8 %v1842
        %v1844 = vcvt.s32.f32 %v1843
        %v1845 = vmul.f32 %v1844, 2.0
        %v1846 = vmul.f32 %v1841, %v1845
        %v1847 = vld [vmem:[#allocation17] sm:$0xf]
        %v1848 = vld [vmem:[#allocation17 + $0x4] sm:$0xf]
        %v1849 = vld [vmem:[#allocation17 + $0x8] sm:$0xf]
        %v1850 = vld [vmem:[#allocation17 + $0xc] sm:$0xf]
        %v1851 = vld [vmem:[#allocation17 + $0x10] sm:$0xf]
        %v1852 = vld [vmem:[#allocation17 + $0x14] sm:$0xf]
        %v1853 = vld [vmem:[#allocation17 + $0x18] sm:$0xf]
        %v1854 = vld [vmem:[#allocation17 + $0x1c] sm:$0xf]
        %v1855 = vld [vmem:[#allocation17 + $0x20] sm:$0xf]
        %v1856 = vld [vmem:[#allocation17 + $0x24] sm:$0xf]
        %v1857 = vld [vmem:[#allocation17 + $0x28] sm:$0xf]
        %v1858 = vld [vmem:[#allocation17 + $0x2c] sm:$0xf]
        %v1859 = vld [vmem:[#allocation17 + $0x30] sm:$0xf]
        %v1860 = vld [vmem:[#allocation17 + $0x34] sm:$0xf]
        %v1861 = vld [vmem:[#allocation17 + $0x38] sm:$0xf]
        %v1862 = vld [vmem:[#allocation17 + $0x3c] sm:$0xf]
        %v1863 = vpack.c.bf16 %v1846, %v1846
        %v1864 = vld [vmem:[%s21] sm:$0x1]
        %v1866 = vlaneseq
        %v1867 = vshrl.u32 %v1866, 7
        %v1868 = vsub.s32 0, %v1867
        %v1869 = vrot.slane %v1864, %v1868
        %v1887 = vunpack.c.l.b16 %v1847
        %v1888 = vunpack.c.l.b16 %v1848
        %v1889 = vunpack.c.l.b16 %v1849
        %v1890 = vunpack.c.l.b16 %v1850
        %v1891 = vunpack.c.l.b16 %v1851
        %v1892 = vunpack.c.l.b16 %v1852
        %v1893 = vunpack.c.l.b16 %v1853
        %v1894 = vunpack.c.l.b16 %v1854
        %v1895 = vunpack.c.l.b16 %v1855
        %v1896 = vunpack.c.l.b16 %v1856
        %v1897 = vunpack.c.l.b16 %v1857
        %v1898 = vunpack.c.l.b16 %v1858
        %v1899 = vunpack.c.l.b16 %v1859
        %v1900 = vunpack.c.l.b16 %v1860
        %v1901 = vunpack.c.l.b16 %v1861
        %v1902 = vunpack.c.l.b16 %v1862
        %v1903 = vpack.c.b16 %v1888, %v1887
        %v1904 = vpack.c.b16 %v1890, %v1889
        %v1905 = vpack.c.b16 %v1892, %v1891
        %v1906 = vpack.c.b16 %v1894, %v1893
        %v1907 = vpack.c.b16 %v1896, %v1895
        %v1908 = vpack.c.b16 %v1898, %v1897
        %v1909 = vpack.c.b16 %v1900, %v1899
        %v1910 = vpack.c.b16 %v1902, %v1901
        %1919 = vmatprep.subr.bf16.mxu0 0
        %1920 = vmatpush1.bf16.msra.mxu0 %v1910
        %1921 = vmatprep.subr.bf16.mxu0 0
        %1922 = vmatpush1.bf16.msra.mxu0 %v1909
        %1923 = vmatprep.subr.bf16.mxu0 0
        %1924 = vmatpush1.bf16.msra.mxu0 %v1908
        %1925 = vmatprep.subr.bf16.mxu0 0
        %1926 = vmatpush1.bf16.msra.mxu0 %v1907
        %1927 = vmatprep.subr.bf16.mxu0 0
        %1928 = vmatpush1.bf16.msra.mxu0 %v1906
        %1929 = vmatprep.subr.bf16.mxu0 0
        %1930 = vmatpush1.bf16.msra.mxu0 %v1905
        %1931 = vmatprep.subr.bf16.mxu0 0
        %1932 = vmatpush1.bf16.msra.mxu0 %v1904
        %1933 = vmatprep.subr.bf16.mxu0 0
        %1934 = vmatpush1.bf16.msra.mxu0 %v1903
        %1935 = vmatprep.subr.bf16.mxu0 0
        %1936 = vmatpush2.bf16.msra.mxu0 0
        %1937 = vmatprep.subr.bf16.mxu0 0
        %1938 = vmatpush2.bf16.msra.mxu0 0
        %1939 = vmatprep.subr.bf16.mxu0 0
        %1940 = vmatpush2.bf16.msra.mxu0 0
        %1941 = vmatprep.subr.bf16.mxu0 0
        %1942 = vmatpush2.bf16.msra.mxu0 0
        %1943 = vmatprep.subr.bf16.mxu0 0
        %1944 = vmatpush2.bf16.msra.mxu0 0
        %1945 = vmatprep.subr.bf16.mxu0 0
        %1946 = vmatpush2.bf16.msra.mxu0 0
        %1947 = vmatprep.subr.bf16.mxu0 0
        %1948 = vmatpush2.bf16.msra.mxu0 0
        %1949 = vmatprep.subr.bf16.mxu0 0
        %1950 = vmatpush2.bf16.msra.mxu0 0
        %1951 = vmatprep.mubr.bf16.mxu0 0
        %1952 = vmatmul.mubr.bf16.gmra.mxu0 %v1863
        %v1953 = vpop.f32.mrf.mxu0
        %v1954 = vadd.f32 %v1869, %v1953
        %v1955 = vpop.f32.mrf.mxu0
        %v1956 = vpop.f32.mrf.mxu0
        %v1957 = vpop.f32.mrf.mxu0
        %1958 = vdwg.mxu0
        %v1959 = vrot.slane %v1954, 4
        %v1960 = vadd.f32 %v1954, %v1959
        %v1961 = vrot.slane %v1960, 2
        %v1962 = vadd.f32 %v1960, %v1961
        %v1963 = vrot.slane %v1962, 1
        %v1964 = vadd.f32 %v1962, %v1963
        %v1965 = vmul.f32 %v1964, %v1648
        %v1966 = vsub.f32 %v1954, %v1965
        %v1967 = vmul.f32 %v1966, %v1966
        %v1968 = vrot.slane %v1967, 4
        %v1969 = vadd.f32 %v1967, %v1968
        %v1970 = vrot.slane %v1969, 2
        %v1971 = vadd.f32 %v1969, %v1970
        %v1972 = vrot.slane %v1971, 1
        %v1973 = vadd.f32 %v1971, %v1972
        %v1974 = vmul.f32 %v1973, %v1648
        %v1975 = vadd.f32 %v1974, 1e-05
        %v1976 = vrsqrt.pop %v1975
        %v1977 = vmul.f32 %v1966, %v1976
        %v1978 = vld [vmem:[%s23] sm:$0x1]
        %v1980 = vlaneseq
        %v1981 = vshrl.u32 %v1980, 7
        %v1982 = vsub.s32 0, %v1981
        %v1983 = vrot.slane %v1978, %v1982
        %v1985 = vmul.f32 %v1977, %v1983
        %v1986 = vld [vmem:[%s25] sm:$0x1]
        %v1988 = vlaneseq
        %v1989 = vshrl.u32 %v1988, 7
        %v1990 = vsub.s32 0, %v1989
        %v1991 = vrot.slane %v1986, %v1990
        %v1993 = vadd.f32 %v1985, %v1991
        %vm1994 = vcmp.gt.f32.partialorder %v1993, 0.0
        %v1995 = vmin.f32 %v1993, 0.0
        %v1996 = vmul.f32 %v1995, 1.442695
        %v1997 = vpow.pop %v1996
        %v1998 = vsub.f32 %v1997, 1.0
        %v1999 = vsel %vm1994, %v1993, %v1998
        %v2000 = vld [vmem:[#allocation19] sm:$0xf]
        %v2001 = vld [vmem:[#allocation19 + $0x4] sm:$0xf]
        %v2002 = vld [vmem:[#allocation19 + $0x8] sm:$0xf]
        %v2003 = vld [vmem:[#allocation19 + $0xc] sm:$0xf]
        %v2004 = vld [vmem:[#allocation19 + $0x10] sm:$0xf]
        %v2005 = vld [vmem:[#allocation19 + $0x14] sm:$0xf]
        %v2006 = vld [vmem:[#allocation19 + $0x18] sm:$0xf]
        %v2007 = vld [vmem:[#allocation19 + $0x1c] sm:$0xf]
        %v2008 = vld [vmem:[#allocation19 + $0x20] sm:$0xf]
        %v2009 = vld [vmem:[#allocation19 + $0x24] sm:$0xf]
        %v2010 = vld [vmem:[#allocation19 + $0x28] sm:$0xf]
        %v2011 = vld [vmem:[#allocation19 + $0x2c] sm:$0xf]
        %v2012 = vld [vmem:[#allocation19 + $0x30] sm:$0xf]
        %v2013 = vld [vmem:[#allocation19 + $0x34] sm:$0xf]
        %v2014 = vld [vmem:[#allocation19 + $0x38] sm:$0xf]
        %v2015 = vld [vmem:[#allocation19 + $0x3c] sm:$0xf]
        %v2016 = vpack.c.bf16 %v1999, %v1999
        %v2017 = vld [vmem:[%s29] sm:$0x1]
        %v2019 = vlaneseq
        %v2020 = vshrl.u32 %v2019, 7
        %v2021 = vsub.s32 0, %v2020
        %v2022 = vrot.slane %v2017, %v2021
        %v2040 = vunpack.c.l.b16 %v2000
        %v2041 = vunpack.c.l.b16 %v2001
        %v2042 = vunpack.c.l.b16 %v2002
        %v2043 = vunpack.c.l.b16 %v2003
        %v2044 = vunpack.c.l.b16 %v2004
        %v2045 = vunpack.c.l.b16 %v2005
        %v2046 = vunpack.c.l.b16 %v2006
        %v2047 = vunpack.c.l.b16 %v2007
        %v2048 = vunpack.c.l.b16 %v2008
        %v2049 = vunpack.c.l.b16 %v2009
        %v2050 = vunpack.c.l.b16 %v2010
        %v2051 = vunpack.c.l.b16 %v2011
        %v2052 = vunpack.c.l.b16 %v2012
        %v2053 = vunpack.c.l.b16 %v2013
        %v2054 = vunpack.c.l.b16 %v2014
        %v2055 = vunpack.c.l.b16 %v2015
        %v2056 = vpack.c.b16 %v2041, %v2040
        %v2057 = vpack.c.b16 %v2043, %v2042
        %v2058 = vpack.c.b16 %v2045, %v2044
        %v2059 = vpack.c.b16 %v2047, %v2046
        %v2060 = vpack.c.b16 %v2049, %v2048
        %v2061 = vpack.c.b16 %v2051, %v2050
        %v2062 = vpack.c.b16 %v2053, %v2052
        %v2063 = vpack.c.b16 %v2055, %v2054
        %2072 = vmatprep.subr.bf16.mxu0 0
        %2073 = vmatpush1.bf16.msra.mxu0 %v2063
        %2074 = vmatprep.subr.bf16.mxu0 0
        %2075 = vmatpush1.bf16.msra.mxu0 %v2062
        %2076 = vmatprep.subr.bf16.mxu0 0
        %2077 = vmatpush1.bf16.msra.mxu0 %v2061
        %2078 = vmatprep.subr.bf16.mxu0 0
        %2079 = vmatpush1.bf16.msra.mxu0 %v2060
        %2080 = vmatprep.subr.bf16.mxu0 0
        %2081 = vmatpush1.bf16.msra.mxu0 %v2059
        %2082 = vmatprep.subr.bf16.mxu0 0
        %2083 = vmatpush1.bf16.msra.mxu0 %v2058
        %2084 = vmatprep.subr.bf16.mxu0 0
        %2085 = vmatpush1.bf16.msra.mxu0 %v2057
        %2086 = vmatprep.subr.bf16.mxu0 0
        %2087 = vmatpush1.bf16.msra.mxu0 %v2056
        %2088 = vmatprep.subr.bf16.mxu0 0
        %2089 = vmatpush2.bf16.msra.mxu0 0
        %2090 = vmatprep.subr.bf16.mxu0 0
        %2091 = vmatpush2.bf16.msra.mxu0 0
        %2092 = vmatprep.subr.bf16.mxu0 0
        %2093 = vmatpush2.bf16.msra.mxu0 0
        %2094 = vmatprep.subr.bf16.mxu0 0
        %2095 = vmatpush2.bf16.msra.mxu0 0
        %2096 = vmatprep.subr.bf16.mxu0 0
        %2097 = vmatpush2.bf16.msra.mxu0 0
        %2098 = vmatprep.subr.bf16.mxu0 0
        %2099 = vmatpush2.bf16.msra.mxu0 0
        %2100 = vmatprep.subr.bf16.mxu0 0
        %2101 = vmatpush2.bf16.msra.mxu0 0
        %2102 = vmatprep.subr.bf16.mxu0 0
        %2103 = vmatpush2.bf16.msra.mxu0 0
        %2104 = vmatprep.mubr.bf16.mxu0 0
        %2105 = vmatmul.mubr.bf16.gmra.mxu0 %v2016
        %v2106 = vpop.f32.mrf.mxu0
        %v2107 = vadd.f32 %v2022, %v2106
        %v2108 = vpop.f32.mrf.mxu0
        %v2109 = vpop.f32.mrf.mxu0
        %v2110 = vpop.f32.mrf.mxu0
        %2111 = vdwg.mxu0
        %v2112 = vrot.slane %v2107, 4
        %v2113 = vadd.f32 %v2107, %v2112
        %v2114 = vrot.slane %v2113, 2
        %v2115 = vadd.f32 %v2113, %v2114
        %v2116 = vrot.slane %v2115, 1
        %v2117 = vadd.f32 %v2115, %v2116
        %v2118 = vmul.f32 %v2117, %v1648
        %v2119 = vsub.f32 %v2107, %v2118
        %v2120 = vmul.f32 %v2119, %v2119
        %v2121 = vrot.slane %v2120, 4
        %v2122 = vadd.f32 %v2120, %v2121
        %v2123 = vrot.slane %v2122, 2
        %v2124 = vadd.f32 %v2122, %v2123
        %v2125 = vrot.slane %v2124, 1
        %v2126 = vadd.f32 %v2124, %v2125
        %v2127 = vmul.f32 %v2126, %v1648
        %v2128 = vadd.f32 %v2127, 1e-05
        %v2129 = vrsqrt.pop %v2128
        %v2130 = vmul.f32 %v2119, %v2129
        %v2131 = vld [vmem:[%s31] sm:$0x1]
        %v2133 = vlaneseq
        %v2134 = vshrl.u32 %v2133, 7
        %v2135 = vsub.s32 0, %v2134
        %v2136 = vrot.slane %v2131, %v2135
        %v2138 = vmul.f32 %v2130, %v2136
        %v2139 = vld [vmem:[%s33] sm:$0x1]
        %v2141 = vlaneseq
        %v2142 = vshrl.u32 %v2141, 7
        %v2143 = vsub.s32 0, %v2142
        %v2144 = vrot.slane %v2139, %v2143
        %v2146 = vadd.f32 %v2138, %v2144
        %v2147 = vsub.f32 0.0, %v2146
        %v2148 = vmul.f32 %v2147, 1.442695
        %v2149 = vpow.pop %v2148
        %v2150 = vadd.f32 %v2149, 1.0
        %v2151 = vrcp.pop %v2150
        %v2152 = vld [vmem:[%s1523] sm:$0x3]
        %v2153 = vunpack.c.0.s8 %v2152
        %v2154 = vcvt.s32.f32 %v2153
        %v2155 = vmul.f32 %v2154, 2.0
        %v2156 = vmul.f32 %v2151, %v2155
        %v2157 = vld [vmem:[#allocation20] sm:$0xf]
        %v2158 = vld [vmem:[#allocation20 + $0x4] sm:$0xf]
        %v2159 = vld [vmem:[#allocation20 + $0x8] sm:$0xf]
        %v2160 = vld [vmem:[#allocation20 + $0xc] sm:$0xf]
        %v2161 = vld [vmem:[#allocation20 + $0x10] sm:$0xf]
        %v2162 = vld [vmem:[#allocation20 + $0x14] sm:$0xf]
        %v2163 = vld [vmem:[#allocation20 + $0x18] sm:$0xf]
        %v2164 = vld [vmem:[#allocation20 + $0x1c] sm:$0xf]
        %v2165 = vld [vmem:[#allocation20 + $0x20] sm:$0xf]
        %v2166 = vld [vmem:[#allocation20 + $0x24] sm:$0xf]
        %v2167 = vld [vmem:[#allocation20 + $0x28] sm:$0xf]
        %v2168 = vld [vmem:[#allocation20 + $0x2c] sm:$0xf]
        %v2169 = vld [vmem:[#allocation20 + $0x30] sm:$0xf]
        %v2170 = vld [vmem:[#allocation20 + $0x34] sm:$0xf]
        %v2171 = vld [vmem:[#allocation20 + $0x38] sm:$0xf]
        %v2172 = vld [vmem:[#allocation20 + $0x3c] sm:$0xf]
        %v2173 = vpack.c.bf16 %v2156, %v2156
        %v2174 = vld [vmem:[%s37] sm:$0x1]
        %v2176 = vlaneseq
        %v2177 = vshrl.u32 %v2176, 7
        %v2178 = vsub.s32 0, %v2177
        %v2179 = vrot.slane %v2174, %v2178
        %v2197 = vunpack.c.l.b16 %v2157
        %v2198 = vunpack.c.l.b16 %v2158
        %v2199 = vunpack.c.l.b16 %v2159
        %v2200 = vunpack.c.l.b16 %v2160
        %v2201 = vunpack.c.l.b16 %v2161
        %v2202 = vunpack.c.l.b16 %v2162
        %v2203 = vunpack.c.l.b16 %v2163
        %v2204 = vunpack.c.l.b16 %v2164
        %v2205 = vunpack.c.l.b16 %v2165
        %v2206 = vunpack.c.l.b16 %v2166
        %v2207 = vunpack.c.l.b16 %v2167
        %v2208 = vunpack.c.l.b16 %v2168
        %v2209 = vunpack.c.l.b16 %v2169
        %v2210 = vunpack.c.l.b16 %v2170
        %v2211 = vunpack.c.l.b16 %v2171
        %v2212 = vunpack.c.l.b16 %v2172
        %v2213 = vpack.c.b16 %v2198, %v2197
        %v2214 = vpack.c.b16 %v2200, %v2199
        %v2215 = vpack.c.b16 %v2202, %v2201
        %v2216 = vpack.c.b16 %v2204, %v2203
        %v2217 = vpack.c.b16 %v2206, %v2205
        %v2218 = vpack.c.b16 %v2208, %v2207
        %v2219 = vpack.c.b16 %v2210, %v2209
        %v2220 = vpack.c.b16 %v2212, %v2211
        %2229 = vmatprep.subr.bf16.mxu0 0
        %2230 = vmatpush1.bf16.msra.mxu0 %v2220
        %2231 = vmatprep.subr.bf16.mxu0 0
        %2232 = vmatpush1.bf16.msra.mxu0 %v2219
        %2233 = vmatprep.subr.bf16.mxu0 0
        %2234 = vmatpush1.bf16.msra.mxu0 %v2218
        %2235 = vmatprep.subr.bf16.mxu0 0
        %2236 = vmatpush1.bf16.msra.mxu0 %v2217
        %2237 = vmatprep.subr.bf16.mxu0 0
        %2238 = vmatpush1.bf16.msra.mxu0 %v2216
        %2239 = vmatprep.subr.bf16.mxu0 0
        %2240 = vmatpush1.bf16.msra.mxu0 %v2215
        %2241 = vmatprep.subr.bf16.mxu0 0
        %2242 = vmatpush1.bf16.msra.mxu0 %v2214
        %2243 = vmatprep.subr.bf16.mxu0 0
        %2244 = vmatpush1.bf16.msra.mxu0 %v2213
        %2245 = vmatprep.subr.bf16.mxu0 0
        %2246 = vmatpush2.bf16.msra.mxu0 0
        %2247 = vmatprep.subr.bf16.mxu0 0
        %2248 = vmatpush2.bf16.msra.mxu0 0
        %2249 = vmatprep.subr.bf16.mxu0 0
        %2250 = vmatpush2.bf16.msra.mxu0 0
        %2251 = vmatprep.subr.bf16.mxu0 0
        %2252 = vmatpush2.bf16.msra.mxu0 0
        %2253 = vmatprep.subr.bf16.mxu0 0
        %2254 = vmatpush2.bf16.msra.mxu0 0
        %2255 = vmatprep.subr.bf16.mxu0 0
        %2256 = vmatpush2.bf16.msra.mxu0 0
        %2257 = vmatprep.subr.bf16.mxu0 0
        %2258 = vmatpush2.bf16.msra.mxu0 0
        %2259 = vmatprep.subr.bf16.mxu0 0
        %2260 = vmatpush2.bf16.msra.mxu0 0
        %2261 = vmatprep.mubr.bf16.mxu0 0
        %2262 = vmatmul.mubr.bf16.gmra.mxu0 %v2173
        %v2263 = vpop.f32.mrf.mxu0
        %v2264 = vadd.f32 %v2179, %v2263
        %v2265 = vpop.f32.mrf.mxu0
        %v2266 = vpop.f32.mrf.mxu0
        %v2267 = vpop.f32.mrf.mxu0
        %2268 = vdwg.mxu0
        %v2269 = vrot.slane %v2264, 4
        %v2270 = vadd.f32 %v2264, %v2269
        %v2271 = vrot.slane %v2270, 2
        %v2272 = vadd.f32 %v2270, %v2271
        %v2273 = vrot.slane %v2272, 1
        %v2274 = vadd.f32 %v2272, %v2273
        %v2275 = vmul.f32 %v2274, %v1648
        %v2276 = vsub.f32 %v2264, %v2275
        %v2277 = vmul.f32 %v2276, %v2276
        %v2278 = vrot.slane %v2277, 4
        %v2279 = vadd.f32 %v2277, %v2278
        %v2280 = vrot.slane %v2279, 2
        %v2281 = vadd.f32 %v2279, %v2280
        %v2282 = vrot.slane %v2281, 1
        %v2283 = vadd.f32 %v2281, %v2282
        %v2284 = vmul.f32 %v2283, %v1648
        %v2285 = vadd.f32 %v2284, 1e-05
        %v2286 = vrsqrt.pop %v2285
        %v2287 = vmul.f32 %v2276, %v2286
        %v2288 = vld [vmem:[%s39] sm:$0x1]
        %v2290 = vlaneseq
        %v2291 = vshrl.u32 %v2290, 7
        %v2292 = vsub.s32 0, %v2291
        %v2293 = vrot.slane %v2288, %v2292
        %v2295 = vmul.f32 %v2287, %v2293
        %v2296 = vld [vmem:[%s41] sm:$0x1]
        %v2298 = vlaneseq
        %v2299 = vshrl.u32 %v2298, 7
        %v2300 = vsub.s32 0, %v2299
        %v2301 = vrot.slane %v2296, %v2300
        %v2303 = vadd.f32 %v2295, %v2301
        %v2304 = vsub.f32 0.0, %v2303
        %v2305 = vmul.f32 %v2304, 1.442695
        %v2306 = vpow.pop %v2305
        %v2307 = vadd.f32 %v2306, 1.0
        %v2308 = vrcp.pop %v2307
        %v2309 = vld [vmem:[%s1527] sm:$0x3]
        %v2310 = vunpack.c.0.s8 %v2309
        %v2311 = vcvt.s32.f32 %v2310
        %v2312 = vmul.f32 %v2311, 2.0
        %v2313 = vmul.f32 %v2308, %v2312
        %v2314 = vld [vmem:[#allocation22] sm:$0xf]
        %v2315 = vld [vmem:[#allocation22 + $0x4] sm:$0xf]
        %v2316 = vld [vmem:[#allocation22 + $0x8] sm:$0xf]
        %v2317 = vld [vmem:[#allocation22 + $0xc] sm:$0xf]
        %v2318 = vld [vmem:[#allocation22 + $0x10] sm:$0xf]
        %v2319 = vld [vmem:[#allocation22 + $0x14] sm:$0xf]
        %v2320 = vld [vmem:[#allocation22 + $0x18] sm:$0xf]
        %v2321 = vld [vmem:[#allocation22 + $0x1c] sm:$0xf]
        %v2322 = vld [vmem:[#allocation22 + $0x20] sm:$0xf]
        %v2323 = vld [vmem:[#allocation22 + $0x24] sm:$0xf]
        %v2324 = vld [vmem:[#allocation22 + $0x28] sm:$0xf]
        %v2325 = vld [vmem:[#allocation22 + $0x2c] sm:$0xf]
        %v2326 = vld [vmem:[#allocation22 + $0x30] sm:$0xf]
        %v2327 = vld [vmem:[#allocation22 + $0x34] sm:$0xf]
        %v2328 = vld [vmem:[#allocation22 + $0x38] sm:$0xf]
        %v2329 = vld [vmem:[#allocation22 + $0x3c] sm:$0xf]
        %v2330 = vpack.c.bf16 %v2313, %v2313
        %v2331 = vld [vmem:[%s45] sm:$0x1]
        %v2333 = vlaneseq
        %v2334 = vshrl.u32 %v2333, 7
        %v2335 = vsub.s32 0, %v2334
        %v2336 = vrot.slane %v2331, %v2335
        %v2354 = vunpack.c.l.b16 %v2314
        %v2355 = vunpack.c.l.b16 %v2315
        %v2356 = vunpack.c.l.b16 %v2316
        %v2357 = vunpack.c.l.b16 %v2317
        %v2358 = vunpack.c.l.b16 %v2318
        %v2359 = vunpack.c.l.b16 %v2319
        %v2360 = vunpack.c.l.b16 %v2320
        %v2361 = vunpack.c.l.b16 %v2321
        %v2362 = vunpack.c.l.b16 %v2322
        %v2363 = vunpack.c.l.b16 %v2323
        %v2364 = vunpack.c.l.b16 %v2324
        %v2365 = vunpack.c.l.b16 %v2325
        %v2366 = vunpack.c.l.b16 %v2326
        %v2367 = vunpack.c.l.b16 %v2327
        %v2368 = vunpack.c.l.b16 %v2328
        %v2369 = vunpack.c.l.b16 %v2329
        %v2370 = vpack.c.b16 %v2355, %v2354
        %v2371 = vpack.c.b16 %v2357, %v2356
        %v2372 = vpack.c.b16 %v2359, %v2358
        %v2373 = vpack.c.b16 %v2361, %v2360
        %v2374 = vpack.c.b16 %v2363, %v2362
        %v2375 = vpack.c.b16 %v2365, %v2364
        %v2376 = vpack.c.b16 %v2367, %v2366
        %v2377 = vpack.c.b16 %v2369, %v2368
        %2386 = vmatprep.subr.bf16.mxu0 0
        %2387 = vmatpush1.bf16.msra.mxu0 %v2377
        %2388 = vmatprep.subr.bf16.mxu0 0
        %2389 = vmatpush1.bf16.msra.mxu0 %v2376
        %2390 = vmatprep.subr.bf16.mxu0 0
        %2391 = vmatpush1.bf16.msra.mxu0 %v2375
        %2392 = vmatprep.subr.bf16.mxu0 0
        %2393 = vmatpush1.bf16.msra.mxu0 %v2374
        %2394 = vmatprep.subr.bf16.mxu0 0
        %2395 = vmatpush1.bf16.msra.mxu0 %v2373
        %2396 = vmatprep.subr.bf16.mxu0 0
        %2397 = vmatpush1.bf16.msra.mxu0 %v2372
        %2398 = vmatprep.subr.bf16.mxu0 0
        %2399 = vmatpush1.bf16.msra.mxu0 %v2371
        %2400 = vmatprep.subr.bf16.mxu0 0
        %2401 = vmatpush1.bf16.msra.mxu0 %v2370
        %2402 = vmatprep.subr.bf16.mxu0 0
        %2403 = vmatpush2.bf16.msra.mxu0 0
        %2404 = vmatprep.subr.bf16.mxu0 0
        %2405 = vmatpush2.bf16.msra.mxu0 0
        %2406 = vmatprep.subr.bf16.mxu0 0
        %2407 = vmatpush2.bf16.msra.mxu0 0
        %2408 = vmatprep.subr.bf16.mxu0 0
        %2409 = vmatpush2.bf16.msra.mxu0 0
        %2410 = vmatprep.subr.bf16.mxu0 0
        %2411 = vmatpush2.bf16.msra.mxu0 0
        %2412 = vmatprep.subr.bf16.mxu0 0
        %2413 = vmatpush2.bf16.msra.mxu0 0
        %2414 = vmatprep.subr.bf16.mxu0 0
        %2415 = vmatpush2.bf16.msra.mxu0 0
        %2416 = vmatprep.subr.bf16.mxu0 0
        %2417 = vmatpush2.bf16.msra.mxu0 0
        %2418 = vmatprep.mubr.bf16.mxu0 0
        %2419 = vmatmul.mubr.bf16.gmra.mxu0 %v2330
        %v2420 = vpop.f32.mrf.mxu0
        %v2421 = vadd.f32 %v2336, %v2420
        %v2422 = vpop.f32.mrf.mxu0
        %v2423 = vpop.f32.mrf.mxu0
        %v2424 = vpop.f32.mrf.mxu0
        %2425 = vdwg.mxu0
        %v2426 = vrot.slane %v2421, 4
        %v2427 = vadd.f32 %v2421, %v2426
        %v2428 = vrot.slane %v2427, 2
        %v2429 = vadd.f32 %v2427, %v2428
        %v2430 = vrot.slane %v2429, 1
        %v2431 = vadd.f32 %v2429, %v2430
        %v2432 = vmul.f32 %v2431, %v1648
        %v2433 = vsub.f32 %v2421, %v2432
        %v2434 = vmul.f32 %v2433, %v2433
        %v2435 = vrot.slane %v2434, 4
        %v2436 = vadd.f32 %v2434, %v2435
        %v2437 = vrot.slane %v2436, 2
        %v2438 = vadd.f32 %v2436, %v2437
        %v2439 = vrot.slane %v2438, 1
        %v2440 = vadd.f32 %v2438, %v2439
        %v2441 = vmul.f32 %v2440, %v1648
        %v2442 = vadd.f32 %v2441, 1e-05
        %v2443 = vrsqrt.pop %v2442
        %v2444 = vmul.f32 %v2433, %v2443
        %v2445 = vld [vmem:[%s47] sm:$0x1]
        %v2447 = vlaneseq
        %v2448 = vshrl.u32 %v2447, 7
        %v2449 = vsub.s32 0, %v2448
        %v2450 = vrot.slane %v2445, %v2449
        %v2452 = vmul.f32 %v2444, %v2450
        %v2453 = vld [vmem:[%s49] sm:$0x1]
        %v2455 = vlaneseq
        %v2456 = vshrl.u32 %v2455, 7
        %v2457 = vsub.s32 0, %v2456
        %v2458 = vrot.slane %v2453, %v2457
        %v2460 = vadd.f32 %v2452, %v2458
        %v2461 = vsub.f32 0.0, %v2460
        %v2462 = vmul.f32 %v2461, 1.442695
        %v2463 = vpow.pop %v2462
        %v2464 = vadd.f32 %v2463, 1.0
        %v2465 = vrcp.pop %v2464
        %v2466 = vld [vmem:[#allocation23] sm:$0xf]
        %v2467 = vld [vmem:[#allocation23 + $0x4] sm:$0xf]
        %v2468 = vld [vmem:[#allocation23 + $0x8] sm:$0xf]
        %v2469 = vld [vmem:[#allocation23 + $0xc] sm:$0xf]
        %v2470 = vld [vmem:[#allocation23 + $0x10] sm:$0xf]
        %v2471 = vld [vmem:[#allocation23 + $0x14] sm:$0xf]
        %v2472 = vld [vmem:[#allocation23 + $0x18] sm:$0xf]
        %v2473 = vld [vmem:[#allocation23 + $0x1c] sm:$0xf]
        %v2474 = vld [vmem:[#allocation23 + $0x20] sm:$0xf]
        %v2475 = vld [vmem:[#allocation23 + $0x24] sm:$0xf]
        %v2476 = vld [vmem:[#allocation23 + $0x28] sm:$0xf]
        %v2477 = vld [vmem:[#allocation23 + $0x2c] sm:$0xf]
        %v2478 = vld [vmem:[#allocation23 + $0x30] sm:$0xf]
        %v2479 = vld [vmem:[#allocation23 + $0x34] sm:$0xf]
        %v2480 = vld [vmem:[#allocation23 + $0x38] sm:$0xf]
        %v2481 = vld [vmem:[#allocation23 + $0x3c] sm:$0xf]
        %v2482 = vld [vmem:[%s53] sm:$0x1]
        %v2484 = vlaneseq
        %v2485 = vshrl.u32 %v2484, 7
        %v2486 = vsub.s32 0, %v2485
        %v2487 = vrot.slane %v2482, %v2486
        %v2505 = vunpack.c.l.b16 %v2466
        %v2506 = vunpack.c.l.b16 %v2467
        %v2507 = vunpack.c.l.b16 %v2468
        %v2508 = vunpack.c.l.b16 %v2469
        %v2509 = vunpack.c.l.b16 %v2470
        %v2510 = vunpack.c.l.b16 %v2471
        %v2511 = vunpack.c.l.b16 %v2472
        %v2512 = vunpack.c.l.b16 %v2473
        %v2513 = vunpack.c.l.b16 %v2474
        %v2514 = vunpack.c.l.b16 %v2475
        %v2515 = vunpack.c.l.b16 %v2476
        %v2516 = vunpack.c.l.b16 %v2477
        %v2517 = vunpack.c.l.b16 %v2478
        %v2518 = vunpack.c.l.b16 %v2479
        %v2519 = vunpack.c.l.b16 %v2480
        %v2520 = vunpack.c.l.b16 %v2481
        %v2521 = vpack.c.b16 %v2506, %v2505
        %v2522 = vpack.c.b16 %v2508, %v2507
        %v2523 = vpack.c.b16 %v2510, %v2509
        %v2524 = vpack.c.b16 %v2512, %v2511
        %v2525 = vpack.c.b16 %v2514, %v2513
        %v2526 = vpack.c.b16 %v2516, %v2515
        %v2527 = vpack.c.b16 %v2518, %v2517
        %v2528 = vpack.c.b16 %v2520, %v2519
        %2537 = vmatprep.subr.bf16.mxu0 0
        %2538 = vmatpush1.bf16.msra.mxu0 %v2528
        %2539 = vmatprep.subr.bf16.mxu0 0
        %2540 = vmatpush1.bf16.msra.mxu0 %v2527
        %2541 = vmatprep.subr.bf16.mxu0 0
        %2542 = vmatpush1.bf16.msra.mxu0 %v2526
        %2543 = vmatprep.subr.bf16.mxu0 0
        %2544 = vmatpush1.bf16.msra.mxu0 %v2525
        %2545 = vmatprep.subr.bf16.mxu0 0
        %2546 = vmatpush1.bf16.msra.mxu0 %v2524
        %2547 = vmatprep.subr.bf16.mxu0 0
        %2548 = vmatpush1.bf16.msra.mxu0 %v2523
        %2549 = vmatprep.subr.bf16.mxu0 0
        %2550 = vmatpush1.bf16.msra.mxu0 %v2522
        %2551 = vmatprep.subr.bf16.mxu0 0
        %2552 = vmatpush1.bf16.msra.mxu0 %v2521
        %2553 = vmatprep.subr.bf16.mxu0 0
        %2554 = vmatpush2.bf16.msra.mxu0 0
        %2555 = vmatprep.subr.bf16.mxu0 0
        %2556 = vmatpush2.bf16.msra.mxu0 0
        %2557 = vmatprep.subr.bf16.mxu0 0
        %2558 = vmatpush2.bf16.msra.mxu0 0
        %2559 = vmatprep.subr.bf16.mxu0 0
        %2560 = vmatpush2.bf16.msra.mxu0 0
        %2561 = vmatprep.subr.bf16.mxu0 0
        %2562 = vmatpush2.bf16.msra.mxu0 0
        %2563 = vmatprep.subr.bf16.mxu0 0
        %2564 = vmatpush2.bf16.msra.mxu0 0
        %2565 = vmatprep.subr.bf16.mxu0 0
        %2566 = vmatpush2.bf16.msra.mxu0 0
        %2567 = vmatprep.subr.bf16.mxu0 0
        %2568 = vmatpush2.bf16.msra.mxu0 0
        %2569 = vmatprep.mubr.bf16.mxu0 0
        %2570 = vmatmul.mubr.bf16.gmra.mxu0 %v2016
        %v2571 = vpop.f32.mrf.mxu0
        %v2572 = vadd.f32 %v2487, %v2571
        %v2573 = vpop.f32.mrf.mxu0
        %v2574 = vpop.f32.mrf.mxu0
        %v2575 = vpop.f32.mrf.mxu0
        %2576 = vdwg.mxu0
        %v2577 = vrot.slane %v2572, 4
        %v2578 = vadd.f32 %v2572, %v2577
        %v2579 = vrot.slane %v2578, 2
        %v2580 = vadd.f32 %v2578, %v2579
        %v2581 = vrot.slane %v2580, 1
        %v2582 = vadd.f32 %v2580, %v2581
        %v2583 = vmul.f32 %v2582, %v1648
        %v2584 = vsub.f32 %v2572, %v2583
        %v2585 = vmul.f32 %v2584, %v2584
        %v2586 = vrot.slane %v2585, 4
        %v2587 = vadd.f32 %v2585, %v2586
        %v2588 = vrot.slane %v2587, 2
        %v2589 = vadd.f32 %v2587, %v2588
        %v2590 = vrot.slane %v2589, 1
        %v2591 = vadd.f32 %v2589, %v2590
        %v2592 = vmul.f32 %v2591, %v1648
        %v2593 = vadd.f32 %v2592, 1e-05
        %v2594 = vrsqrt.pop %v2593
        %v2595 = vmul.f32 %v2584, %v2594
        %v2596 = vld [vmem:[%s55] sm:$0x1]
        %v2598 = vlaneseq
        %v2599 = vshrl.u32 %v2598, 7
        %v2600 = vsub.s32 0, %v2599
        %v2601 = vrot.slane %v2596, %v2600
        %v2603 = vmul.f32 %v2595, %v2601
        %v2604 = vld [vmem:[%s57] sm:$0x1]
        %v2606 = vlaneseq
        %v2607 = vshrl.u32 %v2606, 7
        %v2608 = vsub.s32 0, %v2607
        %v2609 = vrot.slane %v2604, %v2608
        %v2611 = vadd.f32 %v2603, %v2609
        %v2612 = vsub.f32 0.0, %v2611
        %v2613 = vmul.f32 %v2612, 1.442695
        %v2614 = vpow.pop %v2613
        %v2615 = vadd.f32 %v2614, 1.0
        %v2616 = vrcp.pop %v2615
        %v2617 = vld [vmem:[#allocation25] sm:$0xf]
        %v2618 = vld [vmem:[#allocation25 + $0x4] sm:$0xf]
        %v2619 = vld [vmem:[#allocation25 + $0x8] sm:$0xf]
        %v2620 = vld [vmem:[#allocation25 + $0xc] sm:$0xf]
        %v2621 = vld [vmem:[#allocation25 + $0x10] sm:$0xf]
        %v2622 = vld [vmem:[#allocation25 + $0x14] sm:$0xf]
        %v2623 = vld [vmem:[#allocation25 + $0x18] sm:$0xf]
        %v2624 = vld [vmem:[#allocation25 + $0x1c] sm:$0xf]
        %v2625 = vld [vmem:[#allocation25 + $0x20] sm:$0xf]
        %v2626 = vld [vmem:[#allocation25 + $0x24] sm:$0xf]
        %v2627 = vld [vmem:[#allocation25 + $0x28] sm:$0xf]
        %v2628 = vld [vmem:[#allocation25 + $0x2c] sm:$0xf]
        %v2629 = vld [vmem:[#allocation25 + $0x30] sm:$0xf]
        %v2630 = vld [vmem:[#allocation25 + $0x34] sm:$0xf]
        %v2631 = vld [vmem:[#allocation25 + $0x38] sm:$0xf]
        %v2632 = vld [vmem:[#allocation25 + $0x3c] sm:$0xf]
        %v2633 = vpack.c.bf16 %v2616, %v2616
        %v2634 = vld [vmem:[%s61] sm:$0x1]
        %v2636 = vlaneseq
        %v2637 = vshrl.u32 %v2636, 7
        %v2638 = vsub.s32 0, %v2637
        %v2639 = vrot.slane %v2634, %v2638
        %v2657 = vunpack.c.l.b16 %v2617
        %v2658 = vunpack.c.l.b16 %v2618
        %v2659 = vunpack.c.l.b16 %v2619
        %v2660 = vunpack.c.l.b16 %v2620
        %v2661 = vunpack.c.l.b16 %v2621
        %v2662 = vunpack.c.l.b16 %v2622
        %v2663 = vunpack.c.l.b16 %v2623
        %v2664 = vunpack.c.l.b16 %v2624
        %v2665 = vunpack.c.l.b16 %v2625
        %v2666 = vunpack.c.l.b16 %v2626
        %v2667 = vunpack.c.l.b16 %v2627
        %v2668 = vunpack.c.l.b16 %v2628
        %v2669 = vunpack.c.l.b16 %v2629
        %v2670 = vunpack.c.l.b16 %v2630
        %v2671 = vunpack.c.l.b16 %v2631
        %v2672 = vunpack.c.l.b16 %v2632
        %v2673 = vpack.c.b16 %v2658, %v2657
        %v2674 = vpack.c.b16 %v2660, %v2659
        %v2675 = vpack.c.b16 %v2662, %v2661
        %v2676 = vpack.c.b16 %v2664, %v2663
        %v2677 = vpack.c.b16 %v2666, %v2665
        %v2678 = vpack.c.b16 %v2668, %v2667
        %v2679 = vpack.c.b16 %v2670, %v2669
        %v2680 = vpack.c.b16 %v2672, %v2671
        %2689 = vmatprep.subr.bf16.mxu0 0
        %2690 = vmatpush1.bf16.msra.mxu0 %v2680
        %2691 = vmatprep.subr.bf16.mxu0 0
        %2692 = vmatpush1.bf16.msra.mxu0 %v2679
        %2693 = vmatprep.subr.bf16.mxu0 0
        %2694 = vmatpush1.bf16.msra.mxu0 %v2678
        %2695 = vmatprep.subr.bf16.mxu0 0
        %2696 = vmatpush1.bf16.msra.mxu0 %v2677
        %2697 = vmatprep.subr.bf16.mxu0 0
        %2698 = vmatpush1.bf16.msra.mxu0 %v2676
        %2699 = vmatprep.subr.bf16.mxu0 0
        %2700 = vmatpush1.bf16.msra.mxu0 %v2675
        %2701 = vmatprep.subr.bf16.mxu0 0
        %2702 = vmatpush1.bf16.msra.mxu0 %v2674
        %2703 = vmatprep.subr.bf16.mxu0 0
        %2704 = vmatpush1.bf16.msra.mxu0 %v2673
        %2705 = vmatprep.subr.bf16.mxu0 0
        %2706 = vmatpush2.bf16.msra.mxu0 0
        %2707 = vmatprep.subr.bf16.mxu0 0
        %2708 = vmatpush2.bf16.msra.mxu0 0
        %2709 = vmatprep.subr.bf16.mxu0 0
        %2710 = vmatpush2.bf16.msra.mxu0 0
        %2711 = vmatprep.subr.bf16.mxu0 0
        %2712 = vmatpush2.bf16.msra.mxu0 0
        %2713 = vmatprep.subr.bf16.mxu0 0
        %2714 = vmatpush2.bf16.msra.mxu0 0
        %2715 = vmatprep.subr.bf16.mxu0 0
        %2716 = vmatpush2.bf16.msra.mxu0 0
        %2717 = vmatprep.subr.bf16.mxu0 0
        %2718 = vmatpush2.bf16.msra.mxu0 0
        %2719 = vmatprep.subr.bf16.mxu0 0
        %2720 = vmatpush2.bf16.msra.mxu0 0
        %2721 = vmatprep.mubr.bf16.mxu0 0
        %2722 = vmatmul.mubr.bf16.gmra.mxu0 %v2633
        %v2723 = vpop.f32.mrf.mxu0
        %v2724 = vadd.f32 %v2639, %v2723
        %v2725 = vpop.f32.mrf.mxu0
        %v2726 = vpop.f32.mrf.mxu0
        %v2727 = vpop.f32.mrf.mxu0
        %2728 = vdwg.mxu0
        %v2729 = vsub.f32 0.0, %v2724
        %v2730 = vmul.f32 %v2729, 1.442695
        %v2731 = vpow.pop %v2730
        %v2732 = vadd.f32 %v2731, 1.0
        %v2733 = vrcp.pop %v2732
        %v2734 = vld [vmem:[#allocation26] sm:$0xf]
        %v2735 = vld [vmem:[#allocation26 + $0x4] sm:$0xf]
        %v2736 = vld [vmem:[#allocation26 + $0x8] sm:$0xf]
        %v2737 = vld [vmem:[#allocation26 + $0xc] sm:$0xf]
        %v2738 = vld [vmem:[#allocation26 + $0x10] sm:$0xf]
        %v2739 = vld [vmem:[#allocation26 + $0x14] sm:$0xf]
        %v2740 = vld [vmem:[#allocation26 + $0x18] sm:$0xf]
        %v2741 = vld [vmem:[#allocation26 + $0x1c] sm:$0xf]
        %v2742 = vld [vmem:[#allocation26 + $0x20] sm:$0xf]
        %v2743 = vld [vmem:[#allocation26 + $0x24] sm:$0xf]
        %v2744 = vld [vmem:[#allocation26 + $0x28] sm:$0xf]
        %v2745 = vld [vmem:[#allocation26 + $0x2c] sm:$0xf]
        %v2746 = vld [vmem:[#allocation26 + $0x30] sm:$0xf]
        %v2747 = vld [vmem:[#allocation26 + $0x34] sm:$0xf]
        %v2748 = vld [vmem:[#allocation26 + $0x38] sm:$0xf]
        %v2749 = vld [vmem:[#allocation26 + $0x3c] sm:$0xf]
        %v2750 = vpack.c.bf16 %v2733, %v2733
        %v2751 = vld [vmem:[%s65] sm:$0x1]
        %v2753 = vlaneseq
        %v2754 = vshrl.u32 %v2753, 7
        %v2755 = vsub.s32 0, %v2754
        %v2756 = vrot.slane %v2751, %v2755
        %v2774 = vunpack.c.l.b16 %v2734
        %v2775 = vunpack.c.l.b16 %v2735
        %v2776 = vunpack.c.l.b16 %v2736
        %v2777 = vunpack.c.l.b16 %v2737
        %v2778 = vunpack.c.l.b16 %v2738
        %v2779 = vunpack.c.l.b16 %v2739
        %v2780 = vunpack.c.l.b16 %v2740
        %v2781 = vunpack.c.l.b16 %v2741
        %v2782 = vunpack.c.l.b16 %v2742
        %v2783 = vunpack.c.l.b16 %v2743
        %v2784 = vunpack.c.l.b16 %v2744
        %v2785 = vunpack.c.l.b16 %v2745
        %v2786 = vunpack.c.l.b16 %v2746
        %v2787 = vunpack.c.l.b16 %v2747
        %v2788 = vunpack.c.l.b16 %v2748
        %v2789 = vunpack.c.l.b16 %v2749
        %v2790 = vpack.c.b16 %v2775, %v2774
        %v2791 = vpack.c.b16 %v2777, %v2776
        %v2792 = vpack.c.b16 %v2779, %v2778
        %v2793 = vpack.c.b16 %v2781, %v2780
        %v2794 = vpack.c.b16 %v2783, %v2782
        %v2795 = vpack.c.b16 %v2785, %v2784
        %v2796 = vpack.c.b16 %v2787, %v2786
        %v2797 = vpack.c.b16 %v2789, %v2788
        %2806 = vmatprep.subr.bf16.mxu0 0
        %2807 = vmatpush1.bf16.msra.mxu0 %v2797
        %2808 = vmatprep.subr.bf16.mxu0 0
        %2809 = vmatpush1.bf16.msra.mxu0 %v2796
        %2810 = vmatprep.subr.bf16.mxu0 0
        %2811 = vmatpush1.bf16.msra.mxu0 %v2795
        %2812 = vmatprep.subr.bf16.mxu0 0
        %2813 = vmatpush1.bf16.msra.mxu0 %v2794
        %2814 = vmatprep.subr.bf16.mxu0 0
        %2815 = vmatpush1.bf16.msra.mxu0 %v2793
        %2816 = vmatprep.subr.bf16.mxu0 0
        %2817 = vmatpush1.bf16.msra.mxu0 %v2792
        %2818 = vmatprep.subr.bf16.mxu0 0
        %2819 = vmatpush1.bf16.msra.mxu0 %v2791
        %2820 = vmatprep.subr.bf16.mxu0 0
        %2821 = vmatpush1.bf16.msra.mxu0 %v2790
        %2822 = vmatprep.subr.bf16.mxu0 0
        %2823 = vmatpush2.bf16.msra.mxu0 0
        %2824 = vmatprep.subr.bf16.mxu0 0
        %2825 = vmatpush2.bf16.msra.mxu0 0
        %2826 = vmatprep.subr.bf16.mxu0 0
        %2827 = vmatpush2.bf16.msra.mxu0 0
        %2828 = vmatprep.subr.bf16.mxu0 0
        %2829 = vmatpush2.bf16.msra.mxu0 0
        %2830 = vmatprep.subr.bf16.mxu0 0
        %2831 = vmatpush2.bf16.msra.mxu0 0
        %2832 = vmatprep.subr.bf16.mxu0 0
        %2833 = vmatpush2.bf16.msra.mxu0 0
        %2834 = vmatprep.subr.bf16.mxu0 0
        %2835 = vmatpush2.bf16.msra.mxu0 0
        %2836 = vmatprep.subr.bf16.mxu0 0
        %2837 = vmatpush2.bf16.msra.mxu0 0
        %2838 = vmatprep.mubr.bf16.mxu0 0
        %2839 = vmatmul.mubr.bf16.gmra.mxu0 %v2750
        %v2840 = vpop.f32.mrf.mxu0
        %v2841 = vadd.f32 %v2756, %v2840
        %v2842 = vpop.f32.mrf.mxu0
        %v2843 = vpop.f32.mrf.mxu0
        %v2844 = vpop.f32.mrf.mxu0
        %2845 = vdwg.mxu0
        %2846 = vst [vmem:[%s1490] sm:$0xff] %v1999
        %2847 = vst [vmem:[%s1497] sm:$0xff] %v2465
        %2848 = vst [vmem:[%s1504] sm:$0xff] %v2733
        %2849 = vst [vmem:[%s1511] sm:$0xff] %v2841
        %s2850 = sand.u32 %s923, 1
        %s2851 = scalar_lea.sflag [#allocation4], %s2850
        %s2852 = sand.u32 %s923, 1
        %s2853 = smul.addr %s2852, 8
        %s2854 = scalar_lea.vmem [#allocation28], %s2853
        %s2855 = sand.u32 %s113, 1
        %s2856 = scalar_lea.sflag [#allocation30], %s2855
        %s2857 = sand.u32 %s949, 1
        %s2858 = smul.addr %s2857, 8
        %s2859 = scalar_lea.vmem [#allocation29], %s2858
        %s2860 = sand.u32 %s113, 1
        %s2861 = scalar_lea.sflag [#allocation30], %s2860
        %s2862 = sand.u32 %s975, 1
        %s2863 = smul.addr %s2862, 8
        %s2864 = scalar_lea.vmem [#allocation31], %s2863
        %s2865 = sand.u32 %s1001, 1
        %s2866 = scalar_lea.sflag [#allocation33], %s2865
        %s2867 = sand.u32 %s1001, 1
        %s2868 = smul.addr %s2867, 8
        %s2869 = scalar_lea.vmem [#allocation32], %s2868
        // Predicated region
        $region233: #{tpu_custom_call.1} parent=167 // pred_check
          %p2870 = pneg %p933
        $region234: #{tpu_custom_call.1} parent=167 // pred_check_branch
          %2872 = sbr.rel (%p2870) target = $region236
        $region235: #{tpu_custom_call.1} parent=167 // pred_region
          %s2874 = ssub.s32 128, 128
          %2875 = vsyncadd %s2851, %s2874
          %s2876 = smul.addr %s113, 128
          %s2877 = scalar_lea.hbm %s75, %s2876
          %s2879 = sshll.u32 %s2854, 4
          %s2880 = int_to_ptr.vmem [resolvable:$true] %s2879
          %2882 = dma.vmem_to_hbm [thread:$0]  %s2880, 128, %s2877, %s2851
        $region236: #{tpu_custom_call.1} parent=167 // pred_fallthru
          _
        // Predicated region
        $region237: #{tpu_custom_call.1} parent=167 // pred_check
          %p2883 = pneg %p959
        $region238: #{tpu_custom_call.1} parent=167 // pred_check_branch
          %2885 = sbr.rel (%p2883) target = $region240
        $region239: #{tpu_custom_call.1} parent=167 // pred_region
          %s2887 = ssub.s32 128, 128
          %2888 = vsyncadd %s2856, %s2887
          %s2889 = smul.addr %s113, 128
          %s2890 = scalar_lea.hbm %s77, %s2889
          %s2892 = sshll.u32 %s2859, 4
          %s2893 = int_to_ptr.vmem [resolvable:$true] %s2892
          %2895 = dma.vmem_to_hbm [thread:$0]  %s2893, 128, %s2890, %s2856
        $region240: #{tpu_custom_call.1} parent=167 // pred_fallthru
          _
        // Predicated region
        $region241: #{tpu_custom_call.1} parent=167 // pred_check
          %p2896 = pneg %p985
        $region242: #{tpu_custom_call.1} parent=167 // pred_check_branch
          %2898 = sbr.rel (%p2896) target = $region244
        $region243: #{tpu_custom_call.1} parent=167 // pred_region
          %s2900 = ssub.s32 128, 128
          %2901 = vsyncadd %s2861, %s2900
          %s2902 = smul.addr %s113, 128
          %s2903 = scalar_lea.hbm %s79, %s2902
          %s2905 = sshll.u32 %s2864, 4
          %s2906 = int_to_ptr.vmem [resolvable:$true] %s2905
          %2908 = dma.vmem_to_hbm [thread:$0]  %s2906, 128, %s2903, %s2861
        $region244: #{tpu_custom_call.1} parent=167 // pred_fallthru
          _
        // Predicated region
        $region245: #{tpu_custom_call.1} parent=167 // pred_check
          %p2909 = pneg %p1011
        $region246: #{tpu_custom_call.1} parent=167 // pred_check_branch
          %2911 = sbr.rel (%p2909) target = $region248
        $region247: #{tpu_custom_call.1} parent=167 // pred_region
          %s2913 = ssub.s32 128, 128
          %2914 = vsyncadd %s2866, %s2913
          %s2915 = smul.addr %s113, 128
          %s2916 = scalar_lea.hbm %s81, %s2915
          %s2918 = sshll.u32 %s2869, 4
          %s2919 = int_to_ptr.vmem [resolvable:$true] %s2918
          %2921 = dma.vmem_to_hbm [thread:$0]  %s2919, 128, %s2916, %s2866
        $region248: #{tpu_custom_call.1} parent=167 // pred_fallthru
          _
      $region168: #{tpu_custom_call.1} parent=5 // pred_fallthru
        _
      %p2922 = scmp.le.s32.totalorder 2, %s108
      // Predicated region
      $region249: #{tpu_custom_call.1} parent=5 // pred_check
        %p2923 = pneg %p2922
      $region250: #{tpu_custom_call.1} parent=5 // pred_check_branch
        %2925 = sbr.rel (%p2923) target = $region252
      $region251: #{tpu_custom_call.1} parent=5 // pred_region
        %s2926 = ssub.s32 %s108, 2
        // Predicated region
        $region253: #{tpu_custom_call.1} parent=251 // pred_check
          %p2927 = pneg %p939
        $region254: #{tpu_custom_call.1} parent=251 // pred_check_branch
          %2929 = sbr.rel (%p2927) target = $region256
        $region255: #{tpu_custom_call.1} parent=251 // pred_region
          %s2930 = sand.u32 %s924, 1
          %s2931 = scalar_lea.sflag [#allocation4], %s2930
          %s2932 = sand.u32 %s924, 1
          %s2933 = smul.addr %s2932, 8
          %s2934 = scalar_lea.vmem [#allocation28], %s2933
          %2935 = dma.done %s2931, 128
        $region256: #{tpu_custom_call.1} parent=251 // pred_fallthru
          _
        // Predicated region
        $region257: #{tpu_custom_call.1} parent=251 // pred_check
          %p2936 = pneg %p965
        $region258: #{tpu_custom_call.1} parent=251 // pred_check_branch
          %2938 = sbr.rel (%p2936) target = $region260
        $region259: #{tpu_custom_call.1} parent=251 // pred_region
          %s2939 = sand.u32 %s114, 1
          %s2940 = scalar_lea.sflag [#allocation30], %s2939
          %s2941 = sand.u32 %s950, 1
          %s2942 = smul.addr %s2941, 8
          %s2943 = scalar_lea.vmem [#allocation29], %s2942
          %2944 = dma.done %s2940, 128
        $region260: #{tpu_custom_call.1} parent=251 // pred_fallthru
          _
        // Predicated region
        $region261: #{tpu_custom_call.1} parent=251 // pred_check
          %p2945 = pneg %p991
        $region262: #{tpu_custom_call.1} parent=251 // pred_check_branch
          %2947 = sbr.rel (%p2945) target = $region264
        $region263: #{tpu_custom_call.1} parent=251 // pred_region
          %s2948 = sand.u32 %s114, 1
          %s2949 = scalar_lea.sflag [#allocation30], %s2948
          %s2950 = sand.u32 %s976, 1
          %s2951 = smul.addr %s2950, 8
          %s2952 = scalar_lea.vmem [#allocation31], %s2951
          %2953 = dma.done %s2949, 128
        $region264: #{tpu_custom_call.1} parent=251 // pred_fallthru
          _
        // Predicated region
        $region265: #{tpu_custom_call.1} parent=251 // pred_check
          %p2954 = pneg %p1017
        $region266: #{tpu_custom_call.1} parent=251 // pred_check_branch
          %2956 = sbr.rel (%p2954) target = $region268
        $region267: #{tpu_custom_call.1} parent=251 // pred_region
          %s2957 = sand.u32 %s1002, 1
          %s2958 = scalar_lea.sflag [#allocation33], %s2957
          %s2959 = sand.u32 %s1002, 1
          %s2960 = smul.addr %s2959, 8
          %s2961 = scalar_lea.vmem [#allocation32], %s2960
          %2962 = dma.done %s2958, 128
        $region268: #{tpu_custom_call.1} parent=251 // pred_fallthru
          _
      $region252: #{tpu_custom_call.1} parent=5 // pred_fallthru
        _
    $region6: #{tpu_custom_call.1} parent=1 // loop_footer
      %s112 = sadd.s32 1, %s108
    $region7: #{tpu_custom_call.1} parent=1 // loop_footer_branch
      %107 = sbr.rel target = $region3
    $region8: #{tpu_custom_call.1} parent=1 // loop_exit
      _
    %2963 = vsyncpa [#allocation3], 1
    %s2964 = scalar_lea.sflag [#allocation3], 1
    %2965 = vsyncpa %s2964, 1
    %2966 = vsyncpa [#allocation6], 1
    %2967 = vsyncpa [#allocation9], 1
    %2968 = vsyncpa [#allocation12], 1
    %2969 = vsyncpa [#allocation15], 1
    %2970 = vsyncpa [#allocation18], 1
    %2971 = vsyncpa [#allocation21], 1
    %2972 = vsyncpa [#allocation24], 1
    %2973 = vsyncpa [#allocation27], 1
    %2974 = vsyncpa [#allocation4], 1
    %s2975 = scalar_lea.sflag [#allocation4], 1
    %2976 = vsyncpa %s2975, 1
    %2977 = vsyncpa [#allocation30], 1
    %s2978 = scalar_lea.sflag [#allocation30], 1
    %2979 = vsyncpa %s2978, 1
    %2980 = vsyncpa [#allocation33], 1
    %s2981 = scalar_lea.sflag [#allocation33], 1
    %2982 = vsyncpa %s2981, 1

</llo_original>
